<compile_context>
chip_gen: v7x
topology: tpu7x:2x2x1
jax: 0.10.0
libtpu: 0.0.40
codegen_flags: <defaults>
</compile_context>

<pallas_src>
import jax
import jax.numpy as jnp
from jax.experimental import pallas as pl
from jax.experimental.pallas import tpu as pltpu


def _gnn_kernel(nb_ref, h_ref, w1_ref, w2_ref, out_ref, cat_ref):
    TB, F = h_ref.shape
    K = nb_ref.shape[0] // TB

    # ---- layer 1: ONE (TB*K,128)@(128,128) bf16 matmul on the MXU ----------
    # nw bias + pad-row masking are folded into the augmented operands
    # (valid-flag column in nb x bias row in W1), so no mask / bias add here.
    nbf = jnp.dot(nb_ref[...], w1_ref[...], preferred_element_type=jnp.float32)
    nbf = jnp.where(nbf >= 0.0, nbf, 0.2 * nbf)          # leaky_relu(., 0.2)

    # per-node neighbor sum; the reshape is layout-free because the rows of a
    # node occupy exactly K (=8) consecutive sublanes (one f32 (8,128) tile).
    nbs = jnp.sum(nbf.reshape(TB, K, F), axis=1)          # (TB, F) f32

    # ---- layer 2: single 256-deep contraction  [h | nbs] @ W2 --------------
    # hw_b rides in a row of W2 via h's appended 1-column.
    cat_ref[:, :F] = h_ref[...]
    cat_ref[:, F:] = nbs.astype(cat_ref.dtype)
    res = jnp.dot(cat_ref[...], w2_ref[...], preferred_element_type=jnp.float32)
    out_ref[...] = jnp.where(res >= 0.0, res, 0.2 * res)


def gnn_forward_pallas(nb_feat, valid, h, nw_w, nw_b, hw_w, hw_b, *, block_b=256):
    """Batched GNN forward.

    nb_feat: (B, K, 3E) f32 neighbor rows [h | f[p] | f[o]] (zeros on pad slots)
    valid:   (B, K)     f32 1.0 for rows passed through `nw` (real neighbors plus
                        the single all-zero fallback row when a node has no
                        neighbors -- matching the torch module), 0.0 otherwise
    h:       (B, E)     f32 query-node embeddings
    nw_w: (3E, E), nw_b: (E,), hw_w: (2E, E), hw_b: (E,)  (weights stored (in, out))
    returns: (B, E) f32
    """
    B, K, threeE = nb_feat.shape
    E = h.shape[1]
    assert threeE == 3 * E and hw_w.shape == (2 * E, E)

    F = 128                                   # minimum legal lane-dense width
    # TODO(synk): tile the feature axes if emb_size > 42 (3E + bias column > 128).
    assert 3 * E + 1 <= F and 2 * E <= F
    # K must be a multiple of 8 so the in-kernel (TB*K,F)->(TB,K,F) reshape is
    # layout-free; pad the neighbor-slot count host-side accordingly.
    assert K % 8 == 0

    TB = block_b                              # 2 batch tiles at B=512 (v7x: 1 per TC)
    Bp = pl.cdiv(B, TB) * TB

    # -- augmented layer-1 operand, built directly in (Bp,K,F) bf16 (no transpose,
    #    no f32 intermediate): [features | valid flag | 0], then flattened so each
    #    tile's DMA is one contiguous (TB*K, F) slab.
    nb_aug = jnp.zeros((Bp, K, F), jnp.bfloat16)
    nb_aug = nb_aug.at[:, :, :threeE].set(
        jnp.zeros((Bp, K, threeE), jnp.bfloat16).at[:B].set(nb_feat.astype(jnp.bfloat16))
        if Bp != B else nb_feat.astype(jnp.bfloat16))
    nb_aug = nb_aug.at[:B, :, threeE].set(valid.astype(jnp.bfloat16))
    nb_aug = nb_aug.reshape(Bp * K, F)        # free: row-major bitcast

    # -- augmented query embedding: [h | 1 (bias column) | 0]
    h_aug = jnp.zeros((Bp, F), jnp.bfloat16)
    h_aug = h_aug.at[:B, :E].set(h.astype(jnp.bfloat16))
    h_aug = h_aug.at[:B, E].set(jnp.ones((B,), jnp.bfloat16))

    # -- augmented layer-1 weight: rows [nw_w | nw_b | 0], output cols padded to F
    w1_aug = jnp.zeros((F, F), jnp.float32)
    w1_aug = w1_aug.at[:threeE, :E].set(nw_w)
    w1_aug = w1_aug.at[threeE, :E].set(nw_b)
    w1_aug = w1_aug.astype(jnp.bfloat16)

    # -- stacked layer-2 weight for the fused 256-deep contraction:
    #    rows [0:F)  <- h-block  (hw_w[:E] plus hw_b on h's 1-column row)
    #    rows [F:2F) <- nbs-block (hw_w[E:])
    w2_aug = jnp.zeros((2 * F, F), jnp.float32)
    w2_aug = w2_aug.at[:E, :E].set(hw_w[:E, :])
    w2_aug = w2_aug.at[E, :E].set(hw_b)
    w2_aug = w2_aug.at[F:F + E, :E].set(hw_w[E:, :])
    w2_aug = w2_aug.astype(jnp.bfloat16)

    out = pl.pallas_call(
        _gnn_kernel,
        out_shape=jax.ShapeDtypeStruct((Bp, F), jnp.float32),
        grid_spec=pltpu.PrefetchScalarGridSpec(
            num_scalar_prefetch=0,
            grid=(Bp // TB,),
            in_specs=[
                pl.BlockSpec((TB * K, F), lambda i: (i, 0)),   # contiguous nb slab
                pl.BlockSpec((TB, F), lambda i: (i, 0)),       # h (+ bias column)
                pl.BlockSpec((F, F), lambda i: (0, 0)),        # W1 (+ bias row)
                pl.BlockSpec((2 * F, F), lambda i: (0, 0)),    # stacked W2 (+ bias row)
            ],
            out_specs=pl.BlockSpec((TB, F), lambda i: (i, 0)),
            scratch_shapes=[pltpu.VMEM((TB, 2 * F), jnp.bfloat16)],  # [h | nbs] slab
        ),
        compiler_params=pltpu.CompilerParams(
            dimension_semantics=("parallel",)),
    )(nb_aug, h_aug, w1_aug, w2_aug)

    return out[:B, :E]


def gnn_reference(nb_feat, valid, h, nw_w, nw_b, hw_w, hw_b,
                  *, matmul_dtype=jnp.float32):
    """Plain-JAX reference mirroring the torch forward (batched over nodes)."""
    B, K, threeE = nb_feat.shape
    E = h.shape[1]
    cast = lambda a: a.astype(matmul_dtype)
    nbf = jnp.dot(cast(nb_feat.reshape(B * K, threeE)), cast(nw_w),
                  preferred_element_type=jnp.float32)
    nbf = nbf + cast(nw_b).astype(jnp.float32)
    nbf = jnp.where(nbf >= 0, nbf, 0.2 * nbf)            # leaky_relu(., 0.2)
    nbf = nbf * valid.reshape(B * K, 1)                  # drop padded rows
    nbs = nbf.reshape(B, K, E).sum(axis=1)               # per-node neighbor sum
    res = jnp.concatenate([h, nbs], axis=1)              # cat([h, nbs], dim=1)
    fh = jnp.dot(cast(res), cast(hw_w), preferred_element_type=jnp.float32)
    fh = fh + cast(hw_b).astype(jnp.float32)
    return jnp.where(fh >= 0, fh, 0.2 * fh)


if __name__ == "__main__":
    key = jax.random.PRNGKey(0)
    E = 32          # emb_size
    B = 512         # query nodes batched into ONE pallas_call
    K = 8           # max neighbors per node (padded)
    num_entities = 64

    keys = jax.random.split(key, 10)
    # torch: nw.weight (E,3E) / hw.weight (E,2E) -> stored transposed (in, out)
    nw_w = 0.1 * jax.random.normal(keys[0], (3 * E, E), jnp.float32)
    nw_b = 0.1 * jax.random.normal(keys[1], (E,), jnp.float32)
    hw_w = 0.1 * jax.random.normal(keys[2], (2 * E, E), jnp.float32)
    hw_b = 0.1 * jax.random.normal(keys[3], (E,), jnp.float32)

    # ---- synthetic graph / feature dict (glue, mimics rdflib + dict lookups) ----
    f_table = 0.5 * jax.random.normal(keys[4], (num_entities, E), jnp.float32)
    member = jax.random.uniform(keys[5], (num_entities,)) < 0.75   # "id in f"
    member = member.at[:8].set(True)                               # query ids are in f

    x_ids = jax.random.randint(keys[6], (B,), 0, 8)                # query nodes
    n_nb = jax.random.randint(keys[7], (B,), 0, K + 1)             # neighbor counts
    n_nb = n_nb.at[0].set(0)                                       # exercise empty fallback
    p_ids = jax.random.randint(keys[8], (B, K), 0, num_entities)
    o_ids = jax.random.randint(keys[9], (B, K), 0, num_entities)

    def lookup(ids):   # f[id] if id in f else zeros
        return f_table[ids] * member[ids][..., None].astype(jnp.float32)

    h = lookup(x_ids)                                              # (B, E)
    slot = jnp.arange(K)[None, :]
    real = (slot < n_nb[:, None]).astype(jnp.float32)              # genuine neighbors
    fallback = ((n_nb[:, None] == 0) & (slot == 0)).astype(jnp.float32)
    valid = real + fallback                                        # rows fed through nw
    nb_feat = jnp.concatenate(
        [jnp.broadcast_to(h[:, None, :], (B, K, E)), lookup(p_ids), lookup(o_ids)],
        axis=-1) * real[..., None]                                 # (B, K, 3E)

    # ---- run the batched kernel once ----
    gnn_fwd = jax.jit(gnn_forward_pallas)
    out = gnn_fwd(nb_feat, valid, h, nw_w, nw_b, hw_w, hw_b)
    out = jax.block_until_ready(out)
    assert out.shape == (B, E)

    # ---- check 1: same math / same bf16 matmul policy as the kernel ----
    ref_bf16 = gnn_reference(nb_feat, valid, h, nw_w, nw_b, hw_w, hw_b,
                             matmul_dtype=jnp.bfloat16)
    assert jnp.allclose(out, ref_bf16, atol=1e-2, rtol=1e-2), "mismatch vs bf16 reference"

    # ---- check 2: full-f32 module math (bf16-quantization-level tolerance) ----
    ref_f32 = gnn_reference(nb_feat, valid, h, nw_w, nw_b, hw_w, hw_b)
    assert jnp.allclose(out, ref_f32, atol=1e-1, rtol=1e-1), "mismatch vs f32 reference"

    # ---- check 3: per-node mirror of the torch forward (incl. empty-neighbor node 0) ----
    def torch_mirror(b):
        hb = h[b:b + 1]
        rows = []
        for kk in range(int(n_nb[b])):
            hf = lookup(p_ids[b, kk])[None, :]
            nf = lookup(o_ids[b, kk])[None, :]
            rows.append(jnp.concatenate([hb, hf, nf], axis=1))
        if len(rows) == 0:
            rows.append(jnp.zeros((1, 3 * E), jnp.float32))
        nbm = jnp.concatenate(rows, axis=0)
        t1 = nbm @ nw_w + nw_b
        nbf = jnp.where(t1 >= 0, t1, 0.2 * t1)
        nbs = jnp.sum(nbf, axis=0, keepdims=True)
        res = jnp.concatenate([hb, nbs], axis=1)
        t2 = res @ hw_w + hw_b
        return jnp.where(t2 >= 0, t2, 0.2 * t2)

    for b in range(4):
        mb = torch_mirror(b)
        assert jnp.allclose(out[b:b + 1], mb, atol=1e-1, rtol=1e-1), \
            f"mismatch vs per-node mirror at node {b}"

    print("KERNEL_OK")
</pallas_src>

<mosaic_0001>
module attributes {stable_mosaic.version = 11 : i64} {
  func.func @_gnn_kernel(%arg0: i32, %arg1: memref<2048x128xbf16, #tpu.memory_space<vmem>>, %arg2: memref<256x128xbf16, #tpu.memory_space<vmem>>, %arg3: memref<128x128xbf16, #tpu.memory_space<vmem>>, %arg4: memref<256x128xbf16, #tpu.memory_space<vmem>>, %arg5: memref<256x128xf32, #tpu.memory_space<vmem>>, %arg6: memref<256x256xbf16, #tpu.memory_space<vmem>>) attributes {dimension_semantics = [#tpu.dimension_semantics<parallel>], iteration_bounds = array<i64: 2>, scalar_prefetch = 0 : i64, scratch_operands = 1 : i64, tpu.core_type = #tpu.core_type<tc>, window_params = [{transform_indices = @transform_0, window_bounds = array<i64: 2048, 128>}, {transform_indices = @transform_1, window_bounds = array<i64: 256, 128>}, {pipeline_mode = #tpu.pipeline_mode<synchronous>, transform_indices = @transform_2, window_bounds = array<i64: 128, 128>}, {pipeline_mode = #tpu.pipeline_mode<synchronous>, transform_indices = @transform_3, window_bounds = array<i64: 256, 128>}, {transform_indices = @transform_4, window_bounds = array<i64: 256, 128>}]} {
    %c0 = arith.constant 0 : index
    %c0_0 = arith.constant 0 : index
    %0 = vector.load %arg1[%c0, %c0_0] : memref<2048x128xbf16, #tpu.memory_space<vmem>>, vector<2048x128xbf16>
    %c0_1 = arith.constant 0 : index
    %c0_2 = arith.constant 0 : index
    %1 = vector.load %arg3[%c0_1, %c0_2] : memref<128x128xbf16, #tpu.memory_space<vmem>>, vector<128x128xbf16>
    %cst = arith.constant dense<0.000000e+00> : vector<2048x128xf32>
    %2 = tpu.matmul %0, %1, %cst {dimension_numbers = #tpu.dot_dimension_numbers<[1], [0], [0], [1], [0, 0, 1, 1], [], []>} : vector<2048x128xbf16>, vector<128x128xbf16>, vector<2048x128xf32> -> vector<2048x128xf32>
    %cst_3 = arith.constant 0.000000e+00 : f32
    %3 = vector.broadcast %cst_3 : f32 to vector<2048x128xf32>
    %4 = arith.cmpf oge, %2, %3 : vector<2048x128xf32>
    %cst_4 = arith.constant 2.000000e-01 : f32
    %5 = vector.broadcast %cst_4 : f32 to vector<2048x128xf32>
    %6 = arith.mulf %5, %2 : vector<2048x128xf32>
    %7 = arith.select %4, %2, %6 : vector<2048x128xi1>, vector<2048x128xf32>
    %8 = vector.shape_cast %7 : vector<2048x128xf32> to vector<256x8x128xf32>
    %cst_5 = arith.constant dense<0.000000e+00> : vector<256x128xf32>
    %9 = vector.multi_reduction <add>, %8, %cst_5 [1] : vector<256x8x128xf32> to vector<256x128xf32>
    %c0_6 = arith.constant 0 : index
    %c0_7 = arith.constant 0 : index
    %10 = vector.load %arg2[%c0_6, %c0_7] : memref<256x128xbf16, #tpu.memory_space<vmem>>, vector<256x128xbf16>
    %c0_8 = arith.constant 0 : index
    %c0_9 = arith.constant 0 : index
    %11 = vector.load %arg6[%c0_8, %c0_9] : memref<256x256xbf16, #tpu.memory_space<vmem>>, vector<256x128xbf16>
    tpu.vector_store %arg6[%c0_8, %c0_9], %10 {strides = array<i32>} : memref<256x256xbf16, #tpu.memory_space<vmem>>, vector<256x128xbf16>,
    %12 = arith.truncf %9 : vector<256x128xf32> to vector<256x128xbf16>
    %c0_10 = arith.constant 0 : index
    %c128 = arith.constant 128 : index
    %13 = vector.load %arg6[%c0_10, %c128] : memref<256x256xbf16, #tpu.memory_space<vmem>>, vector<256x128xbf16>
    tpu.vector_store %arg6[%c0_10, %c128], %12 {strides = array<i32>} : memref<256x256xbf16, #tpu.memory_space<vmem>>, vector<256x128xbf16>,
    %c0_11 = arith.constant 0 : index
    %c0_12 = arith.constant 0 : index
    %14 = vector.load %arg6[%c0_11, %c0_12] : memref<256x256xbf16, #tpu.memory_space<vmem>>, vector<256x256xbf16>
    %c0_13 = arith.constant 0 : index
    %c0_14 = arith.constant 0 : index
    %15 = vector.load %arg4[%c0_13, %c0_14] : memref<256x128xbf16, #tpu.memory_space<vmem>>, vector<256x128xbf16>
    %cst_15 = arith.constant dense<0.000000e+00> : vector<256x128xf32>
    %16 = tpu.matmul %14, %15, %cst_15 {dimension_numbers = #tpu.dot_dimension_numbers<[1], [0], [0], [1], [0, 0, 1, 1], [], []>} : vector<256x256xbf16>, vector<256x128xbf16>, vector<256x128xf32> -> vector<256x128xf32>
    %cst_16 = arith.constant 0.000000e+00 : f32
    %17 = vector.broadcast %cst_16 : f32 to vector<256x128xf32>
    %18 = arith.cmpf oge, %16, %17 : vector<256x128xf32>
    %cst_17 = arith.constant 2.000000e-01 : f32
    %19 = vector.broadcast %cst_17 : f32 to vector<256x128xf32>
    %20 = arith.mulf %19, %16 : vector<256x128xf32>
    %21 = arith.select %18, %16, %20 : vector<256x128xi1>, vector<256x128xf32>
    %c0_18 = arith.constant 0 : index
    %c0_19 = arith.constant 0 : index
    %22 = vector.load %arg5[%c0_18, %c0_19] : memref<256x128xf32, #tpu.memory_space<vmem>>, vector<256x128xf32>
    tpu.vector_store %arg5[%c0_18, %c0_19], %21 {strides = array<i32>} : memref<256x128xf32, #tpu.memory_space<vmem>>, vector<256x128xf32>,
    return
  }
  func.func @transform_0(%arg0: i32) -> (i32, i32) {
    %c0_i32 = arith.constant 0 : i32
    %c0_i32_0 = arith.constant 0 : i32
    return %arg0, %c0_i32 : i32, i32
  }
  func.func @transform_1(%arg0: i32) -> (i32, i32) {
    %c0_i32 = arith.constant 0 : i32
    %c0_i32_0 = arith.constant 0 : i32
    return %arg0, %c0_i32 : i32, i32
  }
  func.func @transform_2(%arg0: i32) -> (i32, i32) {
    %c0_i32 = arith.constant 0 : i32
    %c0_i32_0 = arith.constant 0 : i32
    %c0_i32_1 = arith.constant 0 : i32
    return %c0_i32, %c0_i32_0 : i32, i32
  }
  func.func @transform_3(%arg0: i32) -> (i32, i32) {
    %c0_i32 = arith.constant 0 : i32
    %c0_i32_0 = arith.constant 0 : i32
    %c0_i32_1 = arith.constant 0 : i32
    return %c0_i32, %c0_i32_0 : i32, i32
  }
  func.func @transform_4(%arg0: i32) -> (i32, i32) {
    %c0_i32 = arith.constant 0 : i32
    %c0_i32_0 = arith.constant 0 : i32
    return %arg0, %c0_i32 : i32, i32
  }
}

</mosaic_0001>

<llo_original>
// kernel: gnn_forward_pallas.1
$region0: #{gnn_forward_pallas.1}
  #allocation0 [shape = 'u32[]', space=smem, size = 0x4, offset = 0x4, fixed_abs, tag = 'smem constant byte address 0x4 - core index']
  #allocation1 [shape = 'u32[144,128]{1,0:T(1,128)}', space=vmem, size = 0x12000, scoped, tag = 'internal scratch']
  #allocation2 [shape = 'bf16[256,256]{1,0:T(16,128)(2,1)}', space=vmem, size = 0x20000, scoped, tag = 'scratch operand']
  %s0 = inlined_call_operand.vmem [shape: bf16[4096,128], index: 0, kind: input, shape index: {}]
  %s1 = inlined_call_operand.vmem [shape: bf16[512,128], index: 1, kind: input, shape index: {}]
  %s2 = inlined_call_operand.vmem [shape: bf16[128,128], index: 2, kind: input, shape index: {}]
  %s3 = inlined_call_operand.vmem [shape: bf16[256,128], index: 3, kind: input, shape index: {}]
  %s4 = inlined_call_operand.vmem [shape: f32[512,128], index: 4, kind: output, shape index: {}]
  %s5 = sld [smem:[#allocation0]]
  $region49: #{gnn_forward_pallas.1} parent=0
    _
  %s7 = ssub.s32 1, %s5
  %s8 = scalar_select 0, %s7, %s5
  loop: start=0, step=1, limit=4
  $region2: #{gnn_forward_pallas.1} parent=0 // loop_pre_header
    _
  $region3: #{gnn_forward_pallas.1} parent=0 // loop_header
    %s10 = sphi 0, %s14
    %p11 = scmp.ge.s32.totalorder %s10, 4
    %s20 = sphi 0, %s22
    %s23 = sphi 0, %s20
    %s24 = sphi 0, %s23
    %s40 = sphi 0, %s24
    %s46 = sphi 0, %s48
    %s49 = sphi 0, %s46
    %s50 = sphi 0, %s49
    %s66 = sphi 0, %s50
    %s70 = sphi 0, %s70
    %s72 = sphi 0, %s70
    %s73 = sphi 0, %s72
    %s87 = sphi 0, %s73
    %s91 = sphi 0, %s91
    %s93 = sphi 0, %s91
    %s94 = sphi 0, %s93
    %s108 = sphi 0, %s94
    %s114 = sphi 0, %s116
    %s117 = sphi 0, %s114
    %s118 = sphi 0, %s117
    %s134 = sphi 0, %s118
  $region4: #{gnn_forward_pallas.1} parent=0 // loop_header_branch
    %13 = sbr.rel (%p11) target = $region8
  $region5: #{gnn_forward_pallas.1} parent=0 // loop_body
    %s15 = ssub.s32 %s10, 1
    %s16 = ssub.s32 %s10, 2
    %s17 = sadd.s32 %s10, 1
    %s18 = ssub.s32 %s10, %s17
    %p19 = scmp.eq.s32.totalorder %s18, 0
    %s21 = sadd.s32 %s20, 1
    %s22 = scalar_select %p19, %s20, %s21
    %p25 = pneg %p19
    %p26 = scmp.eq.s32.totalorder %s10, 1
    %p27 = por %p25, %p26
    %p28 = scmp.ne.s32.totalorder %s20, %s23
    %p29 = scmp.eq.s32.totalorder %s10, 0
    %p30 = por %p28, %p29
    %p31 = scmp.ne.s32.totalorder %s20, %s23
    %p32 = scmp.eq.s32.totalorder %s15, 1
    %p33 = por %p31, %p32
    %p34 = scmp.ne.s32.totalorder %s23, %s24
    %p35 = scmp.eq.s32.totalorder %s15, 0
    %p36 = por %p34, %p35
    %p37 = scmp.ne.s32.totalorder %s23, %s24
    %p38 = scmp.eq.s32.totalorder %s16, 1
    %p39 = por %p37, %p38
    %p41 = scmp.ne.s32.totalorder %s24, %s40
    %p42 = scmp.eq.s32.totalorder %s16, 0
    %p43 = por %p41, %p42
    %s44 = ssub.s32 %s10, %s17
    %p45 = scmp.eq.s32.totalorder %s44, 0
    %s47 = sadd.s32 %s46, 1
    %s48 = scalar_select %p45, %s46, %s47
    %p51 = pneg %p45
    %p52 = scmp.eq.s32.totalorder %s10, 1
    %p53 = por %p51, %p52
    %p54 = scmp.ne.s32.totalorder %s46, %s49
    %p55 = scmp.eq.s32.totalorder %s10, 0
    %p56 = por %p54, %p55
    %p57 = scmp.ne.s32.totalorder %s46, %s49
    %p58 = scmp.eq.s32.totalorder %s15, 1
    %p59 = por %p57, %p58
    %p60 = scmp.ne.s32.totalorder %s49, %s50
    %p61 = scmp.eq.s32.totalorder %s15, 0
    %p62 = por %p60, %p61
    %p63 = scmp.ne.s32.totalorder %s49, %s50
    %p64 = scmp.eq.s32.totalorder %s16, 1
    %p65 = por %p63, %p64
    %p67 = scmp.ne.s32.totalorder %s50, %s66
    %p68 = scmp.eq.s32.totalorder %s16, 0
    %p69 = por %p67, %p68
    %s71 = sadd.s32 %s70, 1
    %p74 = scmp.eq.s32.totalorder %s10, 1
    %p75 = scmp.ne.s32.totalorder %s70, %s72
    %p76 = scmp.eq.s32.totalorder %s10, 0
    %p77 = por %p75, %p76
    %p78 = scmp.ne.s32.totalorder %s70, %s72
    %p79 = scmp.eq.s32.totalorder %s15, 1
    %p80 = por %p78, %p79
    %p81 = scmp.ne.s32.totalorder %s72, %s73
    %p82 = scmp.eq.s32.totalorder %s15, 0
    %p83 = por %p81, %p82
    %p84 = scmp.ne.s32.totalorder %s72, %s73
    %p85 = scmp.eq.s32.totalorder %s16, 1
    %p86 = por %p84, %p85
    %p88 = scmp.ne.s32.totalorder %s73, %s87
    %p89 = scmp.eq.s32.totalorder %s16, 0
    %p90 = por %p88, %p89
    %s92 = sadd.s32 %s91, 1
    %p95 = scmp.eq.s32.totalorder %s10, 1
    %p96 = scmp.ne.s32.totalorder %s91, %s93
    %p97 = scmp.eq.s32.totalorder %s10, 0
    %p98 = por %p96, %p97
    %p99 = scmp.ne.s32.totalorder %s91, %s93
    %p100 = scmp.eq.s32.totalorder %s15, 1
    %p101 = por %p99, %p100
    %p102 = scmp.ne.s32.totalorder %s93, %s94
    %p103 = scmp.eq.s32.totalorder %s15, 0
    %p104 = por %p102, %p103
    %p105 = scmp.ne.s32.totalorder %s93, %s94
    %p106 = scmp.eq.s32.totalorder %s16, 1
    %p107 = por %p105, %p106
    %p109 = scmp.ne.s32.totalorder %s94, %s108
    %p110 = scmp.eq.s32.totalorder %s16, 0
    %p111 = por %p109, %p110
    %s112 = ssub.s32 %s10, %s17
    %p113 = scmp.eq.s32.totalorder %s112, 0
    %s115 = sadd.s32 %s114, 1
    %s116 = scalar_select %p113, %s114, %s115
    %p119 = pneg %p113
    %p120 = scmp.eq.s32.totalorder %s10, 1
    %p121 = por %p119, %p120
    %p122 = scmp.ne.s32.totalorder %s114, %s117
    %p123 = scmp.eq.s32.totalorder %s10, 0
    %p124 = por %p122, %p123
    %p125 = scmp.ne.s32.totalorder %s114, %s117
    %p126 = scmp.eq.s32.totalorder %s15, 1
    %p127 = por %p125, %p126
    %p128 = scmp.ne.s32.totalorder %s117, %s118
    %p129 = scmp.eq.s32.totalorder %s15, 0
    %p130 = por %p128, %p129
    %p131 = scmp.ne.s32.totalorder %s117, %s118
    %p132 = scmp.eq.s32.totalorder %s16, 1
    %p133 = por %p131, %p132
    %p135 = scmp.ne.s32.totalorder %s118, %s134
    %p136 = scmp.eq.s32.totalorder %s16, 0
    %p137 = por %p135, %p136
    %p138 = scmp.le.s32.totalorder 1, %s10
    %p139 = scmp.lt.s32.totalorder %s10, 3
    %p140 = pnand %p138, %p139
    %p141 = pneg %p140
    // Predicated region
    $region9: #{gnn_forward_pallas.1} parent=5 // pred_check
      _
    $region10: #{gnn_forward_pallas.1} parent=5 // pred_check_branch
      %143 = sbr.rel (%p140) target = $region12
    $region11: #{gnn_forward_pallas.1} parent=5 // pred_region
      %s144 = ssub.s32 %s10, 1
      // Predicated region
      $region13: #{gnn_forward_pallas.1} parent=11 // pred_check
        %p145 = pneg %p83
      $region14: #{gnn_forward_pallas.1} parent=11 // pred_check_branch
        %147 = sbr.rel (%p145) target = $region16
      $region15: #{gnn_forward_pallas.1} parent=11 // pred_region
        _
      $region16: #{gnn_forward_pallas.1} parent=11 // pred_fallthru
        _
      // Predicated region
      $region17: #{gnn_forward_pallas.1} parent=11 // pred_check
        %p148 = pneg %p104
      $region18: #{gnn_forward_pallas.1} parent=11 // pred_check_branch
        %150 = sbr.rel (%p148) target = $region20
      $region19: #{gnn_forward_pallas.1} parent=11 // pred_region
        _
      $region20: #{gnn_forward_pallas.1} parent=11 // pred_fallthru
        _
    $region12: #{gnn_forward_pallas.1} parent=5 // pred_fallthru
      _
    %p151 = scmp.lt.s32.totalorder %s10, 2
    // Predicated region
    $region21: #{gnn_forward_pallas.1} parent=5 // pred_check
      %p152 = pneg %p151
    $region22: #{gnn_forward_pallas.1} parent=5 // pred_check_branch
      %154 = sbr.rel (%p152) target = $region24
    $region23: #{gnn_forward_pallas.1} parent=5 // pred_region
      // Predicated region
      $region25: #{gnn_forward_pallas.1} parent=23 // pred_check
        %p155 = pneg %p30
      $region26: #{gnn_forward_pallas.1} parent=23 // pred_check_branch
        %157 = sbr.rel (%p155) target = $region28
      $region27: #{gnn_forward_pallas.1} parent=23 // pred_region
        %s158 = smul.u32 256, %s10
        %p159 = scmp.lt.s32.totalorder %s158, 511
        %s160 = scalar_select %p159, %s158, 511
        %s161 = smul.addr %s160, 4
        %s162 = scalar_lea.vmem %s0, %s161
        %s163 = smul.u32 256, %s10
      $region28: #{gnn_forward_pallas.1} parent=23 // pred_fallthru
        _
      // Predicated region
      $region29: #{gnn_forward_pallas.1} parent=23 // pred_check
        %p164 = pneg %p56
      $region30: #{gnn_forward_pallas.1} parent=23 // pred_check_branch
        %166 = sbr.rel (%p164) target = $region32
      $region31: #{gnn_forward_pallas.1} parent=23 // pred_region
        %s167 = smul.u32 32, %s10
        %p168 = scmp.lt.s32.totalorder %s167, 63
        %s169 = scalar_select %p168, %s167, 63
        %s170 = smul.addr %s169, 4
        %s171 = scalar_lea.vmem %s1, %s170
        %s172 = smul.u32 32, %s10
      $region32: #{gnn_forward_pallas.1} parent=23 // pred_fallthru
        _
    $region24: #{gnn_forward_pallas.1} parent=5 // pred_fallthru
      _
    %p173 = scmp.le.s32.totalorder 1, %s10
    %p174 = scmp.lt.s32.totalorder %s10, 3
    %p175 = pnand %p173, %p174
    %p176 = pneg %p175
    // Predicated region
    $region33: #{gnn_forward_pallas.1} parent=5 // pred_check
      _
    $region34: #{gnn_forward_pallas.1} parent=5 // pred_check_branch
      %178 = sbr.rel (%p175) target = $region36
    $region35: #{gnn_forward_pallas.1} parent=5 // pred_region
      %s179 = ssub.s32 %s10, 1
      %s180 = smul.u32 256, %s15
      %p181 = scmp.lt.s32.totalorder %s180, 511
      %s182 = scalar_select %p181, %s180, 511
      %s183 = smul.addr %s182, 4
      %s184 = scalar_lea.vmem %s0, %s183
      %p185 = pneg %p36
      %p186 = pneg %p33
      %s187 = smul.u32 32, %s15
      %p188 = scmp.lt.s32.totalorder %s187, 63
      %s189 = scalar_select %p188, %s187, 63
      %s190 = smul.addr %s189, 4
      %s191 = scalar_lea.vmem %s1, %s190
      %p192 = pneg %p62
      %p193 = pneg %p59
      %p194 = pneg %p83
      %p195 = pneg %p80
      %p196 = pneg %p104
      %p197 = pneg %p101
      %p198 = pneg %p130
      %p199 = pneg %p127
      %s200 = smul.u32 32, %s15
      %p201 = scmp.lt.s32.totalorder %s200, 63
      %s202 = scalar_select %p201, %s200, 63
      %s203 = smul.addr %s202, 8
      %s204 = scalar_lea.vmem %s4, %s203
      %s205 = smul.u32 256, %s15
      %p206 = scmp.lt.s32.totalorder %s205, 511
      %s207 = scalar_select %p206, %s205, 511
      %s208 = smul.addr %s207, 4
      %s209 = scalar_lea.vmem %s0, %s208
      %s210 = smul.u32 256, %s15
      %s211 = smul.u32 32, %s15
      %p212 = scmp.lt.s32.totalorder %s211, 63
      %s213 = scalar_select %p212, %s211, 63
      %s214 = smul.addr %s213, 4
      %s215 = scalar_lea.vmem %s1, %s214
      %s216 = smul.u32 32, %s15
      %s217 = smul.u32 32, %s15
      %p218 = scmp.lt.s32.totalorder %s217, 63
      %s219 = scalar_select %p218, %s217, 63
      %s220 = smul.addr %s219, 8
      %s221 = scalar_lea.vmem %s4, %s220
      %s222 = smul.u32 32, %s15
      %v224 = vld [vmem:[%s209] sm:$0xf]
      %v225 = vld [vmem:[%s209 + $0x4] sm:$0xf]
      %v226 = vld [vmem:[%s209 + $0x8] sm:$0xf]
      %v227 = vld [vmem:[%s209 + $0xc] sm:$0xf]
      %v228 = vld [vmem:[%s209 + $0x10] sm:$0xf]
      %v229 = vld [vmem:[%s209 + $0x14] sm:$0xf]
      %v230 = vld [vmem:[%s209 + $0x18] sm:$0xf]
      %v231 = vld [vmem:[%s209 + $0x1c] sm:$0xf]
      %v232 = vld [vmem:[%s209 + $0x20] sm:$0xf]
      %v233 = vld [vmem:[%s209 + $0x24] sm:$0xf]
      %v234 = vld [vmem:[%s209 + $0x28] sm:$0xf]
      %v235 = vld [vmem:[%s209 + $0x2c] sm:$0xf]
      %v236 = vld [vmem:[%s209 + $0x30] sm:$0xf]
      %v237 = vld [vmem:[%s209 + $0x34] sm:$0xf]
      %v238 = vld [vmem:[%s209 + $0x38] sm:$0xf]
      %v239 = vld [vmem:[%s209 + $0x3c] sm:$0xf]
      %v240 = vld [vmem:[%s209 + $0x40] sm:$0xf]
      %v241 = vld [vmem:[%s209 + $0x44] sm:$0xf]
      %v242 = vld [vmem:[%s209 + $0x48] sm:$0xf]
      %v243 = vld [vmem:[%s209 + $0x4c] sm:$0xf]
      %v244 = vld [vmem:[%s209 + $0x50] sm:$0xf]
      %v245 = vld [vmem:[%s209 + $0x54] sm:$0xf]
      %v246 = vld [vmem:[%s209 + $0x58] sm:$0xf]
      %v247 = vld [vmem:[%s209 + $0x5c] sm:$0xf]
      %v248 = vld [vmem:[%s209 + $0x60] sm:$0xf]
      %v249 = vld [vmem:[%s209 + $0x64] sm:$0xf]
      %v250 = vld [vmem:[%s209 + $0x68] sm:$0xf]
      %v251 = vld [vmem:[%s209 + $0x6c] sm:$0xf]
      %v252 = vld [vmem:[%s209 + $0x70] sm:$0xf]
      %v253 = vld [vmem:[%s209 + $0x74] sm:$0xf]
      %v254 = vld [vmem:[%s209 + $0x78] sm:$0xf]
      %v255 = vld [vmem:[%s209 + $0x7c] sm:$0xf]
      %v256 = vld [vmem:[%s209 + $0x80] sm:$0xf]
      %v257 = vld [vmem:[%s209 + $0x84] sm:$0xf]
      %v258 = vld [vmem:[%s209 + $0x88] sm:$0xf]
      %v259 = vld [vmem:[%s209 + $0x8c] sm:$0xf]
      %v260 = vld [vmem:[%s209 + $0x90] sm:$0xf]
      %v261 = vld [vmem:[%s209 + $0x94] sm:$0xf]
      %v262 = vld [vmem:[%s209 + $0x98] sm:$0xf]
      %v263 = vld [vmem:[%s209 + $0x9c] sm:$0xf]
      %v264 = vld [vmem:[%s209 + $0xa0] sm:$0xf]
      %v265 = vld [vmem:[%s209 + $0xa4] sm:$0xf]
      %v266 = vld [vmem:[%s209 + $0xa8] sm:$0xf]
      %v267 = vld [vmem:[%s209 + $0xac] sm:$0xf]
      %v268 = vld [vmem:[%s209 + $0xb0] sm:$0xf]
      %v269 = vld [vmem:[%s209 + $0xb4] sm:$0xf]
      %v270 = vld [vmem:[%s209 + $0xb8] sm:$0xf]
      %v271 = vld [vmem:[%s209 + $0xbc] sm:$0xf]
      %v272 = vld [vmem:[%s209 + $0xc0] sm:$0xf]
      %v273 = vld [vmem:[%s209 + $0xc4] sm:$0xf]
      %v274 = vld [vmem:[%s209 + $0xc8] sm:$0xf]
      %v275 = vld [vmem:[%s209 + $0xcc] sm:$0xf]
      %v276 = vld [vmem:[%s209 + $0xd0] sm:$0xf]
      %v277 = vld [vmem:[%s209 + $0xd4] sm:$0xf]
      %v278 = vld [vmem:[%s209 + $0xd8] sm:$0xf]
      %v279 = vld [vmem:[%s209 + $0xdc] sm:$0xf]
      %v280 = vld [vmem:[%s209 + $0xe0] sm:$0xf]
      %v281 = vld [vmem:[%s209 + $0xe4] sm:$0xf]
      %v282 = vld [vmem:[%s209 + $0xe8] sm:$0xf]
      %v283 = vld [vmem:[%s209 + $0xec] sm:$0xf]
      %v284 = vld [vmem:[%s209 + $0xf0] sm:$0xf]
      %v285 = vld [vmem:[%s209 + $0xf4] sm:$0xf]
      %v286 = vld [vmem:[%s209 + $0xf8] sm:$0xf]
      %v287 = vld [vmem:[%s209 + $0xfc] sm:$0xf]
      %v288 = vld [vmem:[%s209 + $0x100] sm:$0xf]
      %v289 = vld [vmem:[%s209 + $0x104] sm:$0xf]
      %v290 = vld [vmem:[%s209 + $0x108] sm:$0xf]
      %v291 = vld [vmem:[%s209 + $0x10c] sm:$0xf]
      %v292 = vld [vmem:[%s209 + $0x110] sm:$0xf]
      %v293 = vld [vmem:[%s209 + $0x114] sm:$0xf]
      %v294 = vld [vmem:[%s209 + $0x118] sm:$0xf]
      %v295 = vld [vmem:[%s209 + $0x11c] sm:$0xf]
      %v296 = vld [vmem:[%s209 + $0x120] sm:$0xf]
      %v297 = vld [vmem:[%s209 + $0x124] sm:$0xf]
      %v298 = vld [vmem:[%s209 + $0x128] sm:$0xf]
      %v299 = vld [vmem:[%s209 + $0x12c] sm:$0xf]
      %v300 = vld [vmem:[%s209 + $0x130] sm:$0xf]
      %v301 = vld [vmem:[%s209 + $0x134] sm:$0xf]
      %v302 = vld [vmem:[%s209 + $0x138] sm:$0xf]
      %v303 = vld [vmem:[%s209 + $0x13c] sm:$0xf]
      %v304 = vld [vmem:[%s209 + $0x140] sm:$0xf]
      %v305 = vld [vmem:[%s209 + $0x144] sm:$0xf]
      %v306 = vld [vmem:[%s209 + $0x148] sm:$0xf]
      %v307 = vld [vmem:[%s209 + $0x14c] sm:$0xf]
      %v308 = vld [vmem:[%s209 + $0x150] sm:$0xf]
      %v309 = vld [vmem:[%s209 + $0x154] sm:$0xf]
      %v310 = vld [vmem:[%s209 + $0x158] sm:$0xf]
      %v311 = vld [vmem:[%s209 + $0x15c] sm:$0xf]
      %v312 = vld [vmem:[%s209 + $0x160] sm:$0xf]
      %v313 = vld [vmem:[%s209 + $0x164] sm:$0xf]
      %v314 = vld [vmem:[%s209 + $0x168] sm:$0xf]
      %v315 = vld [vmem:[%s209 + $0x16c] sm:$0xf]
      %v316 = vld [vmem:[%s209 + $0x170] sm:$0xf]
      %v317 = vld [vmem:[%s209 + $0x174] sm:$0xf]
      %v318 = vld [vmem:[%s209 + $0x178] sm:$0xf]
      %v319 = vld [vmem:[%s209 + $0x17c] sm:$0xf]
      %v320 = vld [vmem:[%s209 + $0x180] sm:$0xf]
      %v321 = vld [vmem:[%s209 + $0x184] sm:$0xf]
      %v322 = vld [vmem:[%s209 + $0x188] sm:$0xf]
      %v323 = vld [vmem:[%s209 + $0x18c] sm:$0xf]
      %v324 = vld [vmem:[%s209 + $0x190] sm:$0xf]
      %v325 = vld [vmem:[%s209 + $0x194] sm:$0xf]
      %v326 = vld [vmem:[%s209 + $0x198] sm:$0xf]
      %v327 = vld [vmem:[%s209 + $0x19c] sm:$0xf]
      %v328 = vld [vmem:[%s209 + $0x1a0] sm:$0xf]
      %v329 = vld [vmem:[%s209 + $0x1a4] sm:$0xf]
      %v330 = vld [vmem:[%s209 + $0x1a8] sm:$0xf]
      %v331 = vld [vmem:[%s209 + $0x1ac] sm:$0xf]
      %v332 = vld [vmem:[%s209 + $0x1b0] sm:$0xf]
      %v333 = vld [vmem:[%s209 + $0x1b4] sm:$0xf]
      %v334 = vld [vmem:[%s209 + $0x1b8] sm:$0xf]
      %v335 = vld [vmem:[%s209 + $0x1bc] sm:$0xf]
      %v336 = vld [vmem:[%s209 + $0x1c0] sm:$0xf]
      %v337 = vld [vmem:[%s209 + $0x1c4] sm:$0xf]
      %v338 = vld [vmem:[%s209 + $0x1c8] sm:$0xf]
      %v339 = vld [vmem:[%s209 + $0x1cc] sm:$0xf]
      %v340 = vld [vmem:[%s209 + $0x1d0] sm:$0xf]
      %v341 = vld [vmem:[%s209 + $0x1d4] sm:$0xf]
      %v342 = vld [vmem:[%s209 + $0x1d8] sm:$0xf]
      %v343 = vld [vmem:[%s209 + $0x1dc] sm:$0xf]
      %v344 = vld [vmem:[%s209 + $0x1e0] sm:$0xf]
      %v345 = vld [vmem:[%s209 + $0x1e4] sm:$0xf]
      %v346 = vld [vmem:[%s209 + $0x1e8] sm:$0xf]
      %v347 = vld [vmem:[%s209 + $0x1ec] sm:$0xf]
      %v348 = vld [vmem:[%s209 + $0x1f0] sm:$0xf]
      %v349 = vld [vmem:[%s209 + $0x1f4] sm:$0xf]
      %v350 = vld [vmem:[%s209 + $0x1f8] sm:$0xf]
      %v351 = vld [vmem:[%s209 + $0x1fc] sm:$0xf]
      %v352 = vld [vmem:[%s209 + $0x200] sm:$0xf]
      %v353 = vld [vmem:[%s209 + $0x204] sm:$0xf]
      %v354 = vld [vmem:[%s209 + $0x208] sm:$0xf]
      %v355 = vld [vmem:[%s209 + $0x20c] sm:$0xf]
      %v356 = vld [vmem:[%s209 + $0x210] sm:$0xf]
      %v357 = vld [vmem:[%s209 + $0x214] sm:$0xf]
      %v358 = vld [vmem:[%s209 + $0x218] sm:$0xf]
      %v359 = vld [vmem:[%s209 + $0x21c] sm:$0xf]
      %v360 = vld [vmem:[%s209 + $0x220] sm:$0xf]
      %v361 = vld [vmem:[%s209 + $0x224] sm:$0xf]
      %v362 = vld [vmem:[%s209 + $0x228] sm:$0xf]
      %v363 = vld [vmem:[%s209 + $0x22c] sm:$0xf]
      %v364 = vld [vmem:[%s209 + $0x230] sm:$0xf]
      %v365 = vld [vmem:[%s209 + $0x234] sm:$0xf]
      %v366 = vld [vmem:[%s209 + $0x238] sm:$0xf]
      %v367 = vld [vmem:[%s209 + $0x23c] sm:$0xf]
      %v368 = vld [vmem:[%s209 + $0x240] sm:$0xf]
      %v369 = vld [vmem:[%s209 + $0x244] sm:$0xf]
      %v370 = vld [vmem:[%s209 + $0x248] sm:$0xf]
      %v371 = vld [vmem:[%s209 + $0x24c] sm:$0xf]
      %v372 = vld [vmem:[%s209 + $0x250] sm:$0xf]
      %v373 = vld [vmem:[%s209 + $0x254] sm:$0xf]
      %v374 = vld [vmem:[%s209 + $0x258] sm:$0xf]
      %v375 = vld [vmem:[%s209 + $0x25c] sm:$0xf]
      %v376 = vld [vmem:[%s209 + $0x260] sm:$0xf]
      %v377 = vld [vmem:[%s209 + $0x264] sm:$0xf]
      %v378 = vld [vmem:[%s209 + $0x268] sm:$0xf]
      %v379 = vld [vmem:[%s209 + $0x26c] sm:$0xf]
      %v380 = vld [vmem:[%s209 + $0x270] sm:$0xf]
      %v381 = vld [vmem:[%s209 + $0x274] sm:$0xf]
      %v382 = vld [vmem:[%s209 + $0x278] sm:$0xf]
      %v383 = vld [vmem:[%s209 + $0x27c] sm:$0xf]
      %v384 = vld [vmem:[%s209 + $0x280] sm:$0xf]
      %v385 = vld [vmem:[%s209 + $0x284] sm:$0xf]
      %v386 = vld [vmem:[%s209 + $0x288] sm:$0xf]
      %v387 = vld [vmem:[%s209 + $0x28c] sm:$0xf]
      %v388 = vld [vmem:[%s209 + $0x290] sm:$0xf]
      %v389 = vld [vmem:[%s209 + $0x294] sm:$0xf]
      %v390 = vld [vmem:[%s209 + $0x298] sm:$0xf]
      %v391 = vld [vmem:[%s209 + $0x29c] sm:$0xf]
      %v392 = vld [vmem:[%s209 + $0x2a0] sm:$0xf]
      %v393 = vld [vmem:[%s209 + $0x2a4] sm:$0xf]
      %v394 = vld [vmem:[%s209 + $0x2a8] sm:$0xf]
      %v395 = vld [vmem:[%s209 + $0x2ac] sm:$0xf]
      %v396 = vld [vmem:[%s209 + $0x2b0] sm:$0xf]
      %v397 = vld [vmem:[%s209 + $0x2b4] sm:$0xf]
      %v398 = vld [vmem:[%s209 + $0x2b8] sm:$0xf]
      %v399 = vld [vmem:[%s209 + $0x2bc] sm:$0xf]
      %v400 = vld [vmem:[%s209 + $0x2c0] sm:$0xf]
      %v401 = vld [vmem:[%s209 + $0x2c4] sm:$0xf]
      %v402 = vld [vmem:[%s209 + $0x2c8] sm:$0xf]
      %v403 = vld [vmem:[%s209 + $0x2cc] sm:$0xf]
      %v404 = vld [vmem:[%s209 + $0x2d0] sm:$0xf]
      %v405 = vld [vmem:[%s209 + $0x2d4] sm:$0xf]
      %v406 = vld [vmem:[%s209 + $0x2d8] sm:$0xf]
      %v407 = vld [vmem:[%s209 + $0x2dc] sm:$0xf]
      %v408 = vld [vmem:[%s209 + $0x2e0] sm:$0xf]
      %v409 = vld [vmem:[%s209 + $0x2e4] sm:$0xf]
      %v410 = vld [vmem:[%s209 + $0x2e8] sm:$0xf]
      %v411 = vld [vmem:[%s209 + $0x2ec] sm:$0xf]
      %v412 = vld [vmem:[%s209 + $0x2f0] sm:$0xf]
      %v413 = vld [vmem:[%s209 + $0x2f4] sm:$0xf]
      %v414 = vld [vmem:[%s209 + $0x2f8] sm:$0xf]
      %v415 = vld [vmem:[%s209 + $0x2fc] sm:$0xf]
      %v416 = vld [vmem:[%s209 + $0x300] sm:$0xf]
      %v417 = vld [vmem:[%s209 + $0x304] sm:$0xf]
      %v418 = vld [vmem:[%s209 + $0x308] sm:$0xf]
      %v419 = vld [vmem:[%s209 + $0x30c] sm:$0xf]
      %v420 = vld [vmem:[%s209 + $0x310] sm:$0xf]
      %v421 = vld [vmem:[%s209 + $0x314] sm:$0xf]
      %v422 = vld [vmem:[%s209 + $0x318] sm:$0xf]
      %v423 = vld [vmem:[%s209 + $0x31c] sm:$0xf]
      %v424 = vld [vmem:[%s209 + $0x320] sm:$0xf]
      %v425 = vld [vmem:[%s209 + $0x324] sm:$0xf]
      %v426 = vld [vmem:[%s209 + $0x328] sm:$0xf]
      %v427 = vld [vmem:[%s209 + $0x32c] sm:$0xf]
      %v428 = vld [vmem:[%s209 + $0x330] sm:$0xf]
      %v429 = vld [vmem:[%s209 + $0x334] sm:$0xf]
      %v430 = vld [vmem:[%s209 + $0x338] sm:$0xf]
      %v431 = vld [vmem:[%s209 + $0x33c] sm:$0xf]
      %v432 = vld [vmem:[%s209 + $0x340] sm:$0xf]
      %v433 = vld [vmem:[%s209 + $0x344] sm:$0xf]
      %v434 = vld [vmem:[%s209 + $0x348] sm:$0xf]
      %v435 = vld [vmem:[%s209 + $0x34c] sm:$0xf]
      %v436 = vld [vmem:[%s209 + $0x350] sm:$0xf]
      %v437 = vld [vmem:[%s209 + $0x354] sm:$0xf]
      %v438 = vld [vmem:[%s209 + $0x358] sm:$0xf]
      %v439 = vld [vmem:[%s209 + $0x35c] sm:$0xf]
      %v440 = vld [vmem:[%s209 + $0x360] sm:$0xf]
      %v441 = vld [vmem:[%s209 + $0x364] sm:$0xf]
      %v442 = vld [vmem:[%s209 + $0x368] sm:$0xf]
      %v443 = vld [vmem:[%s209 + $0x36c] sm:$0xf]
      %v444 = vld [vmem:[%s209 + $0x370] sm:$0xf]
      %v445 = vld [vmem:[%s209 + $0x374] sm:$0xf]
      %v446 = vld [vmem:[%s209 + $0x378] sm:$0xf]
      %v447 = vld [vmem:[%s209 + $0x37c] sm:$0xf]
      %v448 = vld [vmem:[%s209 + $0x380] sm:$0xf]
      %v449 = vld [vmem:[%s209 + $0x384] sm:$0xf]
      %v450 = vld [vmem:[%s209 + $0x388] sm:$0xf]
      %v451 = vld [vmem:[%s209 + $0x38c] sm:$0xf]
      %v452 = vld [vmem:[%s209 + $0x390] sm:$0xf]
      %v453 = vld [vmem:[%s209 + $0x394] sm:$0xf]
      %v454 = vld [vmem:[%s209 + $0x398] sm:$0xf]
      %v455 = vld [vmem:[%s209 + $0x39c] sm:$0xf]
      %v456 = vld [vmem:[%s209 + $0x3a0] sm:$0xf]
      %v457 = vld [vmem:[%s209 + $0x3a4] sm:$0xf]
      %v458 = vld [vmem:[%s209 + $0x3a8] sm:$0xf]
      %v459 = vld [vmem:[%s209 + $0x3ac] sm:$0xf]
      %v460 = vld [vmem:[%s209 + $0x3b0] sm:$0xf]
      %v461 = vld [vmem:[%s209 + $0x3b4] sm:$0xf]
      %v462 = vld [vmem:[%s209 + $0x3b8] sm:$0xf]
      %v463 = vld [vmem:[%s209 + $0x3bc] sm:$0xf]
      %v464 = vld [vmem:[%s209 + $0x3c0] sm:$0xf]
      %v465 = vld [vmem:[%s209 + $0x3c4] sm:$0xf]
      %v466 = vld [vmem:[%s209 + $0x3c8] sm:$0xf]
      %v467 = vld [vmem:[%s209 + $0x3cc] sm:$0xf]
      %v468 = vld [vmem:[%s209 + $0x3d0] sm:$0xf]
      %v469 = vld [vmem:[%s209 + $0x3d4] sm:$0xf]
      %v470 = vld [vmem:[%s209 + $0x3d8] sm:$0xf]
      %v471 = vld [vmem:[%s209 + $0x3dc] sm:$0xf]
      %v472 = vld [vmem:[%s209 + $0x3e0] sm:$0xf]
      %v473 = vld [vmem:[%s209 + $0x3e4] sm:$0xf]
      %v474 = vld [vmem:[%s209 + $0x3e8] sm:$0xf]
      %v475 = vld [vmem:[%s209 + $0x3ec] sm:$0xf]
      %v476 = vld [vmem:[%s209 + $0x3f0] sm:$0xf]
      %v477 = vld [vmem:[%s209 + $0x3f4] sm:$0xf]
      %v478 = vld [vmem:[%s209 + $0x3f8] sm:$0xf]
      %v479 = vld [vmem:[%s209 + $0x3fc] sm:$0xf]
      %v480 = vld [vmem:[%s2] sm:$0xf]
      %v481 = vld [vmem:[%s2 + $0x4] sm:$0xf]
      %v482 = vld [vmem:[%s2 + $0x8] sm:$0xf]
      %v483 = vld [vmem:[%s2 + $0xc] sm:$0xf]
      %v484 = vld [vmem:[%s2 + $0x10] sm:$0xf]
      %v485 = vld [vmem:[%s2 + $0x14] sm:$0xf]
      %v486 = vld [vmem:[%s2 + $0x18] sm:$0xf]
      %v487 = vld [vmem:[%s2 + $0x1c] sm:$0xf]
      %v488 = vld [vmem:[%s2 + $0x20] sm:$0xf]
      %v489 = vld [vmem:[%s2 + $0x24] sm:$0xf]
      %v490 = vld [vmem:[%s2 + $0x28] sm:$0xf]
      %v491 = vld [vmem:[%s2 + $0x2c] sm:$0xf]
      %v492 = vld [vmem:[%s2 + $0x30] sm:$0xf]
      %v493 = vld [vmem:[%s2 + $0x34] sm:$0xf]
      %v494 = vld [vmem:[%s2 + $0x38] sm:$0xf]
      %v495 = vld [vmem:[%s2 + $0x3c] sm:$0xf]
      %v752 = vunpack.c.l.b16 %v224
      %v753 = vunpack.c.l.b16 %v225
      %v754 = vunpack.c.l.b16 %v226
      %v755 = vunpack.c.l.b16 %v227
      %v756 = vunpack.c.l.b16 %v228
      %v757 = vunpack.c.l.b16 %v229
      %v758 = vunpack.c.l.b16 %v230
      %v759 = vunpack.c.l.b16 %v231
      %v760 = vunpack.c.l.b16 %v232
      %v761 = vunpack.c.l.b16 %v233
      %v762 = vunpack.c.l.b16 %v234
      %v763 = vunpack.c.l.b16 %v235
      %v764 = vunpack.c.l.b16 %v236
      %v765 = vunpack.c.l.b16 %v237
      %v766 = vunpack.c.l.b16 %v238
      %v767 = vunpack.c.l.b16 %v239
      %v768 = vunpack.c.l.b16 %v240
      %v769 = vunpack.c.l.b16 %v241
      %v770 = vunpack.c.l.b16 %v242
      %v771 = vunpack.c.l.b16 %v243
      %v772 = vunpack.c.l.b16 %v244
      %v773 = vunpack.c.l.b16 %v245
      %v774 = vunpack.c.l.b16 %v246
      %v775 = vunpack.c.l.b16 %v247
      %v776 = vunpack.c.l.b16 %v248
      %v777 = vunpack.c.l.b16 %v249
      %v778 = vunpack.c.l.b16 %v250
      %v779 = vunpack.c.l.b16 %v251
      %v780 = vunpack.c.l.b16 %v252
      %v781 = vunpack.c.l.b16 %v253
      %v782 = vunpack.c.l.b16 %v254
      %v783 = vunpack.c.l.b16 %v255
      %v784 = vunpack.c.l.b16 %v256
      %v785 = vunpack.c.l.b16 %v257
      %v786 = vunpack.c.l.b16 %v258
      %v787 = vunpack.c.l.b16 %v259
      %v788 = vunpack.c.l.b16 %v260
      %v789 = vunpack.c.l.b16 %v261
      %v790 = vunpack.c.l.b16 %v262
      %v791 = vunpack.c.l.b16 %v263
      %v792 = vunpack.c.l.b16 %v264
      %v793 = vunpack.c.l.b16 %v265
      %v794 = vunpack.c.l.b16 %v266
      %v795 = vunpack.c.l.b16 %v267
      %v796 = vunpack.c.l.b16 %v268
      %v797 = vunpack.c.l.b16 %v269
      %v798 = vunpack.c.l.b16 %v270
      %v799 = vunpack.c.l.b16 %v271
      %v800 = vunpack.c.l.b16 %v272
      %v801 = vunpack.c.l.b16 %v273
      %v802 = vunpack.c.l.b16 %v274
      %v803 = vunpack.c.l.b16 %v275
      %v804 = vunpack.c.l.b16 %v276
      %v805 = vunpack.c.l.b16 %v277
      %v806 = vunpack.c.l.b16 %v278
      %v807 = vunpack.c.l.b16 %v279
      %v808 = vunpack.c.l.b16 %v280
      %v809 = vunpack.c.l.b16 %v281
      %v810 = vunpack.c.l.b16 %v282
      %v811 = vunpack.c.l.b16 %v283
      %v812 = vunpack.c.l.b16 %v284
      %v813 = vunpack.c.l.b16 %v285
      %v814 = vunpack.c.l.b16 %v286
      %v815 = vunpack.c.l.b16 %v287
      %v816 = vunpack.c.l.b16 %v288
      %v817 = vunpack.c.l.b16 %v289
      %v818 = vunpack.c.l.b16 %v290
      %v819 = vunpack.c.l.b16 %v291
      %v820 = vunpack.c.l.b16 %v292
      %v821 = vunpack.c.l.b16 %v293
      %v822 = vunpack.c.l.b16 %v294
      %v823 = vunpack.c.l.b16 %v295
      %v824 = vunpack.c.l.b16 %v296
      %v825 = vunpack.c.l.b16 %v297
      %v826 = vunpack.c.l.b16 %v298
      %v827 = vunpack.c.l.b16 %v299
      %v828 = vunpack.c.l.b16 %v300
      %v829 = vunpack.c.l.b16 %v301
      %v830 = vunpack.c.l.b16 %v302
      %v831 = vunpack.c.l.b16 %v303
      %v832 = vunpack.c.l.b16 %v304
      %v833 = vunpack.c.l.b16 %v305
      %v834 = vunpack.c.l.b16 %v306
      %v835 = vunpack.c.l.b16 %v307
      %v836 = vunpack.c.l.b16 %v308
      %v837 = vunpack.c.l.b16 %v309
      %v838 = vunpack.c.l.b16 %v310
      %v839 = vunpack.c.l.b16 %v311
      %v840 = vunpack.c.l.b16 %v312
      %v841 = vunpack.c.l.b16 %v313
      %v842 = vunpack.c.l.b16 %v314
      %v843 = vunpack.c.l.b16 %v315
      %v844 = vunpack.c.l.b16 %v316
      %v845 = vunpack.c.l.b16 %v317
      %v846 = vunpack.c.l.b16 %v318
      %v847 = vunpack.c.l.b16 %v319
      %v848 = vunpack.c.l.b16 %v320
      %v849 = vunpack.c.l.b16 %v321
      %v850 = vunpack.c.l.b16 %v322
      %v851 = vunpack.c.l.b16 %v323
      %v852 = vunpack.c.l.b16 %v324
      %v853 = vunpack.c.l.b16 %v325
      %v854 = vunpack.c.l.b16 %v326
      %v855 = vunpack.c.l.b16 %v327
      %v856 = vunpack.c.l.b16 %v328
      %v857 = vunpack.c.l.b16 %v329
      %v858 = vunpack.c.l.b16 %v330
      %v859 = vunpack.c.l.b16 %v331
      %v860 = vunpack.c.l.b16 %v332
      %v861 = vunpack.c.l.b16 %v333
      %v862 = vunpack.c.l.b16 %v334
      %v863 = vunpack.c.l.b16 %v335
      %v864 = vunpack.c.l.b16 %v336
      %v865 = vunpack.c.l.b16 %v337
      %v866 = vunpack.c.l.b16 %v338
      %v867 = vunpack.c.l.b16 %v339
      %v868 = vunpack.c.l.b16 %v340
      %v869 = vunpack.c.l.b16 %v341
      %v870 = vunpack.c.l.b16 %v342
      %v871 = vunpack.c.l.b16 %v343
      %v872 = vunpack.c.l.b16 %v344
      %v873 = vunpack.c.l.b16 %v345
      %v874 = vunpack.c.l.b16 %v346
      %v875 = vunpack.c.l.b16 %v347
      %v876 = vunpack.c.l.b16 %v348
      %v877 = vunpack.c.l.b16 %v349
      %v878 = vunpack.c.l.b16 %v350
      %v879 = vunpack.c.l.b16 %v351
      %v880 = vunpack.c.l.b16 %v352
      %v881 = vunpack.c.l.b16 %v353
      %v882 = vunpack.c.l.b16 %v354
      %v883 = vunpack.c.l.b16 %v355
      %v884 = vunpack.c.l.b16 %v356
      %v885 = vunpack.c.l.b16 %v357
      %v886 = vunpack.c.l.b16 %v358
      %v887 = vunpack.c.l.b16 %v359
      %v888 = vunpack.c.l.b16 %v360
      %v889 = vunpack.c.l.b16 %v361
      %v890 = vunpack.c.l.b16 %v362
      %v891 = vunpack.c.l.b16 %v363
      %v892 = vunpack.c.l.b16 %v364
      %v893 = vunpack.c.l.b16 %v365
      %v894 = vunpack.c.l.b16 %v366
      %v895 = vunpack.c.l.b16 %v367
      %v896 = vunpack.c.l.b16 %v368
      %v897 = vunpack.c.l.b16 %v369
      %v898 = vunpack.c.l.b16 %v370
      %v899 = vunpack.c.l.b16 %v371
      %v900 = vunpack.c.l.b16 %v372
      %v901 = vunpack.c.l.b16 %v373
      %v902 = vunpack.c.l.b16 %v374
      %v903 = vunpack.c.l.b16 %v375
      %v904 = vunpack.c.l.b16 %v376
      %v905 = vunpack.c.l.b16 %v377
      %v906 = vunpack.c.l.b16 %v378
      %v907 = vunpack.c.l.b16 %v379
      %v908 = vunpack.c.l.b16 %v380
      %v909 = vunpack.c.l.b16 %v381
      %v910 = vunpack.c.l.b16 %v382
      %v911 = vunpack.c.l.b16 %v383
      %v912 = vunpack.c.l.b16 %v384
      %v913 = vunpack.c.l.b16 %v385
      %v914 = vunpack.c.l.b16 %v386
      %v915 = vunpack.c.l.b16 %v387
      %v916 = vunpack.c.l.b16 %v388
      %v917 = vunpack.c.l.b16 %v389
      %v918 = vunpack.c.l.b16 %v390
      %v919 = vunpack.c.l.b16 %v391
      %v920 = vunpack.c.l.b16 %v392
      %v921 = vunpack.c.l.b16 %v393
      %v922 = vunpack.c.l.b16 %v394
      %v923 = vunpack.c.l.b16 %v395
      %v924 = vunpack.c.l.b16 %v396
      %v925 = vunpack.c.l.b16 %v397
      %v926 = vunpack.c.l.b16 %v398
      %v927 = vunpack.c.l.b16 %v399
      %v928 = vunpack.c.l.b16 %v400
      %v929 = vunpack.c.l.b16 %v401
      %v930 = vunpack.c.l.b16 %v402
      %v931 = vunpack.c.l.b16 %v403
      %v932 = vunpack.c.l.b16 %v404
      %v933 = vunpack.c.l.b16 %v405
      %v934 = vunpack.c.l.b16 %v406
      %v935 = vunpack.c.l.b16 %v407
      %v936 = vunpack.c.l.b16 %v408
      %v937 = vunpack.c.l.b16 %v409
      %v938 = vunpack.c.l.b16 %v410
      %v939 = vunpack.c.l.b16 %v411
      %v940 = vunpack.c.l.b16 %v412
      %v941 = vunpack.c.l.b16 %v413
      %v942 = vunpack.c.l.b16 %v414
      %v943 = vunpack.c.l.b16 %v415
      %v944 = vunpack.c.l.b16 %v416
      %v945 = vunpack.c.l.b16 %v417
      %v946 = vunpack.c.l.b16 %v418
      %v947 = vunpack.c.l.b16 %v419
      %v948 = vunpack.c.l.b16 %v420
      %v949 = vunpack.c.l.b16 %v421
      %v950 = vunpack.c.l.b16 %v422
      %v951 = vunpack.c.l.b16 %v423
      %v952 = vunpack.c.l.b16 %v424
      %v953 = vunpack.c.l.b16 %v425
      %v954 = vunpack.c.l.b16 %v426
      %v955 = vunpack.c.l.b16 %v427
      %v956 = vunpack.c.l.b16 %v428
      %v957 = vunpack.c.l.b16 %v429
      %v958 = vunpack.c.l.b16 %v430
      %v959 = vunpack.c.l.b16 %v431
      %v960 = vunpack.c.l.b16 %v432
      %v961 = vunpack.c.l.b16 %v433
      %v962 = vunpack.c.l.b16 %v434
      %v963 = vunpack.c.l.b16 %v435
      %v964 = vunpack.c.l.b16 %v436
      %v965 = vunpack.c.l.b16 %v437
      %v966 = vunpack.c.l.b16 %v438
      %v967 = vunpack.c.l.b16 %v439
      %v968 = vunpack.c.l.b16 %v440
      %v969 = vunpack.c.l.b16 %v441
      %v970 = vunpack.c.l.b16 %v442
      %v971 = vunpack.c.l.b16 %v443
      %v972 = vunpack.c.l.b16 %v444
      %v973 = vunpack.c.l.b16 %v445
      %v974 = vunpack.c.l.b16 %v446
      %v975 = vunpack.c.l.b16 %v447
      %v976 = vunpack.c.l.b16 %v448
      %v977 = vunpack.c.l.b16 %v449
      %v978 = vunpack.c.l.b16 %v450
      %v979 = vunpack.c.l.b16 %v451
      %v980 = vunpack.c.l.b16 %v452
      %v981 = vunpack.c.l.b16 %v453
      %v982 = vunpack.c.l.b16 %v454
      %v983 = vunpack.c.l.b16 %v455
      %v984 = vunpack.c.l.b16 %v456
      %v985 = vunpack.c.l.b16 %v457
      %v986 = vunpack.c.l.b16 %v458
      %v987 = vunpack.c.l.b16 %v459
      %v988 = vunpack.c.l.b16 %v460
      %v989 = vunpack.c.l.b16 %v461
      %v990 = vunpack.c.l.b16 %v462
      %v991 = vunpack.c.l.b16 %v463
      %v992 = vunpack.c.l.b16 %v464
      %v993 = vunpack.c.l.b16 %v465
      %v994 = vunpack.c.l.b16 %v466
      %v995 = vunpack.c.l.b16 %v467
      %v996 = vunpack.c.l.b16 %v468
      %v997 = vunpack.c.l.b16 %v469
      %v998 = vunpack.c.l.b16 %v470
      %v999 = vunpack.c.l.b16 %v471
      %v1000 = vunpack.c.l.b16 %v472
      %v1001 = vunpack.c.l.b16 %v473
      %v1002 = vunpack.c.l.b16 %v474
      %v1003 = vunpack.c.l.b16 %v475
      %v1004 = vunpack.c.l.b16 %v476
      %v1005 = vunpack.c.l.b16 %v477
      %v1006 = vunpack.c.l.b16 %v478
      %v1007 = vunpack.c.l.b16 %v479
      %v1008 = vpack.c.b16 %v753, %v752
      %v1009 = vpack.c.b16 %v755, %v754
      %v1010 = vpack.c.b16 %v757, %v756
      %v1011 = vpack.c.b16 %v759, %v758
      %v1012 = vpack.c.b16 %v761, %v760
      %v1013 = vpack.c.b16 %v763, %v762
      %v1014 = vpack.c.b16 %v765, %v764
      %v1015 = vpack.c.b16 %v767, %v766
      %v1016 = vpack.c.b16 %v769, %v768
      %v1017 = vpack.c.b16 %v771, %v770
      %v1018 = vpack.c.b16 %v773, %v772
      %v1019 = vpack.c.b16 %v775, %v774
      %v1020 = vpack.c.b16 %v777, %v776
      %v1021 = vpack.c.b16 %v779, %v778
      %v1022 = vpack.c.b16 %v781, %v780
      %v1023 = vpack.c.b16 %v783, %v782
      %v1024 = vpack.c.b16 %v785, %v784
      %v1025 = vpack.c.b16 %v787, %v786
      %v1026 = vpack.c.b16 %v789, %v788
      %v1027 = vpack.c.b16 %v791, %v790
      %v1028 = vpack.c.b16 %v793, %v792
      %v1029 = vpack.c.b16 %v795, %v794
      %v1030 = vpack.c.b16 %v797, %v796
      %v1031 = vpack.c.b16 %v799, %v798
      %v1032 = vpack.c.b16 %v801, %v800
      %v1033 = vpack.c.b16 %v803, %v802
      %v1034 = vpack.c.b16 %v805, %v804
      %v1035 = vpack.c.b16 %v807, %v806
      %v1036 = vpack.c.b16 %v809, %v808
      %v1037 = vpack.c.b16 %v811, %v810
      %v1038 = vpack.c.b16 %v813, %v812
      %v1039 = vpack.c.b16 %v815, %v814
      %v1040 = vpack.c.b16 %v817, %v816
      %v1041 = vpack.c.b16 %v819, %v818
      %v1042 = vpack.c.b16 %v821, %v820
      %v1043 = vpack.c.b16 %v823, %v822
      %v1044 = vpack.c.b16 %v825, %v824
      %v1045 = vpack.c.b16 %v827, %v826
      %v1046 = vpack.c.b16 %v829, %v828
      %v1047 = vpack.c.b16 %v831, %v830
      %v1048 = vpack.c.b16 %v833, %v832
      %v1049 = vpack.c.b16 %v835, %v834
      %v1050 = vpack.c.b16 %v837, %v836
      %v1051 = vpack.c.b16 %v839, %v838
      %v1052 = vpack.c.b16 %v841, %v840
      %v1053 = vpack.c.b16 %v843, %v842
      %v1054 = vpack.c.b16 %v845, %v844
      %v1055 = vpack.c.b16 %v847, %v846
      %v1056 = vpack.c.b16 %v849, %v848
      %v1057 = vpack.c.b16 %v851, %v850
      %v1058 = vpack.c.b16 %v853, %v852
      %v1059 = vpack.c.b16 %v855, %v854
      %v1060 = vpack.c.b16 %v857, %v856
      %v1061 = vpack.c.b16 %v859, %v858
      %v1062 = vpack.c.b16 %v861, %v860
      %v1063 = vpack.c.b16 %v863, %v862
      %v1064 = vpack.c.b16 %v865, %v864
      %v1065 = vpack.c.b16 %v867, %v866
      %v1066 = vpack.c.b16 %v869, %v868
      %v1067 = vpack.c.b16 %v871, %v870
      %v1068 = vpack.c.b16 %v873, %v872
      %v1069 = vpack.c.b16 %v875, %v874
      %v1070 = vpack.c.b16 %v877, %v876
      %v1071 = vpack.c.b16 %v879, %v878
      %v1072 = vpack.c.b16 %v881, %v880
      %v1073 = vpack.c.b16 %v883, %v882
      %v1074 = vpack.c.b16 %v885, %v884
      %v1075 = vpack.c.b16 %v887, %v886
      %v1076 = vpack.c.b16 %v889, %v888
      %v1077 = vpack.c.b16 %v891, %v890
      %v1078 = vpack.c.b16 %v893, %v892
      %v1079 = vpack.c.b16 %v895, %v894
      %v1080 = vpack.c.b16 %v897, %v896
      %v1081 = vpack.c.b16 %v899, %v898
      %v1082 = vpack.c.b16 %v901, %v900
      %v1083 = vpack.c.b16 %v903, %v902
      %v1084 = vpack.c.b16 %v905, %v904
      %v1085 = vpack.c.b16 %v907, %v906
      %v1086 = vpack.c.b16 %v909, %v908
      %v1087 = vpack.c.b16 %v911, %v910
      %v1088 = vpack.c.b16 %v913, %v912
      %v1089 = vpack.c.b16 %v915, %v914
      %v1090 = vpack.c.b16 %v917, %v916
      %v1091 = vpack.c.b16 %v919, %v918
      %v1092 = vpack.c.b16 %v921, %v920
      %v1093 = vpack.c.b16 %v923, %v922
      %v1094 = vpack.c.b16 %v925, %v924
      %v1095 = vpack.c.b16 %v927, %v926
      %v1096 = vpack.c.b16 %v929, %v928
      %v1097 = vpack.c.b16 %v931, %v930
      %v1098 = vpack.c.b16 %v933, %v932
      %v1099 = vpack.c.b16 %v935, %v934
      %v1100 = vpack.c.b16 %v937, %v936
      %v1101 = vpack.c.b16 %v939, %v938
      %v1102 = vpack.c.b16 %v941, %v940
      %v1103 = vpack.c.b16 %v943, %v942
      %v1104 = vpack.c.b16 %v945, %v944
      %v1105 = vpack.c.b16 %v947, %v946
      %v1106 = vpack.c.b16 %v949, %v948
      %v1107 = vpack.c.b16 %v951, %v950
      %v1108 = vpack.c.b16 %v953, %v952
      %v1109 = vpack.c.b16 %v955, %v954
      %v1110 = vpack.c.b16 %v957, %v956
      %v1111 = vpack.c.b16 %v959, %v958
      %v1112 = vpack.c.b16 %v961, %v960
      %v1113 = vpack.c.b16 %v963, %v962
      %v1114 = vpack.c.b16 %v965, %v964
      %v1115 = vpack.c.b16 %v967, %v966
      %v1116 = vpack.c.b16 %v969, %v968
      %v1117 = vpack.c.b16 %v971, %v970
      %v1118 = vpack.c.b16 %v973, %v972
      %v1119 = vpack.c.b16 %v975, %v974
      %v1120 = vpack.c.b16 %v977, %v976
      %v1121 = vpack.c.b16 %v979, %v978
      %v1122 = vpack.c.b16 %v981, %v980
      %v1123 = vpack.c.b16 %v983, %v982
      %v1124 = vpack.c.b16 %v985, %v984
      %v1125 = vpack.c.b16 %v987, %v986
      %v1126 = vpack.c.b16 %v989, %v988
      %v1127 = vpack.c.b16 %v991, %v990
      %v1128 = vpack.c.b16 %v993, %v992
      %v1129 = vpack.c.b16 %v995, %v994
      %v1130 = vpack.c.b16 %v997, %v996
      %v1131 = vpack.c.b16 %v999, %v998
      %v1132 = vpack.c.b16 %v1001, %v1000
      %v1133 = vpack.c.b16 %v1003, %v1002
      %v1134 = vpack.c.b16 %v1005, %v1004
      %v1135 = vpack.c.b16 %v1007, %v1006
      %v1280 = vunpack.c.l.b16 %v480
      %v1281 = vunpack.c.l.b16 %v481
      %v1282 = vunpack.c.l.b16 %v482
      %v1283 = vunpack.c.l.b16 %v483
      %v1284 = vunpack.c.l.b16 %v484
      %v1285 = vunpack.c.l.b16 %v485
      %v1286 = vunpack.c.l.b16 %v486
      %v1287 = vunpack.c.l.b16 %v487
      %v1288 = vunpack.c.l.b16 %v488
      %v1289 = vunpack.c.l.b16 %v489
      %v1290 = vunpack.c.l.b16 %v490
      %v1291 = vunpack.c.l.b16 %v491
      %v1292 = vunpack.c.l.b16 %v492
      %v1293 = vunpack.c.l.b16 %v493
      %v1294 = vunpack.c.l.b16 %v494
      %v1295 = vunpack.c.l.b16 %v495
      %v1296 = vpack.c.b16 %v1281, %v1280
      %v1297 = vpack.c.b16 %v1283, %v1282
      %v1298 = vpack.c.b16 %v1285, %v1284
      %v1299 = vpack.c.b16 %v1287, %v1286
      %v1300 = vpack.c.b16 %v1289, %v1288
      %v1301 = vpack.c.b16 %v1291, %v1290
      %v1302 = vpack.c.b16 %v1293, %v1292
      %v1303 = vpack.c.b16 %v1295, %v1294
      %1312 = vmatprep.subr.bf16.mxu0 0
      %1313 = vmatpush1.bf16.msra.mxu0 %v1296
      %1314 = vmatprep.subr.bf16.mxu0 0
      %1315 = vmatpush1.bf16.msra.mxu0 %v1297
      %1316 = vmatprep.subr.bf16.mxu0 0
      %1317 = vmatpush1.bf16.msra.mxu0 %v1298
      %1318 = vmatprep.subr.bf16.mxu0 0
      %1319 = vmatpush1.bf16.msra.mxu0 %v1299
      %1320 = vmatprep.subr.bf16.mxu0 0
      %1321 = vmatpush1.bf16.msra.mxu0 %v1300
      %1322 = vmatprep.subr.bf16.mxu0 0
      %1323 = vmatpush1.bf16.msra.mxu0 %v1301
      %1324 = vmatprep.subr.bf16.mxu0 0
      %1325 = vmatpush1.bf16.msra.mxu0 %v1302
      %1326 = vmatprep.subr.bf16.mxu0 0
      %1327 = vmatpush1.bf16.msra.mxu0 %v1303
      %1328 = vmatprep.subr.bf16.mxu0 0
      %1329 = vmatpush1.bf16.msra.mxu0 0
      %1330 = vmatprep.subr.bf16.mxu0 0
      %1331 = vmatpush1.bf16.msra.mxu0 0
      %1332 = vmatprep.subr.bf16.mxu0 0
      %1333 = vmatpush1.bf16.msra.mxu0 0
      %1334 = vmatprep.subr.bf16.mxu0 0
      %1335 = vmatpush1.bf16.msra.mxu0 0
      %1336 = vmatprep.subr.bf16.mxu0 0
      %1337 = vmatpush1.bf16.msra.mxu0 0
      %1338 = vmatprep.subr.bf16.mxu0 0
      %1339 = vmatpush1.bf16.msra.mxu0 0
      %1340 = vmatprep.subr.bf16.mxu0 0
      %1341 = vmatpush1.bf16.msra.mxu0 0
      %1342 = vmatprep.subr.bf16.mxu0 0
      %1343 = vmatpush1.bf16.msra.mxu0 0
      %1344 = vmatprep.mubr.bf16.mxu0 0
      %1345 = vmatmul.mubr.bf16.gmra.mrb[0].mxu0 %v1008
      %v1346 = vpop.f32.mrb[0].mxu0
      %v1347 = vadd.f32 0.0, %v1346
      %v1348 = vpop.f32.mrb[0].mxu0
      %v1349 = vpop.f32.mrb[0].mxu0
      %v1350 = vadd.f32 0.0, %v1349
      %v1351 = vpop.f32.mrb[0].mxu0
      %1352 = vmatprep.mubr.bf16.mxu0 0
      %1353 = vmatmul.mubr.bf16.gmra.mrb[0].mxu0 %v1009
      %v1354 = vpop.f32.mrb[0].mxu0
      %v1355 = vadd.f32 0.0, %v1354
      %v1356 = vpop.f32.mrb[0].mxu0
      %v1357 = vpop.f32.mrb[0].mxu0
      %v1358 = vadd.f32 0.0, %v1357
      %v1359 = vpop.f32.mrb[0].mxu0
      %1360 = vmatprep.mubr.bf16.mxu0 0
      %1361 = vmatmul.mubr.bf16.gmra.mrb[0].mxu0 %v1010
      %v1362 = vpop.f32.mrb[0].mxu0
      %v1363 = vadd.f32 0.0, %v1362
      %v1364 = vpop.f32.mrb[0].mxu0
      %v1365 = vpop.f32.mrb[0].mxu0
      %v1366 = vadd.f32 0.0, %v1365
      %v1367 = vpop.f32.mrb[0].mxu0
      %1368 = vmatprep.mubr.bf16.mxu0 0
      %1369 = vmatmul.mubr.bf16.gmra.mrb[0].mxu0 %v1011
      %v1370 = vpop.f32.mrb[0].mxu0
      %v1371 = vadd.f32 0.0, %v1370
      %v1372 = vpop.f32.mrb[0].mxu0
      %v1373 = vpop.f32.mrb[0].mxu0
      %v1374 = vadd.f32 0.0, %v1373
      %v1375 = vpop.f32.mrb[0].mxu0
      %1376 = vmatprep.mubr.bf16.mxu0 0
      %1377 = vmatmul.mubr.bf16.gmra.mrb[0].mxu0 %v1012
      %v1378 = vpop.f32.mrb[0].mxu0
      %v1379 = vadd.f32 0.0, %v1378
      %v1380 = vpop.f32.mrb[0].mxu0
      %v1381 = vpop.f32.mrb[0].mxu0
      %v1382 = vadd.f32 0.0, %v1381
      %v1383 = vpop.f32.mrb[0].mxu0
      %1384 = vmatprep.mubr.bf16.mxu0 0
      %1385 = vmatmul.mubr.bf16.gmra.mrb[0].mxu0 %v1013
      %v1386 = vpop.f32.mrb[0].mxu0
      %v1387 = vadd.f32 0.0, %v1386
      %v1388 = vpop.f32.mrb[0].mxu0
      %v1389 = vpop.f32.mrb[0].mxu0
      %v1390 = vadd.f32 0.0, %v1389
      %v1391 = vpop.f32.mrb[0].mxu0
      %1392 = vmatprep.mubr.bf16.mxu0 0
      %1393 = vmatmul.mubr.bf16.gmra.mrb[0].mxu0 %v1014
      %v1394 = vpop.f32.mrb[0].mxu0
      %v1395 = vadd.f32 0.0, %v1394
      %v1396 = vpop.f32.mrb[0].mxu0
      %v1397 = vpop.f32.mrb[0].mxu0
      %v1398 = vadd.f32 0.0, %v1397
      %v1399 = vpop.f32.mrb[0].mxu0
      %1400 = vmatprep.mubr.bf16.mxu0 0
      %1401 = vmatmul.mubr.bf16.gmra.mrb[0].mxu0 %v1015
      %v1402 = vpop.f32.mrb[0].mxu0
      %v1403 = vadd.f32 0.0, %v1402
      %v1404 = vpop.f32.mrb[0].mxu0
      %v1405 = vpop.f32.mrb[0].mxu0
      %v1406 = vadd.f32 0.0, %v1405
      %v1407 = vpop.f32.mrb[0].mxu0
      %1408 = vmatprep.mubr.bf16.mxu0 0
      %1409 = vmatmul.mubr.bf16.gmra.mrb[0].mxu0 %v1016
      %v1410 = vpop.f32.mrb[0].mxu0
      %v1411 = vadd.f32 0.0, %v1410
      %v1412 = vpop.f32.mrb[0].mxu0
      %v1413 = vpop.f32.mrb[0].mxu0
      %v1414 = vadd.f32 0.0, %v1413
      %v1415 = vpop.f32.mrb[0].mxu0
      %1416 = vmatprep.mubr.bf16.mxu0 0
      %1417 = vmatmul.mubr.bf16.gmra.mrb[0].mxu0 %v1017
      %v1418 = vpop.f32.mrb[0].mxu0
      %v1419 = vadd.f32 0.0, %v1418
      %v1420 = vpop.f32.mrb[0].mxu0
      %v1421 = vpop.f32.mrb[0].mxu0
      %v1422 = vadd.f32 0.0, %v1421
      %v1423 = vpop.f32.mrb[0].mxu0
      %1424 = vmatprep.mubr.bf16.mxu0 0
      %1425 = vmatmul.mubr.bf16.gmra.mrb[0].mxu0 %v1018
      %v1426 = vpop.f32.mrb[0].mxu0
      %v1427 = vadd.f32 0.0, %v1426
      %v1428 = vpop.f32.mrb[0].mxu0
      %v1429 = vpop.f32.mrb[0].mxu0
      %v1430 = vadd.f32 0.0, %v1429
      %v1431 = vpop.f32.mrb[0].mxu0
      %1432 = vmatprep.mubr.bf16.mxu0 0
      %1433 = vmatmul.mubr.bf16.gmra.mrb[0].mxu0 %v1019
      %v1434 = vpop.f32.mrb[0].mxu0
      %v1435 = vadd.f32 0.0, %v1434
      %v1436 = vpop.f32.mrb[0].mxu0
      %v1437 = vpop.f32.mrb[0].mxu0
      %v1438 = vadd.f32 0.0, %v1437
      %v1439 = vpop.f32.mrb[0].mxu0
      %1440 = vmatprep.mubr.bf16.mxu0 0
      %1441 = vmatmul.mubr.bf16.gmra.mrb[0].mxu0 %v1020
      %v1442 = vpop.f32.mrb[0].mxu0
      %v1443 = vadd.f32 0.0, %v1442
      %v1444 = vpop.f32.mrb[0].mxu0
      %v1445 = vpop.f32.mrb[0].mxu0
      %v1446 = vadd.f32 0.0, %v1445
      %v1447 = vpop.f32.mrb[0].mxu0
      %1448 = vmatprep.mubr.bf16.mxu0 0
      %1449 = vmatmul.mubr.bf16.gmra.mrb[0].mxu0 %v1021
      %v1450 = vpop.f32.mrb[0].mxu0
      %v1451 = vadd.f32 0.0, %v1450
      %v1452 = vpop.f32.mrb[0].mxu0
      %v1453 = vpop.f32.mrb[0].mxu0
      %v1454 = vadd.f32 0.0, %v1453
      %v1455 = vpop.f32.mrb[0].mxu0
      %1456 = vmatprep.mubr.bf16.mxu0 0
      %1457 = vmatmul.mubr.bf16.gmra.mrb[0].mxu0 %v1022
      %v1458 = vpop.f32.mrb[0].mxu0
      %v1459 = vadd.f32 0.0, %v1458
      %v1460 = vpop.f32.mrb[0].mxu0
      %v1461 = vpop.f32.mrb[0].mxu0
      %v1462 = vadd.f32 0.0, %v1461
      %v1463 = vpop.f32.mrb[0].mxu0
      %1464 = vmatprep.mubr.bf16.mxu0 0
      %1465 = vmatmul.mubr.bf16.gmra.mrb[0].mxu0 %v1023
      %v1466 = vpop.f32.mrb[0].mxu0
      %v1467 = vadd.f32 0.0, %v1466
      %v1468 = vpop.f32.mrb[0].mxu0
      %v1469 = vpop.f32.mrb[0].mxu0
      %v1470 = vadd.f32 0.0, %v1469
      %v1471 = vpop.f32.mrb[0].mxu0
      %1472 = vmatprep.mubr.bf16.mxu0 0
      %1473 = vmatmul.mubr.bf16.gmra.mrb[0].mxu0 %v1024
      %v1474 = vpop.f32.mrb[0].mxu0
      %v1475 = vadd.f32 0.0, %v1474
      %v1476 = vpop.f32.mrb[0].mxu0
      %v1477 = vpop.f32.mrb[0].mxu0
      %v1478 = vadd.f32 0.0, %v1477
      %v1479 = vpop.f32.mrb[0].mxu0
      %1480 = vmatprep.mubr.bf16.mxu0 0
      %1481 = vmatmul.mubr.bf16.gmra.mrb[0].mxu0 %v1025
      %v1482 = vpop.f32.mrb[0].mxu0
      %v1483 = vadd.f32 0.0, %v1482
      %v1484 = vpop.f32.mrb[0].mxu0
      %v1485 = vpop.f32.mrb[0].mxu0
      %v1486 = vadd.f32 0.0, %v1485
      %v1487 = vpop.f32.mrb[0].mxu0
      %1488 = vmatprep.mubr.bf16.mxu0 0
      %1489 = vmatmul.mubr.bf16.gmra.mrb[0].mxu0 %v1026
      %v1490 = vpop.f32.mrb[0].mxu0
      %v1491 = vadd.f32 0.0, %v1490
      %v1492 = vpop.f32.mrb[0].mxu0
      %v1493 = vpop.f32.mrb[0].mxu0
      %v1494 = vadd.f32 0.0, %v1493
      %v1495 = vpop.f32.mrb[0].mxu0
      %1496 = vmatprep.mubr.bf16.mxu0 0
      %1497 = vmatmul.mubr.bf16.gmra.mrb[0].mxu0 %v1027
      %v1498 = vpop.f32.mrb[0].mxu0
      %v1499 = vadd.f32 0.0, %v1498
      %v1500 = vpop.f32.mrb[0].mxu0
      %v1501 = vpop.f32.mrb[0].mxu0
      %v1502 = vadd.f32 0.0, %v1501
      %v1503 = vpop.f32.mrb[0].mxu0
      %1504 = vmatprep.mubr.bf16.mxu0 0
      %1505 = vmatmul.mubr.bf16.gmra.mrb[0].mxu0 %v1028
      %v1506 = vpop.f32.mrb[0].mxu0
      %v1507 = vadd.f32 0.0, %v1506
      %v1508 = vpop.f32.mrb[0].mxu0
      %v1509 = vpop.f32.mrb[0].mxu0
      %v1510 = vadd.f32 0.0, %v1509
      %v1511 = vpop.f32.mrb[0].mxu0
      %1512 = vmatprep.mubr.bf16.mxu0 0
      %1513 = vmatmul.mubr.bf16.gmra.mrb[0].mxu0 %v1029
      %v1514 = vpop.f32.mrb[0].mxu0
      %v1515 = vadd.f32 0.0, %v1514
      %v1516 = vpop.f32.mrb[0].mxu0
      %v1517 = vpop.f32.mrb[0].mxu0
      %v1518 = vadd.f32 0.0, %v1517
      %v1519 = vpop.f32.mrb[0].mxu0
      %1520 = vmatprep.mubr.bf16.mxu0 0
      %1521 = vmatmul.mubr.bf16.gmra.mrb[0].mxu0 %v1030
      %v1522 = vpop.f32.mrb[0].mxu0
      %v1523 = vadd.f32 0.0, %v1522
      %v1524 = vpop.f32.mrb[0].mxu0
      %v1525 = vpop.f32.mrb[0].mxu0
      %v1526 = vadd.f32 0.0, %v1525
      %v1527 = vpop.f32.mrb[0].mxu0
      %1528 = vmatprep.mubr.bf16.mxu0 0
      %1529 = vmatmul.mubr.bf16.gmra.mrb[0].mxu0 %v1031
      %v1530 = vpop.f32.mrb[0].mxu0
      %v1531 = vadd.f32 0.0, %v1530
      %v1532 = vpop.f32.mrb[0].mxu0
      %v1533 = vpop.f32.mrb[0].mxu0
      %v1534 = vadd.f32 0.0, %v1533
      %v1535 = vpop.f32.mrb[0].mxu0
      %1536 = vmatprep.mubr.bf16.mxu0 0
      %1537 = vmatmul.mubr.bf16.gmra.mrb[0].mxu0 %v1032
      %v1538 = vpop.f32.mrb[0].mxu0
      %v1539 = vadd.f32 0.0, %v1538
      %v1540 = vpop.f32.mrb[0].mxu0
      %v1541 = vpop.f32.mrb[0].mxu0
      %v1542 = vadd.f32 0.0, %v1541
      %v1543 = vpop.f32.mrb[0].mxu0
      %1544 = vmatprep.mubr.bf16.mxu0 0
      %1545 = vmatmul.mubr.bf16.gmra.mrb[0].mxu0 %v1033
      %v1546 = vpop.f32.mrb[0].mxu0
      %v1547 = vadd.f32 0.0, %v1546
      %v1548 = vpop.f32.mrb[0].mxu0
      %v1549 = vpop.f32.mrb[0].mxu0
      %v1550 = vadd.f32 0.0, %v1549
      %v1551 = vpop.f32.mrb[0].mxu0
      %1552 = vmatprep.mubr.bf16.mxu0 0
      %1553 = vmatmul.mubr.bf16.gmra.mrb[0].mxu0 %v1034
      %v1554 = vpop.f32.mrb[0].mxu0
      %v1555 = vadd.f32 0.0, %v1554
      %v1556 = vpop.f32.mrb[0].mxu0
      %v1557 = vpop.f32.mrb[0].mxu0
      %v1558 = vadd.f32 0.0, %v1557
      %v1559 = vpop.f32.mrb[0].mxu0
      %1560 = vmatprep.mubr.bf16.mxu0 0
      %1561 = vmatmul.mubr.bf16.gmra.mrb[0].mxu0 %v1035
      %v1562 = vpop.f32.mrb[0].mxu0
      %v1563 = vadd.f32 0.0, %v1562
      %v1564 = vpop.f32.mrb[0].mxu0
      %v1565 = vpop.f32.mrb[0].mxu0
      %v1566 = vadd.f32 0.0, %v1565
      %v1567 = vpop.f32.mrb[0].mxu0
      %1568 = vmatprep.mubr.bf16.mxu0 0
      %1569 = vmatmul.mubr.bf16.gmra.mrb[0].mxu0 %v1036
      %v1570 = vpop.f32.mrb[0].mxu0
      %v1571 = vadd.f32 0.0, %v1570
      %v1572 = vpop.f32.mrb[0].mxu0
      %v1573 = vpop.f32.mrb[0].mxu0
      %v1574 = vadd.f32 0.0, %v1573
      %v1575 = vpop.f32.mrb[0].mxu0
      %1576 = vmatprep.mubr.bf16.mxu0 0
      %1577 = vmatmul.mubr.bf16.gmra.mrb[0].mxu0 %v1037
      %v1578 = vpop.f32.mrb[0].mxu0
      %v1579 = vadd.f32 0.0, %v1578
      %v1580 = vpop.f32.mrb[0].mxu0
      %v1581 = vpop.f32.mrb[0].mxu0
      %v1582 = vadd.f32 0.0, %v1581
      %v1583 = vpop.f32.mrb[0].mxu0
      %1584 = vmatprep.mubr.bf16.mxu0 0
      %1585 = vmatmul.mubr.bf16.gmra.mrb[0].mxu0 %v1038
      %v1586 = vpop.f32.mrb[0].mxu0
      %v1587 = vadd.f32 0.0, %v1586
      %v1588 = vpop.f32.mrb[0].mxu0
      %v1589 = vpop.f32.mrb[0].mxu0
      %v1590 = vadd.f32 0.0, %v1589
      %v1591 = vpop.f32.mrb[0].mxu0
      %1592 = vmatprep.mubr.bf16.mxu0 0
      %1593 = vmatmul.mubr.bf16.gmra.mrb[0].mxu0 %v1039
      %v1594 = vpop.f32.mrb[0].mxu0
      %v1595 = vadd.f32 0.0, %v1594
      %v1596 = vpop.f32.mrb[0].mxu0
      %v1597 = vpop.f32.mrb[0].mxu0
      %v1598 = vadd.f32 0.0, %v1597
      %v1599 = vpop.f32.mrb[0].mxu0
      %1600 = vmatprep.mubr.bf16.mxu0 0
      %1601 = vmatmul.mubr.bf16.gmra.mrb[0].mxu0 %v1040
      %v1602 = vpop.f32.mrb[0].mxu0
      %v1603 = vadd.f32 0.0, %v1602
      %v1604 = vpop.f32.mrb[0].mxu0
      %v1605 = vpop.f32.mrb[0].mxu0
      %v1606 = vadd.f32 0.0, %v1605
      %v1607 = vpop.f32.mrb[0].mxu0
      %1608 = vmatprep.mubr.bf16.mxu0 0
      %1609 = vmatmul.mubr.bf16.gmra.mrb[0].mxu0 %v1041
      %v1610 = vpop.f32.mrb[0].mxu0
      %v1611 = vadd.f32 0.0, %v1610
      %v1612 = vpop.f32.mrb[0].mxu0
      %v1613 = vpop.f32.mrb[0].mxu0
      %v1614 = vadd.f32 0.0, %v1613
      %v1615 = vpop.f32.mrb[0].mxu0
      %1616 = vmatprep.mubr.bf16.mxu0 0
      %1617 = vmatmul.mubr.bf16.gmra.mrb[0].mxu0 %v1042
      %v1618 = vpop.f32.mrb[0].mxu0
      %v1619 = vadd.f32 0.0, %v1618
      %v1620 = vpop.f32.mrb[0].mxu0
      %v1621 = vpop.f32.mrb[0].mxu0
      %v1622 = vadd.f32 0.0, %v1621
      %v1623 = vpop.f32.mrb[0].mxu0
      %1624 = vmatprep.mubr.bf16.mxu0 0
      %1625 = vmatmul.mubr.bf16.gmra.mrb[0].mxu0 %v1043
      %v1626 = vpop.f32.mrb[0].mxu0
      %v1627 = vadd.f32 0.0, %v1626
      %v1628 = vpop.f32.mrb[0].mxu0
      %v1629 = vpop.f32.mrb[0].mxu0
      %v1630 = vadd.f32 0.0, %v1629
      %v1631 = vpop.f32.mrb[0].mxu0
      %1632 = vmatprep.mubr.bf16.mxu0 0
      %1633 = vmatmul.mubr.bf16.gmra.mrb[0].mxu0 %v1044
      %v1634 = vpop.f32.mrb[0].mxu0
      %v1635 = vadd.f32 0.0, %v1634
      %v1636 = vpop.f32.mrb[0].mxu0
      %v1637 = vpop.f32.mrb[0].mxu0
      %v1638 = vadd.f32 0.0, %v1637
      %v1639 = vpop.f32.mrb[0].mxu0
      %1640 = vmatprep.mubr.bf16.mxu0 0
      %1641 = vmatmul.mubr.bf16.gmra.mrb[0].mxu0 %v1045
      %v1642 = vpop.f32.mrb[0].mxu0
      %v1643 = vadd.f32 0.0, %v1642
      %v1644 = vpop.f32.mrb[0].mxu0
      %v1645 = vpop.f32.mrb[0].mxu0
      %v1646 = vadd.f32 0.0, %v1645
      %v1647 = vpop.f32.mrb[0].mxu0
      %1648 = vmatprep.mubr.bf16.mxu0 0
      %1649 = vmatmul.mubr.bf16.gmra.mrb[0].mxu0 %v1046
      %v1650 = vpop.f32.mrb[0].mxu0
      %v1651 = vadd.f32 0.0, %v1650
      %v1652 = vpop.f32.mrb[0].mxu0
      %v1653 = vpop.f32.mrb[0].mxu0
      %v1654 = vadd.f32 0.0, %v1653
      %v1655 = vpop.f32.mrb[0].mxu0
      %1656 = vmatprep.mubr.bf16.mxu0 0
      %1657 = vmatmul.mubr.bf16.gmra.mrb[0].mxu0 %v1047
      %v1658 = vpop.f32.mrb[0].mxu0
      %v1659 = vadd.f32 0.0, %v1658
      %v1660 = vpop.f32.mrb[0].mxu0
      %v1661 = vpop.f32.mrb[0].mxu0
      %v1662 = vadd.f32 0.0, %v1661
      %v1663 = vpop.f32.mrb[0].mxu0
      %1664 = vmatprep.mubr.bf16.mxu0 0
      %1665 = vmatmul.mubr.bf16.gmra.mrb[0].mxu0 %v1048
      %v1666 = vpop.f32.mrb[0].mxu0
      %v1667 = vadd.f32 0.0, %v1666
      %v1668 = vpop.f32.mrb[0].mxu0
      %v1669 = vpop.f32.mrb[0].mxu0
      %v1670 = vadd.f32 0.0, %v1669
      %v1671 = vpop.f32.mrb[0].mxu0
      %1672 = vmatprep.mubr.bf16.mxu0 0
      %1673 = vmatmul.mubr.bf16.gmra.mrb[0].mxu0 %v1049
      %v1674 = vpop.f32.mrb[0].mxu0
      %v1675 = vadd.f32 0.0, %v1674
      %v1676 = vpop.f32.mrb[0].mxu0
      %v1677 = vpop.f32.mrb[0].mxu0
      %v1678 = vadd.f32 0.0, %v1677
      %v1679 = vpop.f32.mrb[0].mxu0
      %1680 = vmatprep.mubr.bf16.mxu0 0
      %1681 = vmatmul.mubr.bf16.gmra.mrb[0].mxu0 %v1050
      %v1682 = vpop.f32.mrb[0].mxu0
      %v1683 = vadd.f32 0.0, %v1682
      %v1684 = vpop.f32.mrb[0].mxu0
      %v1685 = vpop.f32.mrb[0].mxu0
      %v1686 = vadd.f32 0.0, %v1685
      %v1687 = vpop.f32.mrb[0].mxu0
      %1688 = vmatprep.mubr.bf16.mxu0 0
      %1689 = vmatmul.mubr.bf16.gmra.mrb[0].mxu0 %v1051
      %v1690 = vpop.f32.mrb[0].mxu0
      %v1691 = vadd.f32 0.0, %v1690
      %v1692 = vpop.f32.mrb[0].mxu0
      %v1693 = vpop.f32.mrb[0].mxu0
      %v1694 = vadd.f32 0.0, %v1693
      %v1695 = vpop.f32.mrb[0].mxu0
      %1696 = vmatprep.mubr.bf16.mxu0 0
      %1697 = vmatmul.mubr.bf16.gmra.mrb[0].mxu0 %v1052
      %v1698 = vpop.f32.mrb[0].mxu0
      %v1699 = vadd.f32 0.0, %v1698
      %v1700 = vpop.f32.mrb[0].mxu0
      %v1701 = vpop.f32.mrb[0].mxu0
      %v1702 = vadd.f32 0.0, %v1701
      %v1703 = vpop.f32.mrb[0].mxu0
      %1704 = vmatprep.mubr.bf16.mxu0 0
      %1705 = vmatmul.mubr.bf16.gmra.mrb[0].mxu0 %v1053
      %v1706 = vpop.f32.mrb[0].mxu0
      %v1707 = vadd.f32 0.0, %v1706
      %v1708 = vpop.f32.mrb[0].mxu0
      %v1709 = vpop.f32.mrb[0].mxu0
      %v1710 = vadd.f32 0.0, %v1709
      %v1711 = vpop.f32.mrb[0].mxu0
      %1712 = vmatprep.mubr.bf16.mxu0 0
      %1713 = vmatmul.mubr.bf16.gmra.mrb[0].mxu0 %v1054
      %v1714 = vpop.f32.mrb[0].mxu0
      %v1715 = vadd.f32 0.0, %v1714
      %v1716 = vpop.f32.mrb[0].mxu0
      %v1717 = vpop.f32.mrb[0].mxu0
      %v1718 = vadd.f32 0.0, %v1717
      %v1719 = vpop.f32.mrb[0].mxu0
      %1720 = vmatprep.mubr.bf16.mxu0 0
      %1721 = vmatmul.mubr.bf16.gmra.mrb[0].mxu0 %v1055
      %v1722 = vpop.f32.mrb[0].mxu0
      %v1723 = vadd.f32 0.0, %v1722
      %v1724 = vpop.f32.mrb[0].mxu0
      %v1725 = vpop.f32.mrb[0].mxu0
      %v1726 = vadd.f32 0.0, %v1725
      %v1727 = vpop.f32.mrb[0].mxu0
      %1728 = vmatprep.mubr.bf16.mxu0 0
      %1729 = vmatmul.mubr.bf16.gmra.mrb[0].mxu0 %v1056
      %v1730 = vpop.f32.mrb[0].mxu0
      %v1731 = vadd.f32 0.0, %v1730
      %v1732 = vpop.f32.mrb[0].mxu0
      %v1733 = vpop.f32.mrb[0].mxu0
      %v1734 = vadd.f32 0.0, %v1733
      %v1735 = vpop.f32.mrb[0].mxu0
      %1736 = vmatprep.mubr.bf16.mxu0 0
      %1737 = vmatmul.mubr.bf16.gmra.mrb[0].mxu0 %v1057
      %v1738 = vpop.f32.mrb[0].mxu0
      %v1739 = vadd.f32 0.0, %v1738
      %v1740 = vpop.f32.mrb[0].mxu0
      %v1741 = vpop.f32.mrb[0].mxu0
      %v1742 = vadd.f32 0.0, %v1741
      %v1743 = vpop.f32.mrb[0].mxu0
      %1744 = vmatprep.mubr.bf16.mxu0 0
      %1745 = vmatmul.mubr.bf16.gmra.mrb[0].mxu0 %v1058
      %v1746 = vpop.f32.mrb[0].mxu0
      %v1747 = vadd.f32 0.0, %v1746
      %v1748 = vpop.f32.mrb[0].mxu0
      %v1749 = vpop.f32.mrb[0].mxu0
      %v1750 = vadd.f32 0.0, %v1749
      %v1751 = vpop.f32.mrb[0].mxu0
      %1752 = vmatprep.mubr.bf16.mxu0 0
      %1753 = vmatmul.mubr.bf16.gmra.mrb[0].mxu0 %v1059
      %v1754 = vpop.f32.mrb[0].mxu0
      %v1755 = vadd.f32 0.0, %v1754
      %v1756 = vpop.f32.mrb[0].mxu0
      %v1757 = vpop.f32.mrb[0].mxu0
      %v1758 = vadd.f32 0.0, %v1757
      %v1759 = vpop.f32.mrb[0].mxu0
      %1760 = vmatprep.mubr.bf16.mxu0 0
      %1761 = vmatmul.mubr.bf16.gmra.mrb[0].mxu0 %v1060
      %v1762 = vpop.f32.mrb[0].mxu0
      %v1763 = vadd.f32 0.0, %v1762
      %v1764 = vpop.f32.mrb[0].mxu0
      %v1765 = vpop.f32.mrb[0].mxu0
      %v1766 = vadd.f32 0.0, %v1765
      %v1767 = vpop.f32.mrb[0].mxu0
      %1768 = vmatprep.mubr.bf16.mxu0 0
      %1769 = vmatmul.mubr.bf16.gmra.mrb[0].mxu0 %v1061
      %v1770 = vpop.f32.mrb[0].mxu0
      %v1771 = vadd.f32 0.0, %v1770
      %v1772 = vpop.f32.mrb[0].mxu0
      %v1773 = vpop.f32.mrb[0].mxu0
      %v1774 = vadd.f32 0.0, %v1773
      %v1775 = vpop.f32.mrb[0].mxu0
      %1776 = vmatprep.mubr.bf16.mxu0 0
      %1777 = vmatmul.mubr.bf16.gmra.mrb[0].mxu0 %v1062
      %v1778 = vpop.f32.mrb[0].mxu0
      %v1779 = vadd.f32 0.0, %v1778
      %v1780 = vpop.f32.mrb[0].mxu0
      %v1781 = vpop.f32.mrb[0].mxu0
      %v1782 = vadd.f32 0.0, %v1781
      %v1783 = vpop.f32.mrb[0].mxu0
      %1784 = vmatprep.mubr.bf16.mxu0 0
      %1785 = vmatmul.mubr.bf16.gmra.mrb[0].mxu0 %v1063
      %v1786 = vpop.f32.mrb[0].mxu0
      %v1787 = vadd.f32 0.0, %v1786
      %v1788 = vpop.f32.mrb[0].mxu0
      %v1789 = vpop.f32.mrb[0].mxu0
      %v1790 = vadd.f32 0.0, %v1789
      %v1791 = vpop.f32.mrb[0].mxu0
      %1792 = vmatprep.mubr.bf16.mxu0 0
      %1793 = vmatmul.mubr.bf16.gmra.mrb[0].mxu0 %v1064
      %v1794 = vpop.f32.mrb[0].mxu0
      %v1795 = vadd.f32 0.0, %v1794
      %v1796 = vpop.f32.mrb[0].mxu0
      %v1797 = vpop.f32.mrb[0].mxu0
      %v1798 = vadd.f32 0.0, %v1797
      %v1799 = vpop.f32.mrb[0].mxu0
      %1800 = vmatprep.mubr.bf16.mxu0 0
      %1801 = vmatmul.mubr.bf16.gmra.mrb[0].mxu0 %v1065
      %v1802 = vpop.f32.mrb[0].mxu0
      %v1803 = vadd.f32 0.0, %v1802
      %v1804 = vpop.f32.mrb[0].mxu0
      %v1805 = vpop.f32.mrb[0].mxu0
      %v1806 = vadd.f32 0.0, %v1805
      %v1807 = vpop.f32.mrb[0].mxu0
      %1808 = vmatprep.mubr.bf16.mxu0 0
      %1809 = vmatmul.mubr.bf16.gmra.mrb[0].mxu0 %v1066
      %v1810 = vpop.f32.mrb[0].mxu0
      %v1811 = vadd.f32 0.0, %v1810
      %v1812 = vpop.f32.mrb[0].mxu0
      %v1813 = vpop.f32.mrb[0].mxu0
      %v1814 = vadd.f32 0.0, %v1813
      %v1815 = vpop.f32.mrb[0].mxu0
      %1816 = vmatprep.mubr.bf16.mxu0 0
      %1817 = vmatmul.mubr.bf16.gmra.mrb[0].mxu0 %v1067
      %v1818 = vpop.f32.mrb[0].mxu0
      %v1819 = vadd.f32 0.0, %v1818
      %v1820 = vpop.f32.mrb[0].mxu0
      %v1821 = vpop.f32.mrb[0].mxu0
      %v1822 = vadd.f32 0.0, %v1821
      %v1823 = vpop.f32.mrb[0].mxu0
      %1824 = vmatprep.mubr.bf16.mxu0 0
      %1825 = vmatmul.mubr.bf16.gmra.mrb[0].mxu0 %v1068
      %v1826 = vpop.f32.mrb[0].mxu0
      %v1827 = vadd.f32 0.0, %v1826
      %v1828 = vpop.f32.mrb[0].mxu0
      %v1829 = vpop.f32.mrb[0].mxu0
      %v1830 = vadd.f32 0.0, %v1829
      %v1831 = vpop.f32.mrb[0].mxu0
      %1832 = vmatprep.mubr.bf16.mxu0 0
      %1833 = vmatmul.mubr.bf16.gmra.mrb[0].mxu0 %v1069
      %v1834 = vpop.f32.mrb[0].mxu0
      %v1835 = vadd.f32 0.0, %v1834
      %v1836 = vpop.f32.mrb[0].mxu0
      %v1837 = vpop.f32.mrb[0].mxu0
      %v1838 = vadd.f32 0.0, %v1837
      %v1839 = vpop.f32.mrb[0].mxu0
      %1840 = vmatprep.mubr.bf16.mxu0 0
      %1841 = vmatmul.mubr.bf16.gmra.mrb[0].mxu0 %v1070
      %v1842 = vpop.f32.mrb[0].mxu0
      %v1843 = vadd.f32 0.0, %v1842
      %v1844 = vpop.f32.mrb[0].mxu0
      %v1845 = vpop.f32.mrb[0].mxu0
      %v1846 = vadd.f32 0.0, %v1845
      %v1847 = vpop.f32.mrb[0].mxu0
      %1848 = vmatprep.mubr.bf16.mxu0 0
      %1849 = vmatmul.mubr.bf16.gmra.mrb[0].mxu0 %v1071
      %v1850 = vpop.f32.mrb[0].mxu0
      %v1851 = vadd.f32 0.0, %v1850
      %v1852 = vpop.f32.mrb[0].mxu0
      %v1853 = vpop.f32.mrb[0].mxu0
      %v1854 = vadd.f32 0.0, %v1853
      %v1855 = vpop.f32.mrb[0].mxu0
      %1856 = vmatprep.mubr.bf16.mxu0 0
      %1857 = vmatmul.mubr.bf16.gmra.mrb[0].mxu0 %v1072
      %v1858 = vpop.f32.mrb[0].mxu0
      %v1859 = vadd.f32 0.0, %v1858
      %v1860 = vpop.f32.mrb[0].mxu0
      %v1861 = vpop.f32.mrb[0].mxu0
      %v1862 = vadd.f32 0.0, %v1861
      %v1863 = vpop.f32.mrb[0].mxu0
      %1864 = vmatprep.mubr.bf16.mxu0 0
      %1865 = vmatmul.mubr.bf16.gmra.mrb[0].mxu0 %v1073
      %v1866 = vpop.f32.mrb[0].mxu0
      %v1867 = vadd.f32 0.0, %v1866
      %v1868 = vpop.f32.mrb[0].mxu0
      %v1869 = vpop.f32.mrb[0].mxu0
      %v1870 = vadd.f32 0.0, %v1869
      %v1871 = vpop.f32.mrb[0].mxu0
      %1872 = vmatprep.mubr.bf16.mxu0 0
      %1873 = vmatmul.mubr.bf16.gmra.mrb[0].mxu0 %v1074
      %v1874 = vpop.f32.mrb[0].mxu0
      %v1875 = vadd.f32 0.0, %v1874
      %v1876 = vpop.f32.mrb[0].mxu0
      %v1877 = vpop.f32.mrb[0].mxu0
      %v1878 = vadd.f32 0.0, %v1877
      %v1879 = vpop.f32.mrb[0].mxu0
      %1880 = vmatprep.mubr.bf16.mxu0 0
      %1881 = vmatmul.mubr.bf16.gmra.mrb[0].mxu0 %v1075
      %v1882 = vpop.f32.mrb[0].mxu0
      %v1883 = vadd.f32 0.0, %v1882
      %v1884 = vpop.f32.mrb[0].mxu0
      %v1885 = vpop.f32.mrb[0].mxu0
      %v1886 = vadd.f32 0.0, %v1885
      %v1887 = vpop.f32.mrb[0].mxu0
      %1888 = vmatprep.mubr.bf16.mxu0 0
      %1889 = vmatmul.mubr.bf16.gmra.mrb[0].mxu0 %v1076
      %v1890 = vpop.f32.mrb[0].mxu0
      %v1891 = vadd.f32 0.0, %v1890
      %v1892 = vpop.f32.mrb[0].mxu0
      %v1893 = vpop.f32.mrb[0].mxu0
      %v1894 = vadd.f32 0.0, %v1893
      %v1895 = vpop.f32.mrb[0].mxu0
      %1896 = vmatprep.mubr.bf16.mxu0 0
      %1897 = vmatmul.mubr.bf16.gmra.mrb[0].mxu0 %v1077
      %v1898 = vpop.f32.mrb[0].mxu0
      %v1899 = vadd.f32 0.0, %v1898
      %v1900 = vpop.f32.mrb[0].mxu0
      %v1901 = vpop.f32.mrb[0].mxu0
      %v1902 = vadd.f32 0.0, %v1901
      %v1903 = vpop.f32.mrb[0].mxu0
      %1904 = vmatprep.mubr.bf16.mxu0 0
      %1905 = vmatmul.mubr.bf16.gmra.mrb[0].mxu0 %v1078
      %v1906 = vpop.f32.mrb[0].mxu0
      %v1907 = vadd.f32 0.0, %v1906
      %v1908 = vpop.f32.mrb[0].mxu0
      %v1909 = vpop.f32.mrb[0].mxu0
      %v1910 = vadd.f32 0.0, %v1909
      %v1911 = vpop.f32.mrb[0].mxu0
      %1912 = vmatprep.mubr.bf16.mxu0 0
      %1913 = vmatmul.mubr.bf16.gmra.mrb[0].mxu0 %v1079
      %v1914 = vpop.f32.mrb[0].mxu0
      %v1915 = vadd.f32 0.0, %v1914
      %v1916 = vpop.f32.mrb[0].mxu0
      %v1917 = vpop.f32.mrb[0].mxu0
      %v1918 = vadd.f32 0.0, %v1917
      %v1919 = vpop.f32.mrb[0].mxu0
      %1920 = vmatprep.mubr.bf16.mxu0 0
      %1921 = vmatmul.mubr.bf16.gmra.mrb[0].mxu0 %v1080
      %v1922 = vpop.f32.mrb[0].mxu0
      %v1923 = vadd.f32 0.0, %v1922
      %v1924 = vpop.f32.mrb[0].mxu0
      %v1925 = vpop.f32.mrb[0].mxu0
      %v1926 = vadd.f32 0.0, %v1925
      %v1927 = vpop.f32.mrb[0].mxu0
      %1928 = vmatprep.mubr.bf16.mxu0 0
      %1929 = vmatmul.mubr.bf16.gmra.mrb[0].mxu0 %v1081
      %v1930 = vpop.f32.mrb[0].mxu0
      %v1931 = vadd.f32 0.0, %v1930
      %v1932 = vpop.f32.mrb[0].mxu0
      %v1933 = vpop.f32.mrb[0].mxu0
      %v1934 = vadd.f32 0.0, %v1933
      %v1935 = vpop.f32.mrb[0].mxu0
      %1936 = vmatprep.mubr.bf16.mxu0 0
      %1937 = vmatmul.mubr.bf16.gmra.mrb[0].mxu0 %v1082
      %v1938 = vpop.f32.mrb[0].mxu0
      %v1939 = vadd.f32 0.0, %v1938
      %v1940 = vpop.f32.mrb[0].mxu0
      %v1941 = vpop.f32.mrb[0].mxu0
      %v1942 = vadd.f32 0.0, %v1941
      %v1943 = vpop.f32.mrb[0].mxu0
      %1944 = vmatprep.mubr.bf16.mxu0 0
      %1945 = vmatmul.mubr.bf16.gmra.mrb[0].mxu0 %v1083
      %v1946 = vpop.f32.mrb[0].mxu0
      %v1947 = vadd.f32 0.0, %v1946
      %v1948 = vpop.f32.mrb[0].mxu0
      %v1949 = vpop.f32.mrb[0].mxu0
      %v1950 = vadd.f32 0.0, %v1949
      %v1951 = vpop.f32.mrb[0].mxu0
      %1952 = vmatprep.mubr.bf16.mxu0 0
      %1953 = vmatmul.mubr.bf16.gmra.mrb[0].mxu0 %v1084
      %v1954 = vpop.f32.mrb[0].mxu0
      %v1955 = vadd.f32 0.0, %v1954
      %v1956 = vpop.f32.mrb[0].mxu0
      %v1957 = vpop.f32.mrb[0].mxu0
      %v1958 = vadd.f32 0.0, %v1957
      %v1959 = vpop.f32.mrb[0].mxu0
      %1960 = vmatprep.mubr.bf16.mxu0 0
      %1961 = vmatmul.mubr.bf16.gmra.mrb[0].mxu0 %v1085
      %v1962 = vpop.f32.mrb[0].mxu0
      %v1963 = vadd.f32 0.0, %v1962
      %v1964 = vpop.f32.mrb[0].mxu0
      %v1965 = vpop.f32.mrb[0].mxu0
      %v1966 = vadd.f32 0.0, %v1965
      %v1967 = vpop.f32.mrb[0].mxu0
      %1968 = vmatprep.mubr.bf16.mxu0 0
      %1969 = vmatmul.mubr.bf16.gmra.mrb[0].mxu0 %v1086
      %v1970 = vpop.f32.mrb[0].mxu0
      %v1971 = vadd.f32 0.0, %v1970
      %v1972 = vpop.f32.mrb[0].mxu0
      %v1973 = vpop.f32.mrb[0].mxu0
      %v1974 = vadd.f32 0.0, %v1973
      %v1975 = vpop.f32.mrb[0].mxu0
      %1976 = vmatprep.mubr.bf16.mxu0 0
      %1977 = vmatmul.mubr.bf16.gmra.mrb[0].mxu0 %v1087
      %v1978 = vpop.f32.mrb[0].mxu0
      %v1979 = vadd.f32 0.0, %v1978
      %v1980 = vpop.f32.mrb[0].mxu0
      %v1981 = vpop.f32.mrb[0].mxu0
      %v1982 = vadd.f32 0.0, %v1981
      %v1983 = vpop.f32.mrb[0].mxu0
      %1984 = vmatprep.mubr.bf16.mxu0 0
      %1985 = vmatmul.mubr.bf16.gmra.mrb[0].mxu0 %v1088
      %v1986 = vpop.f32.mrb[0].mxu0
      %v1987 = vadd.f32 0.0, %v1986
      %v1988 = vpop.f32.mrb[0].mxu0
      %v1989 = vpop.f32.mrb[0].mxu0
      %v1990 = vadd.f32 0.0, %v1989
      %v1991 = vpop.f32.mrb[0].mxu0
      %1992 = vmatprep.mubr.bf16.mxu0 0
      %1993 = vmatmul.mubr.bf16.gmra.mrb[0].mxu0 %v1089
      %v1994 = vpop.f32.mrb[0].mxu0
      %v1995 = vadd.f32 0.0, %v1994
      %v1996 = vpop.f32.mrb[0].mxu0
      %v1997 = vpop.f32.mrb[0].mxu0
      %v1998 = vadd.f32 0.0, %v1997
      %v1999 = vpop.f32.mrb[0].mxu0
      %2000 = vmatprep.mubr.bf16.mxu0 0
      %2001 = vmatmul.mubr.bf16.gmra.mrb[0].mxu0 %v1090
      %v2002 = vpop.f32.mrb[0].mxu0
      %v2003 = vadd.f32 0.0, %v2002
      %v2004 = vpop.f32.mrb[0].mxu0
      %v2005 = vpop.f32.mrb[0].mxu0
      %v2006 = vadd.f32 0.0, %v2005
      %v2007 = vpop.f32.mrb[0].mxu0
      %2008 = vmatprep.mubr.bf16.mxu0 0
      %2009 = vmatmul.mubr.bf16.gmra.mrb[0].mxu0 %v1091
      %v2010 = vpop.f32.mrb[0].mxu0
      %v2011 = vadd.f32 0.0, %v2010
      %v2012 = vpop.f32.mrb[0].mxu0
      %v2013 = vpop.f32.mrb[0].mxu0
      %v2014 = vadd.f32 0.0, %v2013
      %v2015 = vpop.f32.mrb[0].mxu0
      %2016 = vmatprep.mubr.bf16.mxu0 0
      %2017 = vmatmul.mubr.bf16.gmra.mrb[0].mxu0 %v1092
      %v2018 = vpop.f32.mrb[0].mxu0
      %v2019 = vadd.f32 0.0, %v2018
      %v2020 = vpop.f32.mrb[0].mxu0
      %v2021 = vpop.f32.mrb[0].mxu0
      %v2022 = vadd.f32 0.0, %v2021
      %v2023 = vpop.f32.mrb[0].mxu0
      %2024 = vmatprep.mubr.bf16.mxu0 0
      %2025 = vmatmul.mubr.bf16.gmra.mrb[0].mxu0 %v1093
      %v2026 = vpop.f32.mrb[0].mxu0
      %v2027 = vadd.f32 0.0, %v2026
      %v2028 = vpop.f32.mrb[0].mxu0
      %v2029 = vpop.f32.mrb[0].mxu0
      %v2030 = vadd.f32 0.0, %v2029
      %v2031 = vpop.f32.mrb[0].mxu0
      %2032 = vmatprep.mubr.bf16.mxu0 0
      %2033 = vmatmul.mubr.bf16.gmra.mrb[0].mxu0 %v1094
      %v2034 = vpop.f32.mrb[0].mxu0
      %v2035 = vadd.f32 0.0, %v2034
      %v2036 = vpop.f32.mrb[0].mxu0
      %v2037 = vpop.f32.mrb[0].mxu0
      %v2038 = vadd.f32 0.0, %v2037
      %v2039 = vpop.f32.mrb[0].mxu0
      %2040 = vmatprep.mubr.bf16.mxu0 0
      %2041 = vmatmul.mubr.bf16.gmra.mrb[0].mxu0 %v1095
      %v2042 = vpop.f32.mrb[0].mxu0
      %v2043 = vadd.f32 0.0, %v2042
      %v2044 = vpop.f32.mrb[0].mxu0
      %v2045 = vpop.f32.mrb[0].mxu0
      %v2046 = vadd.f32 0.0, %v2045
      %v2047 = vpop.f32.mrb[0].mxu0
      %2048 = vmatprep.mubr.bf16.mxu0 0
      %2049 = vmatmul.mubr.bf16.gmra.mrb[0].mxu0 %v1096
      %v2050 = vpop.f32.mrb[0].mxu0
      %v2051 = vadd.f32 0.0, %v2050
      %v2052 = vpop.f32.mrb[0].mxu0
      %v2053 = vpop.f32.mrb[0].mxu0
      %v2054 = vadd.f32 0.0, %v2053
      %v2055 = vpop.f32.mrb[0].mxu0
      %2056 = vmatprep.mubr.bf16.mxu0 0
      %2057 = vmatmul.mubr.bf16.gmra.mrb[0].mxu0 %v1097
      %v2058 = vpop.f32.mrb[0].mxu0
      %v2059 = vadd.f32 0.0, %v2058
      %v2060 = vpop.f32.mrb[0].mxu0
      %v2061 = vpop.f32.mrb[0].mxu0
      %v2062 = vadd.f32 0.0, %v2061
      %v2063 = vpop.f32.mrb[0].mxu0
      %2064 = vmatprep.mubr.bf16.mxu0 0
      %2065 = vmatmul.mubr.bf16.gmra.mrb[0].mxu0 %v1098
      %v2066 = vpop.f32.mrb[0].mxu0
      %v2067 = vadd.f32 0.0, %v2066
      %v2068 = vpop.f32.mrb[0].mxu0
      %v2069 = vpop.f32.mrb[0].mxu0
      %v2070 = vadd.f32 0.0, %v2069
      %v2071 = vpop.f32.mrb[0].mxu0
      %2072 = vmatprep.mubr.bf16.mxu0 0
      %2073 = vmatmul.mubr.bf16.gmra.mrb[0].mxu0 %v1099
      %v2074 = vpop.f32.mrb[0].mxu0
      %v2075 = vadd.f32 0.0, %v2074
      %v2076 = vpop.f32.mrb[0].mxu0
      %v2077 = vpop.f32.mrb[0].mxu0
      %v2078 = vadd.f32 0.0, %v2077
      %v2079 = vpop.f32.mrb[0].mxu0
      %2080 = vmatprep.mubr.bf16.mxu0 0
      %2081 = vmatmul.mubr.bf16.gmra.mrb[0].mxu0 %v1100
      %v2082 = vpop.f32.mrb[0].mxu0
      %v2083 = vadd.f32 0.0, %v2082
      %v2084 = vpop.f32.mrb[0].mxu0
      %v2085 = vpop.f32.mrb[0].mxu0
      %v2086 = vadd.f32 0.0, %v2085
      %v2087 = vpop.f32.mrb[0].mxu0
      %2088 = vmatprep.mubr.bf16.mxu0 0
      %2089 = vmatmul.mubr.bf16.gmra.mrb[0].mxu0 %v1101
      %v2090 = vpop.f32.mrb[0].mxu0
      %v2091 = vadd.f32 0.0, %v2090
      %v2092 = vpop.f32.mrb[0].mxu0
      %v2093 = vpop.f32.mrb[0].mxu0
      %v2094 = vadd.f32 0.0, %v2093
      %v2095 = vpop.f32.mrb[0].mxu0
      %2096 = vmatprep.mubr.bf16.mxu0 0
      %2097 = vmatmul.mubr.bf16.gmra.mrb[0].mxu0 %v1102
      %v2098 = vpop.f32.mrb[0].mxu0
      %v2099 = vadd.f32 0.0, %v2098
      %v2100 = vpop.f32.mrb[0].mxu0
      %v2101 = vpop.f32.mrb[0].mxu0
      %v2102 = vadd.f32 0.0, %v2101
      %v2103 = vpop.f32.mrb[0].mxu0
      %2104 = vmatprep.mubr.bf16.mxu0 0
      %2105 = vmatmul.mubr.bf16.gmra.mrb[0].mxu0 %v1103
      %v2106 = vpop.f32.mrb[0].mxu0
      %v2107 = vadd.f32 0.0, %v2106
      %v2108 = vpop.f32.mrb[0].mxu0
      %v2109 = vpop.f32.mrb[0].mxu0
      %v2110 = vadd.f32 0.0, %v2109
      %v2111 = vpop.f32.mrb[0].mxu0
      %2112 = vmatprep.mubr.bf16.mxu0 0
      %2113 = vmatmul.mubr.bf16.gmra.mrb[0].mxu0 %v1104
      %v2114 = vpop.f32.mrb[0].mxu0
      %v2115 = vadd.f32 0.0, %v2114
      %v2116 = vpop.f32.mrb[0].mxu0
      %v2117 = vpop.f32.mrb[0].mxu0
      %v2118 = vadd.f32 0.0, %v2117
      %v2119 = vpop.f32.mrb[0].mxu0
      %2120 = vmatprep.mubr.bf16.mxu0 0
      %2121 = vmatmul.mubr.bf16.gmra.mrb[0].mxu0 %v1105
      %v2122 = vpop.f32.mrb[0].mxu0
      %v2123 = vadd.f32 0.0, %v2122
      %v2124 = vpop.f32.mrb[0].mxu0
      %v2125 = vpop.f32.mrb[0].mxu0
      %v2126 = vadd.f32 0.0, %v2125
      %v2127 = vpop.f32.mrb[0].mxu0
      %2128 = vmatprep.mubr.bf16.mxu0 0
      %2129 = vmatmul.mubr.bf16.gmra.mrb[0].mxu0 %v1106
      %v2130 = vpop.f32.mrb[0].mxu0
      %v2131 = vadd.f32 0.0, %v2130
      %v2132 = vpop.f32.mrb[0].mxu0
      %v2133 = vpop.f32.mrb[0].mxu0
      %v2134 = vadd.f32 0.0, %v2133
      %v2135 = vpop.f32.mrb[0].mxu0
      %2136 = vmatprep.mubr.bf16.mxu0 0
      %2137 = vmatmul.mubr.bf16.gmra.mrb[0].mxu0 %v1107
      %v2138 = vpop.f32.mrb[0].mxu0
      %v2139 = vadd.f32 0.0, %v2138
      %v2140 = vpop.f32.mrb[0].mxu0
      %v2141 = vpop.f32.mrb[0].mxu0
      %v2142 = vadd.f32 0.0, %v2141
      %v2143 = vpop.f32.mrb[0].mxu0
      %2144 = vmatprep.mubr.bf16.mxu0 0
      %2145 = vmatmul.mubr.bf16.gmra.mrb[0].mxu0 %v1108
      %v2146 = vpop.f32.mrb[0].mxu0
      %v2147 = vadd.f32 0.0, %v2146
      %v2148 = vpop.f32.mrb[0].mxu0
      %v2149 = vpop.f32.mrb[0].mxu0
      %v2150 = vadd.f32 0.0, %v2149
      %v2151 = vpop.f32.mrb[0].mxu0
      %2152 = vmatprep.mubr.bf16.mxu0 0
      %2153 = vmatmul.mubr.bf16.gmra.mrb[0].mxu0 %v1109
      %v2154 = vpop.f32.mrb[0].mxu0
      %v2155 = vadd.f32 0.0, %v2154
      %v2156 = vpop.f32.mrb[0].mxu0
      %v2157 = vpop.f32.mrb[0].mxu0
      %v2158 = vadd.f32 0.0, %v2157
      %v2159 = vpop.f32.mrb[0].mxu0
      %2160 = vmatprep.mubr.bf16.mxu0 0
      %2161 = vmatmul.mubr.bf16.gmra.mrb[0].mxu0 %v1110
      %v2162 = vpop.f32.mrb[0].mxu0
      %v2163 = vadd.f32 0.0, %v2162
      %v2164 = vpop.f32.mrb[0].mxu0
      %v2165 = vpop.f32.mrb[0].mxu0
      %v2166 = vadd.f32 0.0, %v2165
      %v2167 = vpop.f32.mrb[0].mxu0
      %2168 = vmatprep.mubr.bf16.mxu0 0
      %2169 = vmatmul.mubr.bf16.gmra.mrb[0].mxu0 %v1111
      %v2170 = vpop.f32.mrb[0].mxu0
      %v2171 = vadd.f32 0.0, %v2170
      %v2172 = vpop.f32.mrb[0].mxu0
      %v2173 = vpop.f32.mrb[0].mxu0
      %v2174 = vadd.f32 0.0, %v2173
      %v2175 = vpop.f32.mrb[0].mxu0
      %2176 = vmatprep.mubr.bf16.mxu0 0
      %2177 = vmatmul.mubr.bf16.gmra.mrb[0].mxu0 %v1112
      %v2178 = vpop.f32.mrb[0].mxu0
      %v2179 = vadd.f32 0.0, %v2178
      %v2180 = vpop.f32.mrb[0].mxu0
      %v2181 = vpop.f32.mrb[0].mxu0
      %v2182 = vadd.f32 0.0, %v2181
      %v2183 = vpop.f32.mrb[0].mxu0
      %2184 = vmatprep.mubr.bf16.mxu0 0
      %2185 = vmatmul.mubr.bf16.gmra.mrb[0].mxu0 %v1113
      %v2186 = vpop.f32.mrb[0].mxu0
      %v2187 = vadd.f32 0.0, %v2186
      %v2188 = vpop.f32.mrb[0].mxu0
      %v2189 = vpop.f32.mrb[0].mxu0
      %v2190 = vadd.f32 0.0, %v2189
      %v2191 = vpop.f32.mrb[0].mxu0
      %2192 = vmatprep.mubr.bf16.mxu0 0
      %2193 = vmatmul.mubr.bf16.gmra.mrb[0].mxu0 %v1114
      %v2194 = vpop.f32.mrb[0].mxu0
      %v2195 = vadd.f32 0.0, %v2194
      %v2196 = vpop.f32.mrb[0].mxu0
      %v2197 = vpop.f32.mrb[0].mxu0
      %v2198 = vadd.f32 0.0, %v2197
      %v2199 = vpop.f32.mrb[0].mxu0
      %2200 = vmatprep.mubr.bf16.mxu0 0
      %2201 = vmatmul.mubr.bf16.gmra.mrb[0].mxu0 %v1115
      %v2202 = vpop.f32.mrb[0].mxu0
      %v2203 = vadd.f32 0.0, %v2202
      %v2204 = vpop.f32.mrb[0].mxu0
      %v2205 = vpop.f32.mrb[0].mxu0
      %v2206 = vadd.f32 0.0, %v2205
      %v2207 = vpop.f32.mrb[0].mxu0
      %2208 = vmatprep.mubr.bf16.mxu0 0
      %2209 = vmatmul.mubr.bf16.gmra.mrb[0].mxu0 %v1116
      %v2210 = vpop.f32.mrb[0].mxu0
      %v2211 = vadd.f32 0.0, %v2210
      %v2212 = vpop.f32.mrb[0].mxu0
      %v2213 = vpop.f32.mrb[0].mxu0
      %v2214 = vadd.f32 0.0, %v2213
      %v2215 = vpop.f32.mrb[0].mxu0
      %2216 = vmatprep.mubr.bf16.mxu0 0
      %2217 = vmatmul.mubr.bf16.gmra.mrb[0].mxu0 %v1117
      %v2218 = vpop.f32.mrb[0].mxu0
      %v2219 = vadd.f32 0.0, %v2218
      %v2220 = vpop.f32.mrb[0].mxu0
      %v2221 = vpop.f32.mrb[0].mxu0
      %v2222 = vadd.f32 0.0, %v2221
      %v2223 = vpop.f32.mrb[0].mxu0
      %2224 = vmatprep.mubr.bf16.mxu0 0
      %2225 = vmatmul.mubr.bf16.gmra.mrb[0].mxu0 %v1118
      %v2226 = vpop.f32.mrb[0].mxu0
      %v2227 = vadd.f32 0.0, %v2226
      %v2228 = vpop.f32.mrb[0].mxu0
      %v2229 = vpop.f32.mrb[0].mxu0
      %v2230 = vadd.f32 0.0, %v2229
      %v2231 = vpop.f32.mrb[0].mxu0
      %2232 = vmatprep.mubr.bf16.mxu0 0
      %2233 = vmatmul.mubr.bf16.gmra.mrb[0].mxu0 %v1119
      %v2234 = vpop.f32.mrb[0].mxu0
      %v2235 = vadd.f32 0.0, %v2234
      %v2236 = vpop.f32.mrb[0].mxu0
      %v2237 = vpop.f32.mrb[0].mxu0
      %v2238 = vadd.f32 0.0, %v2237
      %v2239 = vpop.f32.mrb[0].mxu0
      %2240 = vmatprep.mubr.bf16.mxu0 0
      %2241 = vmatmul.mubr.bf16.gmra.mrb[0].mxu0 %v1120
      %v2242 = vpop.f32.mrb[0].mxu0
      %v2243 = vadd.f32 0.0, %v2242
      %v2244 = vpop.f32.mrb[0].mxu0
      %v2245 = vpop.f32.mrb[0].mxu0
      %v2246 = vadd.f32 0.0, %v2245
      %v2247 = vpop.f32.mrb[0].mxu0
      %2248 = vmatprep.mubr.bf16.mxu0 0
      %2249 = vmatmul.mubr.bf16.gmra.mrb[0].mxu0 %v1121
      %v2250 = vpop.f32.mrb[0].mxu0
      %v2251 = vadd.f32 0.0, %v2250
      %v2252 = vpop.f32.mrb[0].mxu0
      %v2253 = vpop.f32.mrb[0].mxu0
      %v2254 = vadd.f32 0.0, %v2253
      %v2255 = vpop.f32.mrb[0].mxu0
      %2256 = vmatprep.mubr.bf16.mxu0 0
      %2257 = vmatmul.mubr.bf16.gmra.mrb[0].mxu0 %v1122
      %v2258 = vpop.f32.mrb[0].mxu0
      %v2259 = vadd.f32 0.0, %v2258
      %v2260 = vpop.f32.mrb[0].mxu0
      %v2261 = vpop.f32.mrb[0].mxu0
      %v2262 = vadd.f32 0.0, %v2261
      %v2263 = vpop.f32.mrb[0].mxu0
      %2264 = vmatprep.mubr.bf16.mxu0 0
      %2265 = vmatmul.mubr.bf16.gmra.mrb[0].mxu0 %v1123
      %v2266 = vpop.f32.mrb[0].mxu0
      %v2267 = vadd.f32 0.0, %v2266
      %v2268 = vpop.f32.mrb[0].mxu0
      %v2269 = vpop.f32.mrb[0].mxu0
      %v2270 = vadd.f32 0.0, %v2269
      %v2271 = vpop.f32.mrb[0].mxu0
      %2272 = vmatprep.mubr.bf16.mxu0 0
      %2273 = vmatmul.mubr.bf16.gmra.mrb[0].mxu0 %v1124
      %v2274 = vpop.f32.mrb[0].mxu0
      %v2275 = vadd.f32 0.0, %v2274
      %v2276 = vpop.f32.mrb[0].mxu0
      %v2277 = vpop.f32.mrb[0].mxu0
      %v2278 = vadd.f32 0.0, %v2277
      %v2279 = vpop.f32.mrb[0].mxu0
      %2280 = vmatprep.mubr.bf16.mxu0 0
      %2281 = vmatmul.mubr.bf16.gmra.mrb[0].mxu0 %v1125
      %v2282 = vpop.f32.mrb[0].mxu0
      %v2283 = vadd.f32 0.0, %v2282
      %v2284 = vpop.f32.mrb[0].mxu0
      %v2285 = vpop.f32.mrb[0].mxu0
      %v2286 = vadd.f32 0.0, %v2285
      %v2287 = vpop.f32.mrb[0].mxu0
      %2288 = vmatprep.mubr.bf16.mxu0 0
      %2289 = vmatmul.mubr.bf16.gmra.mrb[0].mxu0 %v1126
      %v2290 = vpop.f32.mrb[0].mxu0
      %v2291 = vadd.f32 0.0, %v2290
      %v2292 = vpop.f32.mrb[0].mxu0
      %v2293 = vpop.f32.mrb[0].mxu0
      %v2294 = vadd.f32 0.0, %v2293
      %v2295 = vpop.f32.mrb[0].mxu0
      %2296 = vmatprep.mubr.bf16.mxu0 0
      %2297 = vmatmul.mubr.bf16.gmra.mrb[0].mxu0 %v1127
      %v2298 = vpop.f32.mrb[0].mxu0
      %v2299 = vadd.f32 0.0, %v2298
      %v2300 = vpop.f32.mrb[0].mxu0
      %v2301 = vpop.f32.mrb[0].mxu0
      %v2302 = vadd.f32 0.0, %v2301
      %v2303 = vpop.f32.mrb[0].mxu0
      %2304 = vmatprep.mubr.bf16.mxu0 0
      %2305 = vmatmul.mubr.bf16.gmra.mrb[0].mxu0 %v1128
      %v2306 = vpop.f32.mrb[0].mxu0
      %v2307 = vadd.f32 0.0, %v2306
      %v2308 = vpop.f32.mrb[0].mxu0
      %v2309 = vpop.f32.mrb[0].mxu0
      %v2310 = vadd.f32 0.0, %v2309
      %v2311 = vpop.f32.mrb[0].mxu0
      %2312 = vmatprep.mubr.bf16.mxu0 0
      %2313 = vmatmul.mubr.bf16.gmra.mrb[0].mxu0 %v1129
      %v2314 = vpop.f32.mrb[0].mxu0
      %v2315 = vadd.f32 0.0, %v2314
      %v2316 = vpop.f32.mrb[0].mxu0
      %v2317 = vpop.f32.mrb[0].mxu0
      %v2318 = vadd.f32 0.0, %v2317
      %v2319 = vpop.f32.mrb[0].mxu0
      %2320 = vmatprep.mubr.bf16.mxu0 0
      %2321 = vmatmul.mubr.bf16.gmra.mrb[0].mxu0 %v1130
      %v2322 = vpop.f32.mrb[0].mxu0
      %v2323 = vadd.f32 0.0, %v2322
      %v2324 = vpop.f32.mrb[0].mxu0
      %v2325 = vpop.f32.mrb[0].mxu0
      %v2326 = vadd.f32 0.0, %v2325
      %v2327 = vpop.f32.mrb[0].mxu0
      %2328 = vmatprep.mubr.bf16.mxu0 0
      %2329 = vmatmul.mubr.bf16.gmra.mrb[0].mxu0 %v1131
      %v2330 = vpop.f32.mrb[0].mxu0
      %v2331 = vadd.f32 0.0, %v2330
      %v2332 = vpop.f32.mrb[0].mxu0
      %v2333 = vpop.f32.mrb[0].mxu0
      %v2334 = vadd.f32 0.0, %v2333
      %v2335 = vpop.f32.mrb[0].mxu0
      %2336 = vmatprep.mubr.bf16.mxu0 0
      %2337 = vmatmul.mubr.bf16.gmra.mrb[0].mxu0 %v1132
      %v2338 = vpop.f32.mrb[0].mxu0
      %v2339 = vadd.f32 0.0, %v2338
      %v2340 = vpop.f32.mrb[0].mxu0
      %v2341 = vpop.f32.mrb[0].mxu0
      %v2342 = vadd.f32 0.0, %v2341
      %v2343 = vpop.f32.mrb[0].mxu0
      %2344 = vmatprep.mubr.bf16.mxu0 0
      %2345 = vmatmul.mubr.bf16.gmra.mrb[0].mxu0 %v1133
      %v2346 = vpop.f32.mrb[0].mxu0
      %v2347 = vadd.f32 0.0, %v2346
      %v2348 = vpop.f32.mrb[0].mxu0
      %v2349 = vpop.f32.mrb[0].mxu0
      %v2350 = vadd.f32 0.0, %v2349
      %v2351 = vpop.f32.mrb[0].mxu0
      %2352 = vmatprep.mubr.bf16.mxu0 0
      %2353 = vmatmul.mubr.bf16.gmra.mrb[0].mxu0 %v1134
      %v2354 = vpop.f32.mrb[0].mxu0
      %v2355 = vadd.f32 0.0, %v2354
      %v2356 = vpop.f32.mrb[0].mxu0
      %v2357 = vpop.f32.mrb[0].mxu0
      %v2358 = vadd.f32 0.0, %v2357
      %v2359 = vpop.f32.mrb[0].mxu0
      %2360 = vmatprep.mubr.bf16.mxu0 0
      %2361 = vmatmul.mubr.bf16.gmra.mrb[0].mxu0 %v1135
      %v2362 = vpop.f32.mrb[0].mxu0
      %v2363 = vadd.f32 0.0, %v2362
      %v2364 = vpop.f32.mrb[0].mxu0
      %v2365 = vpop.f32.mrb[0].mxu0
      %v2366 = vadd.f32 0.0, %v2365
      %v2367 = vpop.f32.mrb[0].mxu0
      %2368 = vdwg.mxu0
      %vm2369 = vcmp.ge.f32.partialorder %v1347, 0.0
      %vm2370 = vcmp.ge.f32.partialorder %v1350, 0.0
      %vm2371 = vcmp.ge.f32.partialorder %v1355, 0.0
      %vm2372 = vcmp.ge.f32.partialorder %v1358, 0.0
      %vm2373 = vcmp.ge.f32.partialorder %v1363, 0.0
      %vm2374 = vcmp.ge.f32.partialorder %v1366, 0.0
      %vm2375 = vcmp.ge.f32.partialorder %v1371, 0.0
      %vm2376 = vcmp.ge.f32.partialorder %v1374, 0.0
      %vm2377 = vcmp.ge.f32.partialorder %v1379, 0.0
      %vm2378 = vcmp.ge.f32.partialorder %v1382, 0.0
      %vm2379 = vcmp.ge.f32.partialorder %v1387, 0.0
      %vm2380 = vcmp.ge.f32.partialorder %v1390, 0.0
      %vm2381 = vcmp.ge.f32.partialorder %v1395, 0.0
      %vm2382 = vcmp.ge.f32.partialorder %v1398, 0.0
      %vm2383 = vcmp.ge.f32.partialorder %v1403, 0.0
      %vm2384 = vcmp.ge.f32.partialorder %v1406, 0.0
      %vm2385 = vcmp.ge.f32.partialorder %v1411, 0.0
      %vm2386 = vcmp.ge.f32.partialorder %v1414, 0.0
      %vm2387 = vcmp.ge.f32.partialorder %v1419, 0.0
      %vm2388 = vcmp.ge.f32.partialorder %v1422, 0.0
      %vm2389 = vcmp.ge.f32.partialorder %v1427, 0.0
      %vm2390 = vcmp.ge.f32.partialorder %v1430, 0.0
      %vm2391 = vcmp.ge.f32.partialorder %v1435, 0.0
      %vm2392 = vcmp.ge.f32.partialorder %v1438, 0.0
      %vm2393 = vcmp.ge.f32.partialorder %v1443, 0.0
      %vm2394 = vcmp.ge.f32.partialorder %v1446, 0.0
      %vm2395 = vcmp.ge.f32.partialorder %v1451, 0.0
      %vm2396 = vcmp.ge.f32.partialorder %v1454, 0.0
      %vm2397 = vcmp.ge.f32.partialorder %v1459, 0.0
      %vm2398 = vcmp.ge.f32.partialorder %v1462, 0.0
      %vm2399 = vcmp.ge.f32.partialorder %v1467, 0.0
      %vm2400 = vcmp.ge.f32.partialorder %v1470, 0.0
      %vm2401 = vcmp.ge.f32.partialorder %v1475, 0.0
      %vm2402 = vcmp.ge.f32.partialorder %v1478, 0.0
      %vm2403 = vcmp.ge.f32.partialorder %v1483, 0.0
      %vm2404 = vcmp.ge.f32.partialorder %v1486, 0.0
      %vm2405 = vcmp.ge.f32.partialorder %v1491, 0.0
      %vm2406 = vcmp.ge.f32.partialorder %v1494, 0.0
      %vm2407 = vcmp.ge.f32.partialorder %v1499, 0.0
      %vm2408 = vcmp.ge.f32.partialorder %v1502, 0.0
      %vm2409 = vcmp.ge.f32.partialorder %v1507, 0.0
      %vm2410 = vcmp.ge.f32.partialorder %v1510, 0.0
      %vm2411 = vcmp.ge.f32.partialorder %v1515, 0.0
      %vm2412 = vcmp.ge.f32.partialorder %v1518, 0.0
      %vm2413 = vcmp.ge.f32.partialorder %v1523, 0.0
      %vm2414 = vcmp.ge.f32.partialorder %v1526, 0.0
      %vm2415 = vcmp.ge.f32.partialorder %v1531, 0.0
      %vm2416 = vcmp.ge.f32.partialorder %v1534, 0.0
      %vm2417 = vcmp.ge.f32.partialorder %v1539, 0.0
      %vm2418 = vcmp.ge.f32.partialorder %v1542, 0.0
      %vm2419 = vcmp.ge.f32.partialorder %v1547, 0.0
      %vm2420 = vcmp.ge.f32.partialorder %v1550, 0.0
      %vm2421 = vcmp.ge.f32.partialorder %v1555, 0.0
      %vm2422 = vcmp.ge.f32.partialorder %v1558, 0.0
      %vm2423 = vcmp.ge.f32.partialorder %v1563, 0.0
      %vm2424 = vcmp.ge.f32.partialorder %v1566, 0.0
      %vm2425 = vcmp.ge.f32.partialorder %v1571, 0.0
      %vm2426 = vcmp.ge.f32.partialorder %v1574, 0.0
      %vm2427 = vcmp.ge.f32.partialorder %v1579, 0.0
      %vm2428 = vcmp.ge.f32.partialorder %v1582, 0.0
      %vm2429 = vcmp.ge.f32.partialorder %v1587, 0.0
      %vm2430 = vcmp.ge.f32.partialorder %v1590, 0.0
      %vm2431 = vcmp.ge.f32.partialorder %v1595, 0.0
      %vm2432 = vcmp.ge.f32.partialorder %v1598, 0.0
      %vm2433 = vcmp.ge.f32.partialorder %v1603, 0.0
      %vm2434 = vcmp.ge.f32.partialorder %v1606, 0.0
      %vm2435 = vcmp.ge.f32.partialorder %v1611, 0.0
      %vm2436 = vcmp.ge.f32.partialorder %v1614, 0.0
      %vm2437 = vcmp.ge.f32.partialorder %v1619, 0.0
      %vm2438 = vcmp.ge.f32.partialorder %v1622, 0.0
      %vm2439 = vcmp.ge.f32.partialorder %v1627, 0.0
      %vm2440 = vcmp.ge.f32.partialorder %v1630, 0.0
      %vm2441 = vcmp.ge.f32.partialorder %v1635, 0.0
      %vm2442 = vcmp.ge.f32.partialorder %v1638, 0.0
      %vm2443 = vcmp.ge.f32.partialorder %v1643, 0.0
      %vm2444 = vcmp.ge.f32.partialorder %v1646, 0.0
      %vm2445 = vcmp.ge.f32.partialorder %v1651, 0.0
      %vm2446 = vcmp.ge.f32.partialorder %v1654, 0.0
      %vm2447 = vcmp.ge.f32.partialorder %v1659, 0.0
      %vm2448 = vcmp.ge.f32.partialorder %v1662, 0.0
      %vm2449 = vcmp.ge.f32.partialorder %v1667, 0.0
      %vm2450 = vcmp.ge.f32.partialorder %v1670, 0.0
      %vm2451 = vcmp.ge.f32.partialorder %v1675, 0.0
      %vm2452 = vcmp.ge.f32.partialorder %v1678, 0.0
      %vm2453 = vcmp.ge.f32.partialorder %v1683, 0.0
      %vm2454 = vcmp.ge.f32.partialorder %v1686, 0.0
      %vm2455 = vcmp.ge.f32.partialorder %v1691, 0.0
      %vm2456 = vcmp.ge.f32.partialorder %v1694, 0.0
      %vm2457 = vcmp.ge.f32.partialorder %v1699, 0.0
      %vm2458 = vcmp.ge.f32.partialorder %v1702, 0.0
      %vm2459 = vcmp.ge.f32.partialorder %v1707, 0.0
      %vm2460 = vcmp.ge.f32.partialorder %v1710, 0.0
      %vm2461 = vcmp.ge.f32.partialorder %v1715, 0.0
      %vm2462 = vcmp.ge.f32.partialorder %v1718, 0.0
      %vm2463 = vcmp.ge.f32.partialorder %v1723, 0.0
      %vm2464 = vcmp.ge.f32.partialorder %v1726, 0.0
      %vm2465 = vcmp.ge.f32.partialorder %v1731, 0.0
      %vm2466 = vcmp.ge.f32.partialorder %v1734, 0.0
      %vm2467 = vcmp.ge.f32.partialorder %v1739, 0.0
      %vm2468 = vcmp.ge.f32.partialorder %v1742, 0.0
      %vm2469 = vcmp.ge.f32.partialorder %v1747, 0.0
      %vm2470 = vcmp.ge.f32.partialorder %v1750, 0.0
      %vm2471 = vcmp.ge.f32.partialorder %v1755, 0.0
      %vm2472 = vcmp.ge.f32.partialorder %v1758, 0.0
      %vm2473 = vcmp.ge.f32.partialorder %v1763, 0.0
      %vm2474 = vcmp.ge.f32.partialorder %v1766, 0.0
      %vm2475 = vcmp.ge.f32.partialorder %v1771, 0.0
      %vm2476 = vcmp.ge.f32.partialorder %v1774, 0.0
      %vm2477 = vcmp.ge.f32.partialorder %v1779, 0.0
      %vm2478 = vcmp.ge.f32.partialorder %v1782, 0.0
      %vm2479 = vcmp.ge.f32.partialorder %v1787, 0.0
      %vm2480 = vcmp.ge.f32.partialorder %v1790, 0.0
      %vm2481 = vcmp.ge.f32.partialorder %v1795, 0.0
      %vm2482 = vcmp.ge.f32.partialorder %v1798, 0.0
      %vm2483 = vcmp.ge.f32.partialorder %v1803, 0.0
      %vm2484 = vcmp.ge.f32.partialorder %v1806, 0.0
      %vm2485 = vcmp.ge.f32.partialorder %v1811, 0.0
      %vm2486 = vcmp.ge.f32.partialorder %v1814, 0.0
      %vm2487 = vcmp.ge.f32.partialorder %v1819, 0.0
      %vm2488 = vcmp.ge.f32.partialorder %v1822, 0.0
      %vm2489 = vcmp.ge.f32.partialorder %v1827, 0.0
      %vm2490 = vcmp.ge.f32.partialorder %v1830, 0.0
      %vm2491 = vcmp.ge.f32.partialorder %v1835, 0.0
      %vm2492 = vcmp.ge.f32.partialorder %v1838, 0.0
      %vm2493 = vcmp.ge.f32.partialorder %v1843, 0.0
      %vm2494 = vcmp.ge.f32.partialorder %v1846, 0.0
      %vm2495 = vcmp.ge.f32.partialorder %v1851, 0.0
      %vm2496 = vcmp.ge.f32.partialorder %v1854, 0.0
      %vm2497 = vcmp.ge.f32.partialorder %v1859, 0.0
      %vm2498 = vcmp.ge.f32.partialorder %v1862, 0.0
      %vm2499 = vcmp.ge.f32.partialorder %v1867, 0.0
      %vm2500 = vcmp.ge.f32.partialorder %v1870, 0.0
      %vm2501 = vcmp.ge.f32.partialorder %v1875, 0.0
      %vm2502 = vcmp.ge.f32.partialorder %v1878, 0.0
      %vm2503 = vcmp.ge.f32.partialorder %v1883, 0.0
      %vm2504 = vcmp.ge.f32.partialorder %v1886, 0.0
      %vm2505 = vcmp.ge.f32.partialorder %v1891, 0.0
      %vm2506 = vcmp.ge.f32.partialorder %v1894, 0.0
      %vm2507 = vcmp.ge.f32.partialorder %v1899, 0.0
      %vm2508 = vcmp.ge.f32.partialorder %v1902, 0.0
      %vm2509 = vcmp.ge.f32.partialorder %v1907, 0.0
      %vm2510 = vcmp.ge.f32.partialorder %v1910, 0.0
      %vm2511 = vcmp.ge.f32.partialorder %v1915, 0.0
      %vm2512 = vcmp.ge.f32.partialorder %v1918, 0.0
      %vm2513 = vcmp.ge.f32.partialorder %v1923, 0.0
      %vm2514 = vcmp.ge.f32.partialorder %v1926, 0.0
      %vm2515 = vcmp.ge.f32.partialorder %v1931, 0.0
      %vm2516 = vcmp.ge.f32.partialorder %v1934, 0.0
      %vm2517 = vcmp.ge.f32.partialorder %v1939, 0.0
      %vm2518 = vcmp.ge.f32.partialorder %v1942, 0.0
      %vm2519 = vcmp.ge.f32.partialorder %v1947, 0.0
      %vm2520 = vcmp.ge.f32.partialorder %v1950, 0.0
      %vm2521 = vcmp.ge.f32.partialorder %v1955, 0.0
      %vm2522 = vcmp.ge.f32.partialorder %v1958, 0.0
      %vm2523 = vcmp.ge.f32.partialorder %v1963, 0.0
      %vm2524 = vcmp.ge.f32.partialorder %v1966, 0.0
      %vm2525 = vcmp.ge.f32.partialorder %v1971, 0.0
      %vm2526 = vcmp.ge.f32.partialorder %v1974, 0.0
      %vm2527 = vcmp.ge.f32.partialorder %v1979, 0.0
      %vm2528 = vcmp.ge.f32.partialorder %v1982, 0.0
      %vm2529 = vcmp.ge.f32.partialorder %v1987, 0.0
      %vm2530 = vcmp.ge.f32.partialorder %v1990, 0.0
      %vm2531 = vcmp.ge.f32.partialorder %v1995, 0.0
      %vm2532 = vcmp.ge.f32.partialorder %v1998, 0.0
      %vm2533 = vcmp.ge.f32.partialorder %v2003, 0.0
      %vm2534 = vcmp.ge.f32.partialorder %v2006, 0.0
      %vm2535 = vcmp.ge.f32.partialorder %v2011, 0.0
      %vm2536 = vcmp.ge.f32.partialorder %v2014, 0.0
      %vm2537 = vcmp.ge.f32.partialorder %v2019, 0.0
      %vm2538 = vcmp.ge.f32.partialorder %v2022, 0.0
      %vm2539 = vcmp.ge.f32.partialorder %v2027, 0.0
      %vm2540 = vcmp.ge.f32.partialorder %v2030, 0.0
      %vm2541 = vcmp.ge.f32.partialorder %v2035, 0.0
      %vm2542 = vcmp.ge.f32.partialorder %v2038, 0.0
      %vm2543 = vcmp.ge.f32.partialorder %v2043, 0.0
      %vm2544 = vcmp.ge.f32.partialorder %v2046, 0.0
      %vm2545 = vcmp.ge.f32.partialorder %v2051, 0.0
      %vm2546 = vcmp.ge.f32.partialorder %v2054, 0.0
      %vm2547 = vcmp.ge.f32.partialorder %v2059, 0.0
      %vm2548 = vcmp.ge.f32.partialorder %v2062, 0.0
      %vm2549 = vcmp.ge.f32.partialorder %v2067, 0.0
      %vm2550 = vcmp.ge.f32.partialorder %v2070, 0.0
      %vm2551 = vcmp.ge.f32.partialorder %v2075, 0.0
      %vm2552 = vcmp.ge.f32.partialorder %v2078, 0.0
      %vm2553 = vcmp.ge.f32.partialorder %v2083, 0.0
      %vm2554 = vcmp.ge.f32.partialorder %v2086, 0.0
      %vm2555 = vcmp.ge.f32.partialorder %v2091, 0.0
      %vm2556 = vcmp.ge.f32.partialorder %v2094, 0.0
      %vm2557 = vcmp.ge.f32.partialorder %v2099, 0.0
      %vm2558 = vcmp.ge.f32.partialorder %v2102, 0.0
      %vm2559 = vcmp.ge.f32.partialorder %v2107, 0.0
      %vm2560 = vcmp.ge.f32.partialorder %v2110, 0.0
      %vm2561 = vcmp.ge.f32.partialorder %v2115, 0.0
      %vm2562 = vcmp.ge.f32.partialorder %v2118, 0.0
      %vm2563 = vcmp.ge.f32.partialorder %v2123, 0.0
      %vm2564 = vcmp.ge.f32.partialorder %v2126, 0.0
      %vm2565 = vcmp.ge.f32.partialorder %v2131, 0.0
      %vm2566 = vcmp.ge.f32.partialorder %v2134, 0.0
      %vm2567 = vcmp.ge.f32.partialorder %v2139, 0.0
      %vm2568 = vcmp.ge.f32.partialorder %v2142, 0.0
      %vm2569 = vcmp.ge.f32.partialorder %v2147, 0.0
      %vm2570 = vcmp.ge.f32.partialorder %v2150, 0.0
      %vm2571 = vcmp.ge.f32.partialorder %v2155, 0.0
      %vm2572 = vcmp.ge.f32.partialorder %v2158, 0.0
      %vm2573 = vcmp.ge.f32.partialorder %v2163, 0.0
      %vm2574 = vcmp.ge.f32.partialorder %v2166, 0.0
      %vm2575 = vcmp.ge.f32.partialorder %v2171, 0.0
      %vm2576 = vcmp.ge.f32.partialorder %v2174, 0.0
      %vm2577 = vcmp.ge.f32.partialorder %v2179, 0.0
      %vm2578 = vcmp.ge.f32.partialorder %v2182, 0.0
      %vm2579 = vcmp.ge.f32.partialorder %v2187, 0.0
      %vm2580 = vcmp.ge.f32.partialorder %v2190, 0.0
      %vm2581 = vcmp.ge.f32.partialorder %v2195, 0.0
      %vm2582 = vcmp.ge.f32.partialorder %v2198, 0.0
      %vm2583 = vcmp.ge.f32.partialorder %v2203, 0.0
      %vm2584 = vcmp.ge.f32.partialorder %v2206, 0.0
      %vm2585 = vcmp.ge.f32.partialorder %v2211, 0.0
      %vm2586 = vcmp.ge.f32.partialorder %v2214, 0.0
      %vm2587 = vcmp.ge.f32.partialorder %v2219, 0.0
      %vm2588 = vcmp.ge.f32.partialorder %v2222, 0.0
      %vm2589 = vcmp.ge.f32.partialorder %v2227, 0.0
      %vm2590 = vcmp.ge.f32.partialorder %v2230, 0.0
      %vm2591 = vcmp.ge.f32.partialorder %v2235, 0.0
      %vm2592 = vcmp.ge.f32.partialorder %v2238, 0.0
      %vm2593 = vcmp.ge.f32.partialorder %v2243, 0.0
      %vm2594 = vcmp.ge.f32.partialorder %v2246, 0.0
      %vm2595 = vcmp.ge.f32.partialorder %v2251, 0.0
      %vm2596 = vcmp.ge.f32.partialorder %v2254, 0.0
      %vm2597 = vcmp.ge.f32.partialorder %v2259, 0.0
      %vm2598 = vcmp.ge.f32.partialorder %v2262, 0.0
      %vm2599 = vcmp.ge.f32.partialorder %v2267, 0.0
      %vm2600 = vcmp.ge.f32.partialorder %v2270, 0.0
      %vm2601 = vcmp.ge.f32.partialorder %v2275, 0.0
      %vm2602 = vcmp.ge.f32.partialorder %v2278, 0.0
      %vm2603 = vcmp.ge.f32.partialorder %v2283, 0.0
      %vm2604 = vcmp.ge.f32.partialorder %v2286, 0.0
      %vm2605 = vcmp.ge.f32.partialorder %v2291, 0.0
      %vm2606 = vcmp.ge.f32.partialorder %v2294, 0.0
      %vm2607 = vcmp.ge.f32.partialorder %v2299, 0.0
      %vm2608 = vcmp.ge.f32.partialorder %v2302, 0.0
      %vm2609 = vcmp.ge.f32.partialorder %v2307, 0.0
      %vm2610 = vcmp.ge.f32.partialorder %v2310, 0.0
      %vm2611 = vcmp.ge.f32.partialorder %v2315, 0.0
      %vm2612 = vcmp.ge.f32.partialorder %v2318, 0.0
      %vm2613 = vcmp.ge.f32.partialorder %v2323, 0.0
      %vm2614 = vcmp.ge.f32.partialorder %v2326, 0.0
      %vm2615 = vcmp.ge.f32.partialorder %v2331, 0.0
      %vm2616 = vcmp.ge.f32.partialorder %v2334, 0.0
      %vm2617 = vcmp.ge.f32.partialorder %v2339, 0.0
      %vm2618 = vcmp.ge.f32.partialorder %v2342, 0.0
      %vm2619 = vcmp.ge.f32.partialorder %v2347, 0.0
      %vm2620 = vcmp.ge.f32.partialorder %v2350, 0.0
      %vm2621 = vcmp.ge.f32.partialorder %v2355, 0.0
      %vm2622 = vcmp.ge.f32.partialorder %v2358, 0.0
      %vm2623 = vcmp.ge.f32.partialorder %v2363, 0.0
      %vm2624 = vcmp.ge.f32.partialorder %v2366, 0.0
      %v2625 = vmul.f32 %v1347, 0.2
      %v2626 = vmul.f32 %v1350, 0.2
      %v2627 = vmul.f32 %v1355, 0.2
      %v2628 = vmul.f32 %v1358, 0.2
      %v2629 = vmul.f32 %v1363, 0.2
      %v2630 = vmul.f32 %v1366, 0.2
      %v2631 = vmul.f32 %v1371, 0.2
      %v2632 = vmul.f32 %v1374, 0.2
      %v2633 = vmul.f32 %v1379, 0.2
      %v2634 = vmul.f32 %v1382, 0.2
      %v2635 = vmul.f32 %v1387, 0.2
      %v2636 = vmul.f32 %v1390, 0.2
      %v2637 = vmul.f32 %v1395, 0.2
      %v2638 = vmul.f32 %v1398, 0.2
      %v2639 = vmul.f32 %v1403, 0.2
      %v2640 = vmul.f32 %v1406, 0.2
      %v2641 = vmul.f32 %v1411, 0.2
      %v2642 = vmul.f32 %v1414, 0.2
      %v2643 = vmul.f32 %v1419, 0.2
      %v2644 = vmul.f32 %v1422, 0.2
      %v2645 = vmul.f32 %v1427, 0.2
      %v2646 = vmul.f32 %v1430, 0.2
      %v2647 = vmul.f32 %v1435, 0.2
      %v2648 = vmul.f32 %v1438, 0.2
      %v2649 = vmul.f32 %v1443, 0.2
      %v2650 = vmul.f32 %v1446, 0.2
      %v2651 = vmul.f32 %v1451, 0.2
      %v2652 = vmul.f32 %v1454, 0.2
      %v2653 = vmul.f32 %v1459, 0.2
      %v2654 = vmul.f32 %v1462, 0.2
      %v2655 = vmul.f32 %v1467, 0.2
      %v2656 = vmul.f32 %v1470, 0.2
      %v2657 = vmul.f32 %v1475, 0.2
      %v2658 = vmul.f32 %v1478, 0.2
      %v2659 = vmul.f32 %v1483, 0.2
      %v2660 = vmul.f32 %v1486, 0.2
      %v2661 = vmul.f32 %v1491, 0.2
      %v2662 = vmul.f32 %v1494, 0.2
      %v2663 = vmul.f32 %v1499, 0.2
      %v2664 = vmul.f32 %v1502, 0.2
      %v2665 = vmul.f32 %v1507, 0.2
      %v2666 = vmul.f32 %v1510, 0.2
      %v2667 = vmul.f32 %v1515, 0.2
      %v2668 = vmul.f32 %v1518, 0.2
      %v2669 = vmul.f32 %v1523, 0.2
      %v2670 = vmul.f32 %v1526, 0.2
      %v2671 = vmul.f32 %v1531, 0.2
      %v2672 = vmul.f32 %v1534, 0.2
      %v2673 = vmul.f32 %v1539, 0.2
      %v2674 = vmul.f32 %v1542, 0.2
      %v2675 = vmul.f32 %v1547, 0.2
      %v2676 = vmul.f32 %v1550, 0.2
      %v2677 = vmul.f32 %v1555, 0.2
      %v2678 = vmul.f32 %v1558, 0.2
      %v2679 = vmul.f32 %v1563, 0.2
      %v2680 = vmul.f32 %v1566, 0.2
      %v2681 = vmul.f32 %v1571, 0.2
      %v2682 = vmul.f32 %v1574, 0.2
      %v2683 = vmul.f32 %v1579, 0.2
      %v2684 = vmul.f32 %v1582, 0.2
      %v2685 = vmul.f32 %v1587, 0.2
      %v2686 = vmul.f32 %v1590, 0.2
      %v2687 = vmul.f32 %v1595, 0.2
      %v2688 = vmul.f32 %v1598, 0.2
      %v2689 = vmul.f32 %v1603, 0.2
      %v2690 = vmul.f32 %v1606, 0.2
      %v2691 = vmul.f32 %v1611, 0.2
      %v2692 = vmul.f32 %v1614, 0.2
      %v2693 = vmul.f32 %v1619, 0.2
      %v2694 = vmul.f32 %v1622, 0.2
      %v2695 = vmul.f32 %v1627, 0.2
      %v2696 = vmul.f32 %v1630, 0.2
      %v2697 = vmul.f32 %v1635, 0.2
      %v2698 = vmul.f32 %v1638, 0.2
      %v2699 = vmul.f32 %v1643, 0.2
      %v2700 = vmul.f32 %v1646, 0.2
      %v2701 = vmul.f32 %v1651, 0.2
      %v2702 = vmul.f32 %v1654, 0.2
      %v2703 = vmul.f32 %v1659, 0.2
      %v2704 = vmul.f32 %v1662, 0.2
      %v2705 = vmul.f32 %v1667, 0.2
      %v2706 = vmul.f32 %v1670, 0.2
      %v2707 = vmul.f32 %v1675, 0.2
      %v2708 = vmul.f32 %v1678, 0.2
      %v2709 = vmul.f32 %v1683, 0.2
      %v2710 = vmul.f32 %v1686, 0.2
      %v2711 = vmul.f32 %v1691, 0.2
      %v2712 = vmul.f32 %v1694, 0.2
      %v2713 = vmul.f32 %v1699, 0.2
      %v2714 = vmul.f32 %v1702, 0.2
      %v2715 = vmul.f32 %v1707, 0.2
      %v2716 = vmul.f32 %v1710, 0.2
      %v2717 = vmul.f32 %v1715, 0.2
      %v2718 = vmul.f32 %v1718, 0.2
      %v2719 = vmul.f32 %v1723, 0.2
      %v2720 = vmul.f32 %v1726, 0.2
      %v2721 = vmul.f32 %v1731, 0.2
      %v2722 = vmul.f32 %v1734, 0.2
      %v2723 = vmul.f32 %v1739, 0.2
      %v2724 = vmul.f32 %v1742, 0.2
      %v2725 = vmul.f32 %v1747, 0.2
      %v2726 = vmul.f32 %v1750, 0.2
      %v2727 = vmul.f32 %v1755, 0.2
      %v2728 = vmul.f32 %v1758, 0.2
      %v2729 = vmul.f32 %v1763, 0.2
      %v2730 = vmul.f32 %v1766, 0.2
      %v2731 = vmul.f32 %v1771, 0.2
      %v2732 = vmul.f32 %v1774, 0.2
      %v2733 = vmul.f32 %v1779, 0.2
      %v2734 = vmul.f32 %v1782, 0.2
      %v2735 = vmul.f32 %v1787, 0.2
      %v2736 = vmul.f32 %v1790, 0.2
      %v2737 = vmul.f32 %v1795, 0.2
      %v2738 = vmul.f32 %v1798, 0.2
      %v2739 = vmul.f32 %v1803, 0.2
      %v2740 = vmul.f32 %v1806, 0.2
      %v2741 = vmul.f32 %v1811, 0.2
      %v2742 = vmul.f32 %v1814, 0.2
      %v2743 = vmul.f32 %v1819, 0.2
      %v2744 = vmul.f32 %v1822, 0.2
      %v2745 = vmul.f32 %v1827, 0.2
      %v2746 = vmul.f32 %v1830, 0.2
      %v2747 = vmul.f32 %v1835, 0.2
      %v2748 = vmul.f32 %v1838, 0.2
      %v2749 = vmul.f32 %v1843, 0.2
      %v2750 = vmul.f32 %v1846, 0.2
      %v2751 = vmul.f32 %v1851, 0.2
      %v2752 = vmul.f32 %v1854, 0.2
      %v2753 = vmul.f32 %v1859, 0.2
      %v2754 = vmul.f32 %v1862, 0.2
      %v2755 = vmul.f32 %v1867, 0.2
      %v2756 = vmul.f32 %v1870, 0.2
      %v2757 = vmul.f32 %v1875, 0.2
      %v2758 = vmul.f32 %v1878, 0.2
      %v2759 = vmul.f32 %v1883, 0.2
      %v2760 = vmul.f32 %v1886, 0.2
      %v2761 = vmul.f32 %v1891, 0.2
      %v2762 = vmul.f32 %v1894, 0.2
      %v2763 = vmul.f32 %v1899, 0.2
      %v2764 = vmul.f32 %v1902, 0.2
      %v2765 = vmul.f32 %v1907, 0.2
      %v2766 = vmul.f32 %v1910, 0.2
      %v2767 = vmul.f32 %v1915, 0.2
      %v2768 = vmul.f32 %v1918, 0.2
      %v2769 = vmul.f32 %v1923, 0.2
      %v2770 = vmul.f32 %v1926, 0.2
      %v2771 = vmul.f32 %v1931, 0.2
      %v2772 = vmul.f32 %v1934, 0.2
      %v2773 = vmul.f32 %v1939, 0.2
      %v2774 = vmul.f32 %v1942, 0.2
      %v2775 = vmul.f32 %v1947, 0.2
      %v2776 = vmul.f32 %v1950, 0.2
      %v2777 = vmul.f32 %v1955, 0.2
      %v2778 = vmul.f32 %v1958, 0.2
      %v2779 = vmul.f32 %v1963, 0.2
      %v2780 = vmul.f32 %v1966, 0.2
      %v2781 = vmul.f32 %v1971, 0.2
      %v2782 = vmul.f32 %v1974, 0.2
      %v2783 = vmul.f32 %v1979, 0.2
      %v2784 = vmul.f32 %v1982, 0.2
      %v2785 = vmul.f32 %v1987, 0.2
      %v2786 = vmul.f32 %v1990, 0.2
      %v2787 = vmul.f32 %v1995, 0.2
      %v2788 = vmul.f32 %v1998, 0.2
      %v2789 = vmul.f32 %v2003, 0.2
      %v2790 = vmul.f32 %v2006, 0.2
      %v2791 = vmul.f32 %v2011, 0.2
      %v2792 = vmul.f32 %v2014, 0.2
      %v2793 = vmul.f32 %v2019, 0.2
      %v2794 = vmul.f32 %v2022, 0.2
      %v2795 = vmul.f32 %v2027, 0.2
      %v2796 = vmul.f32 %v2030, 0.2
      %v2797 = vmul.f32 %v2035, 0.2
      %v2798 = vmul.f32 %v2038, 0.2
      %v2799 = vmul.f32 %v2043, 0.2
      %v2800 = vmul.f32 %v2046, 0.2
      %v2801 = vmul.f32 %v2051, 0.2
      %v2802 = vmul.f32 %v2054, 0.2
      %v2803 = vmul.f32 %v2059, 0.2
      %v2804 = vmul.f32 %v2062, 0.2
      %v2805 = vmul.f32 %v2067, 0.2
      %v2806 = vmul.f32 %v2070, 0.2
      %v2807 = vmul.f32 %v2075, 0.2
      %v2808 = vmul.f32 %v2078, 0.2
      %v2809 = vmul.f32 %v2083, 0.2
      %v2810 = vmul.f32 %v2086, 0.2
      %v2811 = vmul.f32 %v2091, 0.2
      %v2812 = vmul.f32 %v2094, 0.2
      %v2813 = vmul.f32 %v2099, 0.2
      %v2814 = vmul.f32 %v2102, 0.2
      %v2815 = vmul.f32 %v2107, 0.2
      %v2816 = vmul.f32 %v2110, 0.2
      %v2817 = vmul.f32 %v2115, 0.2
      %v2818 = vmul.f32 %v2118, 0.2
      %v2819 = vmul.f32 %v2123, 0.2
      %v2820 = vmul.f32 %v2126, 0.2
      %v2821 = vmul.f32 %v2131, 0.2
      %v2822 = vmul.f32 %v2134, 0.2
      %v2823 = vmul.f32 %v2139, 0.2
      %v2824 = vmul.f32 %v2142, 0.2
      %v2825 = vmul.f32 %v2147, 0.2
      %v2826 = vmul.f32 %v2150, 0.2
      %v2827 = vmul.f32 %v2155, 0.2
      %v2828 = vmul.f32 %v2158, 0.2
      %v2829 = vmul.f32 %v2163, 0.2
      %v2830 = vmul.f32 %v2166, 0.2
      %v2831 = vmul.f32 %v2171, 0.2
      %v2832 = vmul.f32 %v2174, 0.2
      %v2833 = vmul.f32 %v2179, 0.2
      %v2834 = vmul.f32 %v2182, 0.2
      %v2835 = vmul.f32 %v2187, 0.2
      %v2836 = vmul.f32 %v2190, 0.2
      %v2837 = vmul.f32 %v2195, 0.2
      %v2838 = vmul.f32 %v2198, 0.2
      %v2839 = vmul.f32 %v2203, 0.2
      %v2840 = vmul.f32 %v2206, 0.2
      %v2841 = vmul.f32 %v2211, 0.2
      %v2842 = vmul.f32 %v2214, 0.2
      %v2843 = vmul.f32 %v2219, 0.2
      %v2844 = vmul.f32 %v2222, 0.2
      %v2845 = vmul.f32 %v2227, 0.2
      %v2846 = vmul.f32 %v2230, 0.2
      %v2847 = vmul.f32 %v2235, 0.2
      %v2848 = vmul.f32 %v2238, 0.2
      %v2849 = vmul.f32 %v2243, 0.2
      %v2850 = vmul.f32 %v2246, 0.2
      %v2851 = vmul.f32 %v2251, 0.2
      %v2852 = vmul.f32 %v2254, 0.2
      %v2853 = vmul.f32 %v2259, 0.2
      %v2854 = vmul.f32 %v2262, 0.2
      %v2855 = vmul.f32 %v2267, 0.2
      %v2856 = vmul.f32 %v2270, 0.2
      %v2857 = vmul.f32 %v2275, 0.2
      %v2858 = vmul.f32 %v2278, 0.2
      %v2859 = vmul.f32 %v2283, 0.2
      %v2860 = vmul.f32 %v2286, 0.2
      %v2861 = vmul.f32 %v2291, 0.2
      %v2862 = vmul.f32 %v2294, 0.2
      %v2863 = vmul.f32 %v2299, 0.2
      %v2864 = vmul.f32 %v2302, 0.2
      %v2865 = vmul.f32 %v2307, 0.2
      %v2866 = vmul.f32 %v2310, 0.2
      %v2867 = vmul.f32 %v2315, 0.2
      %v2868 = vmul.f32 %v2318, 0.2
      %v2869 = vmul.f32 %v2323, 0.2
      %v2870 = vmul.f32 %v2326, 0.2
      %v2871 = vmul.f32 %v2331, 0.2
      %v2872 = vmul.f32 %v2334, 0.2
      %v2873 = vmul.f32 %v2339, 0.2
      %v2874 = vmul.f32 %v2342, 0.2
      %v2875 = vmul.f32 %v2347, 0.2
      %v2876 = vmul.f32 %v2350, 0.2
      %v2877 = vmul.f32 %v2355, 0.2
      %v2878 = vmul.f32 %v2358, 0.2
      %v2879 = vmul.f32 %v2363, 0.2
      %v2880 = vmul.f32 %v2366, 0.2
      %v2881 = vsel %vm2369, %v1347, %v2625
      %v2882 = vsel %vm2370, %v1350, %v2626
      %v2883 = vsel %vm2371, %v1355, %v2627
      %v2884 = vsel %vm2372, %v1358, %v2628
      %v2885 = vsel %vm2373, %v1363, %v2629
      %v2886 = vsel %vm2374, %v1366, %v2630
      %v2887 = vsel %vm2375, %v1371, %v2631
      %v2888 = vsel %vm2376, %v1374, %v2632
      %v2889 = vsel %vm2377, %v1379, %v2633
      %v2890 = vsel %vm2378, %v1382, %v2634
      %v2891 = vsel %vm2379, %v1387, %v2635
      %v2892 = vsel %vm2380, %v1390, %v2636
      %v2893 = vsel %vm2381, %v1395, %v2637
      %v2894 = vsel %vm2382, %v1398, %v2638
      %v2895 = vsel %vm2383, %v1403, %v2639
      %v2896 = vsel %vm2384, %v1406, %v2640
      %v2897 = vsel %vm2385, %v1411, %v2641
      %v2898 = vsel %vm2386, %v1414, %v2642
      %v2899 = vsel %vm2387, %v1419, %v2643
      %v2900 = vsel %vm2388, %v1422, %v2644
      %v2901 = vsel %vm2389, %v1427, %v2645
      %v2902 = vsel %vm2390, %v1430, %v2646
      %v2903 = vsel %vm2391, %v1435, %v2647
      %v2904 = vsel %vm2392, %v1438, %v2648
      %v2905 = vsel %vm2393, %v1443, %v2649
      %v2906 = vsel %vm2394, %v1446, %v2650
      %v2907 = vsel %vm2395, %v1451, %v2651
      %v2908 = vsel %vm2396, %v1454, %v2652
      %v2909 = vsel %vm2397, %v1459, %v2653
      %v2910 = vsel %vm2398, %v1462, %v2654
      %v2911 = vsel %vm2399, %v1467, %v2655
      %v2912 = vsel %vm2400, %v1470, %v2656
      %v2913 = vsel %vm2401, %v1475, %v2657
      %v2914 = vsel %vm2402, %v1478, %v2658
      %v2915 = vsel %vm2403, %v1483, %v2659
      %v2916 = vsel %vm2404, %v1486, %v2660
      %v2917 = vsel %vm2405, %v1491, %v2661
      %v2918 = vsel %vm2406, %v1494, %v2662
      %v2919 = vsel %vm2407, %v1499, %v2663
      %v2920 = vsel %vm2408, %v1502, %v2664
      %v2921 = vsel %vm2409, %v1507, %v2665
      %v2922 = vsel %vm2410, %v1510, %v2666
      %v2923 = vsel %vm2411, %v1515, %v2667
      %v2924 = vsel %vm2412, %v1518, %v2668
      %v2925 = vsel %vm2413, %v1523, %v2669
      %v2926 = vsel %vm2414, %v1526, %v2670
      %v2927 = vsel %vm2415, %v1531, %v2671
      %v2928 = vsel %vm2416, %v1534, %v2672
      %v2929 = vsel %vm2417, %v1539, %v2673
      %v2930 = vsel %vm2418, %v1542, %v2674
      %v2931 = vsel %vm2419, %v1547, %v2675
      %v2932 = vsel %vm2420, %v1550, %v2676
      %v2933 = vsel %vm2421, %v1555, %v2677
      %v2934 = vsel %vm2422, %v1558, %v2678
      %v2935 = vsel %vm2423, %v1563, %v2679
      %v2936 = vsel %vm2424, %v1566, %v2680
      %v2937 = vsel %vm2425, %v1571, %v2681
      %v2938 = vsel %vm2426, %v1574, %v2682
      %v2939 = vsel %vm2427, %v1579, %v2683
      %v2940 = vsel %vm2428, %v1582, %v2684
      %v2941 = vsel %vm2429, %v1587, %v2685
      %v2942 = vsel %vm2430, %v1590, %v2686
      %v2943 = vsel %vm2431, %v1595, %v2687
      %v2944 = vsel %vm2432, %v1598, %v2688
      %v2945 = vsel %vm2433, %v1603, %v2689
      %v2946 = vsel %vm2434, %v1606, %v2690
      %v2947 = vsel %vm2435, %v1611, %v2691
      %v2948 = vsel %vm2436, %v1614, %v2692
      %v2949 = vsel %vm2437, %v1619, %v2693
      %v2950 = vsel %vm2438, %v1622, %v2694
      %v2951 = vsel %vm2439, %v1627, %v2695
      %v2952 = vsel %vm2440, %v1630, %v2696
      %v2953 = vsel %vm2441, %v1635, %v2697
      %v2954 = vsel %vm2442, %v1638, %v2698
      %v2955 = vsel %vm2443, %v1643, %v2699
      %v2956 = vsel %vm2444, %v1646, %v2700
      %v2957 = vsel %vm2445, %v1651, %v2701
      %v2958 = vsel %vm2446, %v1654, %v2702
      %v2959 = vsel %vm2447, %v1659, %v2703
      %v2960 = vsel %vm2448, %v1662, %v2704
      %v2961 = vsel %vm2449, %v1667, %v2705
      %v2962 = vsel %vm2450, %v1670, %v2706
      %v2963 = vsel %vm2451, %v1675, %v2707
      %v2964 = vsel %vm2452, %v1678, %v2708
      %v2965 = vsel %vm2453, %v1683, %v2709
      %v2966 = vsel %vm2454, %v1686, %v2710
      %v2967 = vsel %vm2455, %v1691, %v2711
      %v2968 = vsel %vm2456, %v1694, %v2712
      %v2969 = vsel %vm2457, %v1699, %v2713
      %v2970 = vsel %vm2458, %v1702, %v2714
      %v2971 = vsel %vm2459, %v1707, %v2715
      %v2972 = vsel %vm2460, %v1710, %v2716
      %v2973 = vsel %vm2461, %v1715, %v2717
      %v2974 = vsel %vm2462, %v1718, %v2718
      %v2975 = vsel %vm2463, %v1723, %v2719
      %v2976 = vsel %vm2464, %v1726, %v2720
      %v2977 = vsel %vm2465, %v1731, %v2721
      %v2978 = vsel %vm2466, %v1734, %v2722
      %v2979 = vsel %vm2467, %v1739, %v2723
      %v2980 = vsel %vm2468, %v1742, %v2724
      %v2981 = vsel %vm2469, %v1747, %v2725
      %v2982 = vsel %vm2470, %v1750, %v2726
      %v2983 = vsel %vm2471, %v1755, %v2727
      %v2984 = vsel %vm2472, %v1758, %v2728
      %v2985 = vsel %vm2473, %v1763, %v2729
      %v2986 = vsel %vm2474, %v1766, %v2730
      %v2987 = vsel %vm2475, %v1771, %v2731
      %v2988 = vsel %vm2476, %v1774, %v2732
      %v2989 = vsel %vm2477, %v1779, %v2733
      %v2990 = vsel %vm2478, %v1782, %v2734
      %v2991 = vsel %vm2479, %v1787, %v2735
      %v2992 = vsel %vm2480, %v1790, %v2736
      %v2993 = vsel %vm2481, %v1795, %v2737
      %v2994 = vsel %vm2482, %v1798, %v2738
      %v2995 = vsel %vm2483, %v1803, %v2739
      %v2996 = vsel %vm2484, %v1806, %v2740
      %v2997 = vsel %vm2485, %v1811, %v2741
      %v2998 = vsel %vm2486, %v1814, %v2742
      %v2999 = vsel %vm2487, %v1819, %v2743
      %v3000 = vsel %vm2488, %v1822, %v2744
      %v3001 = vsel %vm2489, %v1827, %v2745
      %v3002 = vsel %vm2490, %v1830, %v2746
      %v3003 = vsel %vm2491, %v1835, %v2747
      %v3004 = vsel %vm2492, %v1838, %v2748
      %v3005 = vsel %vm2493, %v1843, %v2749
      %v3006 = vsel %vm2494, %v1846, %v2750
      %v3007 = vsel %vm2495, %v1851, %v2751
      %v3008 = vsel %vm2496, %v1854, %v2752
      %v3009 = vsel %vm2497, %v1859, %v2753
      %v3010 = vsel %vm2498, %v1862, %v2754
      %v3011 = vsel %vm2499, %v1867, %v2755
      %v3012 = vsel %vm2500, %v1870, %v2756
      %v3013 = vsel %vm2501, %v1875, %v2757
      %v3014 = vsel %vm2502, %v1878, %v2758
      %v3015 = vsel %vm2503, %v1883, %v2759
      %v3016 = vsel %vm2504, %v1886, %v2760
      %v3017 = vsel %vm2505, %v1891, %v2761
      %v3018 = vsel %vm2506, %v1894, %v2762
      %v3019 = vsel %vm2507, %v1899, %v2763
      %v3020 = vsel %vm2508, %v1902, %v2764
      %v3021 = vsel %vm2509, %v1907, %v2765
      %v3022 = vsel %vm2510, %v1910, %v2766
      %v3023 = vsel %vm2511, %v1915, %v2767
      %v3024 = vsel %vm2512, %v1918, %v2768
      %v3025 = vsel %vm2513, %v1923, %v2769
      %v3026 = vsel %vm2514, %v1926, %v2770
      %v3027 = vsel %vm2515, %v1931, %v2771
      %v3028 = vsel %vm2516, %v1934, %v2772
      %v3029 = vsel %vm2517, %v1939, %v2773
      %v3030 = vsel %vm2518, %v1942, %v2774
      %v3031 = vsel %vm2519, %v1947, %v2775
      %v3032 = vsel %vm2520, %v1950, %v2776
      %v3033 = vsel %vm2521, %v1955, %v2777
      %v3034 = vsel %vm2522, %v1958, %v2778
      %v3035 = vsel %vm2523, %v1963, %v2779
      %v3036 = vsel %vm2524, %v1966, %v2780
      %v3037 = vsel %vm2525, %v1971, %v2781
      %v3038 = vsel %vm2526, %v1974, %v2782
      %v3039 = vsel %vm2527, %v1979, %v2783
      %v3040 = vsel %vm2528, %v1982, %v2784
      %v3041 = vsel %vm2529, %v1987, %v2785
      %v3042 = vsel %vm2530, %v1990, %v2786
      %v3043 = vsel %vm2531, %v1995, %v2787
      %v3044 = vsel %vm2532, %v1998, %v2788
      %v3045 = vsel %vm2533, %v2003, %v2789
      %v3046 = vsel %vm2534, %v2006, %v2790
      %v3047 = vsel %vm2535, %v2011, %v2791
      %v3048 = vsel %vm2536, %v2014, %v2792
      %v3049 = vsel %vm2537, %v2019, %v2793
      %v3050 = vsel %vm2538, %v2022, %v2794
      %v3051 = vsel %vm2539, %v2027, %v2795
      %v3052 = vsel %vm2540, %v2030, %v2796
      %v3053 = vsel %vm2541, %v2035, %v2797
      %v3054 = vsel %vm2542, %v2038, %v2798
      %v3055 = vsel %vm2543, %v2043, %v2799
      %v3056 = vsel %vm2544, %v2046, %v2800
      %v3057 = vsel %vm2545, %v2051, %v2801
      %v3058 = vsel %vm2546, %v2054, %v2802
      %v3059 = vsel %vm2547, %v2059, %v2803
      %v3060 = vsel %vm2548, %v2062, %v2804
      %v3061 = vsel %vm2549, %v2067, %v2805
      %v3062 = vsel %vm2550, %v2070, %v2806
      %v3063 = vsel %vm2551, %v2075, %v2807
      %v3064 = vsel %vm2552, %v2078, %v2808
      %v3065 = vsel %vm2553, %v2083, %v2809
      %v3066 = vsel %vm2554, %v2086, %v2810
      %v3067 = vsel %vm2555, %v2091, %v2811
      %v3068 = vsel %vm2556, %v2094, %v2812
      %v3069 = vsel %vm2557, %v2099, %v2813
      %v3070 = vsel %vm2558, %v2102, %v2814
      %v3071 = vsel %vm2559, %v2107, %v2815
      %v3072 = vsel %vm2560, %v2110, %v2816
      %v3073 = vsel %vm2561, %v2115, %v2817
      %v3074 = vsel %vm2562, %v2118, %v2818
      %v3075 = vsel %vm2563, %v2123, %v2819
      %v3076 = vsel %vm2564, %v2126, %v2820
      %v3077 = vsel %vm2565, %v2131, %v2821
      %v3078 = vsel %vm2566, %v2134, %v2822
      %v3079 = vsel %vm2567, %v2139, %v2823
      %v3080 = vsel %vm2568, %v2142, %v2824
      %v3081 = vsel %vm2569, %v2147, %v2825
      %v3082 = vsel %vm2570, %v2150, %v2826
      %v3083 = vsel %vm2571, %v2155, %v2827
      %v3084 = vsel %vm2572, %v2158, %v2828
      %v3085 = vsel %vm2573, %v2163, %v2829
      %v3086 = vsel %vm2574, %v2166, %v2830
      %v3087 = vsel %vm2575, %v2171, %v2831
      %v3088 = vsel %vm2576, %v2174, %v2832
      %v3089 = vsel %vm2577, %v2179, %v2833
      %v3090 = vsel %vm2578, %v2182, %v2834
      %v3091 = vsel %vm2579, %v2187, %v2835
      %v3092 = vsel %vm2580, %v2190, %v2836
      %v3093 = vsel %vm2581, %v2195, %v2837
      %v3094 = vsel %vm2582, %v2198, %v2838
      %v3095 = vsel %vm2583, %v2203, %v2839
      %v3096 = vsel %vm2584, %v2206, %v2840
      %v3097 = vsel %vm2585, %v2211, %v2841
      %v3098 = vsel %vm2586, %v2214, %v2842
      %v3099 = vsel %vm2587, %v2219, %v2843
      %v3100 = vsel %vm2588, %v2222, %v2844
      %v3101 = vsel %vm2589, %v2227, %v2845
      %v3102 = vsel %vm2590, %v2230, %v2846
      %v3103 = vsel %vm2591, %v2235, %v2847
      %v3104 = vsel %vm2592, %v2238, %v2848
      %v3105 = vsel %vm2593, %v2243, %v2849
      %v3106 = vsel %vm2594, %v2246, %v2850
      %v3107 = vsel %vm2595, %v2251, %v2851
      %v3108 = vsel %vm2596, %v2254, %v2852
      %v3109 = vsel %vm2597, %v2259, %v2853
      %v3110 = vsel %vm2598, %v2262, %v2854
      %v3111 = vsel %vm2599, %v2267, %v2855
      %v3112 = vsel %vm2600, %v2270, %v2856
      %v3113 = vsel %vm2601, %v2275, %v2857
      %v3114 = vsel %vm2602, %v2278, %v2858
      %v3115 = vsel %vm2603, %v2283, %v2859
      %v3116 = vsel %vm2604, %v2286, %v2860
      %v3117 = vsel %vm2605, %v2291, %v2861
      %v3118 = vsel %vm2606, %v2294, %v2862
      %v3119 = vsel %vm2607, %v2299, %v2863
      %v3120 = vsel %vm2608, %v2302, %v2864
      %v3121 = vsel %vm2609, %v2307, %v2865
      %v3122 = vsel %vm2610, %v2310, %v2866
      %v3123 = vsel %vm2611, %v2315, %v2867
      %v3124 = vsel %vm2612, %v2318, %v2868
      %v3125 = vsel %vm2613, %v2323, %v2869
      %v3126 = vsel %vm2614, %v2326, %v2870
      %v3127 = vsel %vm2615, %v2331, %v2871
      %v3128 = vsel %vm2616, %v2334, %v2872
      %v3129 = vsel %vm2617, %v2339, %v2873
      %v3130 = vsel %vm2618, %v2342, %v2874
      %v3131 = vsel %vm2619, %v2347, %v2875
      %v3132 = vsel %vm2620, %v2350, %v2876
      %v3133 = vsel %vm2621, %v2355, %v2877
      %v3134 = vsel %vm2622, %v2358, %v2878
      %v3135 = vsel %vm2623, %v2363, %v2879
      %v3136 = vsel %vm2624, %v2366, %v2880
      %v3137 = vrot.slane %v2881, 4
      %v3138 = vadd.f32 %v2881, %v3137
      %v3139 = vrot.slane %v3138, 2
      %v3140 = vadd.f32 %v3138, %v3139
      %v3141 = vrot.slane %v3140, 1
      %v3142 = vadd.f32 %v3140, %v3141
      %v3143 = vrot.slane %v2882, 4
      %v3144 = vadd.f32 %v2882, %v3143
      %v3145 = vrot.slane %v3144, 2
      %v3146 = vadd.f32 %v3144, %v3145
      %v3147 = vrot.slane %v3146, 1
      %v3148 = vadd.f32 %v3146, %v3147
      %v3149 = vrot.slane %v2883, 4
      %v3150 = vadd.f32 %v2883, %v3149
      %v3151 = vrot.slane %v3150, 2
      %v3152 = vadd.f32 %v3150, %v3151
      %v3153 = vrot.slane %v3152, 1
      %v3154 = vadd.f32 %v3152, %v3153
      %v3155 = vrot.slane %v2884, 4
      %v3156 = vadd.f32 %v2884, %v3155
      %v3157 = vrot.slane %v3156, 2
      %v3158 = vadd.f32 %v3156, %v3157
      %v3159 = vrot.slane %v3158, 1
      %v3160 = vadd.f32 %v3158, %v3159
      %v3161 = vrot.slane %v2885, 4
      %v3162 = vadd.f32 %v2885, %v3161
      %v3163 = vrot.slane %v3162, 2
      %v3164 = vadd.f32 %v3162, %v3163
      %v3165 = vrot.slane %v3164, 1
      %v3166 = vadd.f32 %v3164, %v3165
      %v3167 = vrot.slane %v2886, 4
      %v3168 = vadd.f32 %v2886, %v3167
      %v3169 = vrot.slane %v3168, 2
      %v3170 = vadd.f32 %v3168, %v3169
      %v3171 = vrot.slane %v3170, 1
      %v3172 = vadd.f32 %v3170, %v3171
      %v3173 = vrot.slane %v2887, 4
      %v3174 = vadd.f32 %v2887, %v3173
      %v3175 = vrot.slane %v3174, 2
      %v3176 = vadd.f32 %v3174, %v3175
      %v3177 = vrot.slane %v3176, 1
      %v3178 = vadd.f32 %v3176, %v3177
      %v3179 = vrot.slane %v2888, 4
      %v3180 = vadd.f32 %v2888, %v3179
      %v3181 = vrot.slane %v3180, 2
      %v3182 = vadd.f32 %v3180, %v3181
      %v3183 = vrot.slane %v3182, 1
      %v3184 = vadd.f32 %v3182, %v3183
      %v3185 = vrot.slane %v2889, 4
      %v3186 = vadd.f32 %v2889, %v3185
      %v3187 = vrot.slane %v3186, 2
      %v3188 = vadd.f32 %v3186, %v3187
      %v3189 = vrot.slane %v3188, 1
      %v3190 = vadd.f32 %v3188, %v3189
      %v3191 = vrot.slane %v2890, 4
      %v3192 = vadd.f32 %v2890, %v3191
      %v3193 = vrot.slane %v3192, 2
      %v3194 = vadd.f32 %v3192, %v3193
      %v3195 = vrot.slane %v3194, 1
      %v3196 = vadd.f32 %v3194, %v3195
      %v3197 = vrot.slane %v2891, 4
      %v3198 = vadd.f32 %v2891, %v3197
      %v3199 = vrot.slane %v3198, 2
      %v3200 = vadd.f32 %v3198, %v3199
      %v3201 = vrot.slane %v3200, 1
      %v3202 = vadd.f32 %v3200, %v3201
      %v3203 = vrot.slane %v2892, 4
      %v3204 = vadd.f32 %v2892, %v3203
      %v3205 = vrot.slane %v3204, 2
      %v3206 = vadd.f32 %v3204, %v3205
      %v3207 = vrot.slane %v3206, 1
      %v3208 = vadd.f32 %v3206, %v3207
      %v3209 = vrot.slane %v2893, 4
      %v3210 = vadd.f32 %v2893, %v3209
      %v3211 = vrot.slane %v3210, 2
      %v3212 = vadd.f32 %v3210, %v3211
      %v3213 = vrot.slane %v3212, 1
      %v3214 = vadd.f32 %v3212, %v3213
      %v3215 = vrot.slane %v2894, 4
      %v3216 = vadd.f32 %v2894, %v3215
      %v3217 = vrot.slane %v3216, 2
      %v3218 = vadd.f32 %v3216, %v3217
      %v3219 = vrot.slane %v3218, 1
      %v3220 = vadd.f32 %v3218, %v3219
      %v3221 = vrot.slane %v2895, 4
      %v3222 = vadd.f32 %v2895, %v3221
      %v3223 = vrot.slane %v3222, 2
      %v3224 = vadd.f32 %v3222, %v3223
      %v3225 = vrot.slane %v3224, 1
      %v3226 = vadd.f32 %v3224, %v3225
      %v3227 = vrot.slane %v2896, 4
      %v3228 = vadd.f32 %v2896, %v3227
      %v3229 = vrot.slane %v3228, 2
      %v3230 = vadd.f32 %v3228, %v3229
      %v3231 = vrot.slane %v3230, 1
      %v3232 = vadd.f32 %v3230, %v3231
      %v3233 = vrot.slane %v2897, 4
      %v3234 = vadd.f32 %v2897, %v3233
      %v3235 = vrot.slane %v3234, 2
      %v3236 = vadd.f32 %v3234, %v3235
      %v3237 = vrot.slane %v3236, 1
      %v3238 = vadd.f32 %v3236, %v3237
      %v3239 = vrot.slane %v2898, 4
      %v3240 = vadd.f32 %v2898, %v3239
      %v3241 = vrot.slane %v3240, 2
      %v3242 = vadd.f32 %v3240, %v3241
      %v3243 = vrot.slane %v3242, 1
      %v3244 = vadd.f32 %v3242, %v3243
      %v3245 = vrot.slane %v2899, 4
      %v3246 = vadd.f32 %v2899, %v3245
      %v3247 = vrot.slane %v3246, 2
      %v3248 = vadd.f32 %v3246, %v3247
      %v3249 = vrot.slane %v3248, 1
      %v3250 = vadd.f32 %v3248, %v3249
      %v3251 = vrot.slane %v2900, 4
      %v3252 = vadd.f32 %v2900, %v3251
      %v3253 = vrot.slane %v3252, 2
      %v3254 = vadd.f32 %v3252, %v3253
      %v3255 = vrot.slane %v3254, 1
      %v3256 = vadd.f32 %v3254, %v3255
      %v3257 = vrot.slane %v2901, 4
      %v3258 = vadd.f32 %v2901, %v3257
      %v3259 = vrot.slane %v3258, 2
      %v3260 = vadd.f32 %v3258, %v3259
      %v3261 = vrot.slane %v3260, 1
      %v3262 = vadd.f32 %v3260, %v3261
      %v3263 = vrot.slane %v2902, 4
      %v3264 = vadd.f32 %v2902, %v3263
      %v3265 = vrot.slane %v3264, 2
      %v3266 = vadd.f32 %v3264, %v3265
      %v3267 = vrot.slane %v3266, 1
      %v3268 = vadd.f32 %v3266, %v3267
      %v3269 = vrot.slane %v2903, 4
      %v3270 = vadd.f32 %v2903, %v3269
      %v3271 = vrot.slane %v3270, 2
      %v3272 = vadd.f32 %v3270, %v3271
      %v3273 = vrot.slane %v3272, 1
      %v3274 = vadd.f32 %v3272, %v3273
      %v3275 = vrot.slane %v2904, 4
      %v3276 = vadd.f32 %v2904, %v3275
      %v3277 = vrot.slane %v3276, 2
      %v3278 = vadd.f32 %v3276, %v3277
      %v3279 = vrot.slane %v3278, 1
      %v3280 = vadd.f32 %v3278, %v3279
      %v3281 = vrot.slane %v2905, 4
      %v3282 = vadd.f32 %v2905, %v3281
      %v3283 = vrot.slane %v3282, 2
      %v3284 = vadd.f32 %v3282, %v3283
      %v3285 = vrot.slane %v3284, 1
      %v3286 = vadd.f32 %v3284, %v3285
      %v3287 = vrot.slane %v2906, 4
      %v3288 = vadd.f32 %v2906, %v3287
      %v3289 = vrot.slane %v3288, 2
      %v3290 = vadd.f32 %v3288, %v3289
      %v3291 = vrot.slane %v3290, 1
      %v3292 = vadd.f32 %v3290, %v3291
      %v3293 = vrot.slane %v2907, 4
      %v3294 = vadd.f32 %v2907, %v3293
      %v3295 = vrot.slane %v3294, 2
      %v3296 = vadd.f32 %v3294, %v3295
      %v3297 = vrot.slane %v3296, 1
      %v3298 = vadd.f32 %v3296, %v3297
      %v3299 = vrot.slane %v2908, 4
      %v3300 = vadd.f32 %v2908, %v3299
      %v3301 = vrot.slane %v3300, 2
      %v3302 = vadd.f32 %v3300, %v3301
      %v3303 = vrot.slane %v3302, 1
      %v3304 = vadd.f32 %v3302, %v3303
      %v3305 = vrot.slane %v2909, 4
      %v3306 = vadd.f32 %v2909, %v3305
      %v3307 = vrot.slane %v3306, 2
      %v3308 = vadd.f32 %v3306, %v3307
      %v3309 = vrot.slane %v3308, 1
      %v3310 = vadd.f32 %v3308, %v3309
      %v3311 = vrot.slane %v2910, 4
      %v3312 = vadd.f32 %v2910, %v3311
      %v3313 = vrot.slane %v3312, 2
      %v3314 = vadd.f32 %v3312, %v3313
      %v3315 = vrot.slane %v3314, 1
      %v3316 = vadd.f32 %v3314, %v3315
      %v3317 = vrot.slane %v2911, 4
      %v3318 = vadd.f32 %v2911, %v3317
      %v3319 = vrot.slane %v3318, 2
      %v3320 = vadd.f32 %v3318, %v3319
      %v3321 = vrot.slane %v3320, 1
      %v3322 = vadd.f32 %v3320, %v3321
      %v3323 = vrot.slane %v2912, 4
      %v3324 = vadd.f32 %v2912, %v3323
      %v3325 = vrot.slane %v3324, 2
      %v3326 = vadd.f32 %v3324, %v3325
      %v3327 = vrot.slane %v3326, 1
      %v3328 = vadd.f32 %v3326, %v3327
      %v3329 = vrot.slane %v2913, 4
      %v3330 = vadd.f32 %v2913, %v3329
      %v3331 = vrot.slane %v3330, 2
      %v3332 = vadd.f32 %v3330, %v3331
      %v3333 = vrot.slane %v3332, 1
      %v3334 = vadd.f32 %v3332, %v3333
      %v3335 = vrot.slane %v2914, 4
      %v3336 = vadd.f32 %v2914, %v3335
      %v3337 = vrot.slane %v3336, 2
      %v3338 = vadd.f32 %v3336, %v3337
      %v3339 = vrot.slane %v3338, 1
      %v3340 = vadd.f32 %v3338, %v3339
      %v3341 = vrot.slane %v2915, 4
      %v3342 = vadd.f32 %v2915, %v3341
      %v3343 = vrot.slane %v3342, 2
      %v3344 = vadd.f32 %v3342, %v3343
      %v3345 = vrot.slane %v3344, 1
      %v3346 = vadd.f32 %v3344, %v3345
      %v3347 = vrot.slane %v2916, 4
      %v3348 = vadd.f32 %v2916, %v3347
      %v3349 = vrot.slane %v3348, 2
      %v3350 = vadd.f32 %v3348, %v3349
      %v3351 = vrot.slane %v3350, 1
      %v3352 = vadd.f32 %v3350, %v3351
      %v3353 = vrot.slane %v2917, 4
      %v3354 = vadd.f32 %v2917, %v3353
      %v3355 = vrot.slane %v3354, 2
      %v3356 = vadd.f32 %v3354, %v3355
      %v3357 = vrot.slane %v3356, 1
      %v3358 = vadd.f32 %v3356, %v3357
      %v3359 = vrot.slane %v2918, 4
      %v3360 = vadd.f32 %v2918, %v3359
      %v3361 = vrot.slane %v3360, 2
      %v3362 = vadd.f32 %v3360, %v3361
      %v3363 = vrot.slane %v3362, 1
      %v3364 = vadd.f32 %v3362, %v3363
      %v3365 = vrot.slane %v2919, 4
      %v3366 = vadd.f32 %v2919, %v3365
      %v3367 = vrot.slane %v3366, 2
      %v3368 = vadd.f32 %v3366, %v3367
      %v3369 = vrot.slane %v3368, 1
      %v3370 = vadd.f32 %v3368, %v3369
      %v3371 = vrot.slane %v2920, 4
      %v3372 = vadd.f32 %v2920, %v3371
      %v3373 = vrot.slane %v3372, 2
      %v3374 = vadd.f32 %v3372, %v3373
      %v3375 = vrot.slane %v3374, 1
      %v3376 = vadd.f32 %v3374, %v3375
      %v3377 = vrot.slane %v2921, 4
      %v3378 = vadd.f32 %v2921, %v3377
      %v3379 = vrot.slane %v3378, 2
      %v3380 = vadd.f32 %v3378, %v3379
      %v3381 = vrot.slane %v3380, 1
      %v3382 = vadd.f32 %v3380, %v3381
      %v3383 = vrot.slane %v2922, 4
      %v3384 = vadd.f32 %v2922, %v3383
      %v3385 = vrot.slane %v3384, 2
      %v3386 = vadd.f32 %v3384, %v3385
      %v3387 = vrot.slane %v3386, 1
      %v3388 = vadd.f32 %v3386, %v3387
      %v3389 = vrot.slane %v2923, 4
      %v3390 = vadd.f32 %v2923, %v3389
      %v3391 = vrot.slane %v3390, 2
      %v3392 = vadd.f32 %v3390, %v3391
      %v3393 = vrot.slane %v3392, 1
      %v3394 = vadd.f32 %v3392, %v3393
      %v3395 = vrot.slane %v2924, 4
      %v3396 = vadd.f32 %v2924, %v3395
      %v3397 = vrot.slane %v3396, 2
      %v3398 = vadd.f32 %v3396, %v3397
      %v3399 = vrot.slane %v3398, 1
      %v3400 = vadd.f32 %v3398, %v3399
      %v3401 = vrot.slane %v2925, 4
      %v3402 = vadd.f32 %v2925, %v3401
      %v3403 = vrot.slane %v3402, 2
      %v3404 = vadd.f32 %v3402, %v3403
      %v3405 = vrot.slane %v3404, 1
      %v3406 = vadd.f32 %v3404, %v3405
      %v3407 = vrot.slane %v2926, 4
      %v3408 = vadd.f32 %v2926, %v3407
      %v3409 = vrot.slane %v3408, 2
      %v3410 = vadd.f32 %v3408, %v3409
      %v3411 = vrot.slane %v3410, 1
      %v3412 = vadd.f32 %v3410, %v3411
      %v3413 = vrot.slane %v2927, 4
      %v3414 = vadd.f32 %v2927, %v3413
      %v3415 = vrot.slane %v3414, 2
      %v3416 = vadd.f32 %v3414, %v3415
      %v3417 = vrot.slane %v3416, 1
      %v3418 = vadd.f32 %v3416, %v3417
      %v3419 = vrot.slane %v2928, 4
      %v3420 = vadd.f32 %v2928, %v3419
      %v3421 = vrot.slane %v3420, 2
      %v3422 = vadd.f32 %v3420, %v3421
      %v3423 = vrot.slane %v3422, 1
      %v3424 = vadd.f32 %v3422, %v3423
      %v3425 = vrot.slane %v2929, 4
      %v3426 = vadd.f32 %v2929, %v3425
      %v3427 = vrot.slane %v3426, 2
      %v3428 = vadd.f32 %v3426, %v3427
      %v3429 = vrot.slane %v3428, 1
      %v3430 = vadd.f32 %v3428, %v3429
      %v3431 = vrot.slane %v2930, 4
      %v3432 = vadd.f32 %v2930, %v3431
      %v3433 = vrot.slane %v3432, 2
      %v3434 = vadd.f32 %v3432, %v3433
      %v3435 = vrot.slane %v3434, 1
      %v3436 = vadd.f32 %v3434, %v3435
      %v3437 = vrot.slane %v2931, 4
      %v3438 = vadd.f32 %v2931, %v3437
      %v3439 = vrot.slane %v3438, 2
      %v3440 = vadd.f32 %v3438, %v3439
      %v3441 = vrot.slane %v3440, 1
      %v3442 = vadd.f32 %v3440, %v3441
      %v3443 = vrot.slane %v2932, 4
      %v3444 = vadd.f32 %v2932, %v3443
      %v3445 = vrot.slane %v3444, 2
      %v3446 = vadd.f32 %v3444, %v3445
      %v3447 = vrot.slane %v3446, 1
      %v3448 = vadd.f32 %v3446, %v3447
      %v3449 = vrot.slane %v2933, 4
      %v3450 = vadd.f32 %v2933, %v3449
      %v3451 = vrot.slane %v3450, 2
      %v3452 = vadd.f32 %v3450, %v3451
      %v3453 = vrot.slane %v3452, 1
      %v3454 = vadd.f32 %v3452, %v3453
      %v3455 = vrot.slane %v2934, 4
      %v3456 = vadd.f32 %v2934, %v3455
      %v3457 = vrot.slane %v3456, 2
      %v3458 = vadd.f32 %v3456, %v3457
      %v3459 = vrot.slane %v3458, 1
      %v3460 = vadd.f32 %v3458, %v3459
      %v3461 = vrot.slane %v2935, 4
      %v3462 = vadd.f32 %v2935, %v3461
      %v3463 = vrot.slane %v3462, 2
      %v3464 = vadd.f32 %v3462, %v3463
      %v3465 = vrot.slane %v3464, 1
      %v3466 = vadd.f32 %v3464, %v3465
      %v3467 = vrot.slane %v2936, 4
      %v3468 = vadd.f32 %v2936, %v3467
      %v3469 = vrot.slane %v3468, 2
      %v3470 = vadd.f32 %v3468, %v3469
      %v3471 = vrot.slane %v3470, 1
      %v3472 = vadd.f32 %v3470, %v3471
      %v3473 = vrot.slane %v2937, 4
      %v3474 = vadd.f32 %v2937, %v3473
      %v3475 = vrot.slane %v3474, 2
      %v3476 = vadd.f32 %v3474, %v3475
      %v3477 = vrot.slane %v3476, 1
      %v3478 = vadd.f32 %v3476, %v3477
      %v3479 = vrot.slane %v2938, 4
      %v3480 = vadd.f32 %v2938, %v3479
      %v3481 = vrot.slane %v3480, 2
      %v3482 = vadd.f32 %v3480, %v3481
      %v3483 = vrot.slane %v3482, 1
      %v3484 = vadd.f32 %v3482, %v3483
      %v3485 = vrot.slane %v2939, 4
      %v3486 = vadd.f32 %v2939, %v3485
      %v3487 = vrot.slane %v3486, 2
      %v3488 = vadd.f32 %v3486, %v3487
      %v3489 = vrot.slane %v3488, 1
      %v3490 = vadd.f32 %v3488, %v3489
      %v3491 = vrot.slane %v2940, 4
      %v3492 = vadd.f32 %v2940, %v3491
      %v3493 = vrot.slane %v3492, 2
      %v3494 = vadd.f32 %v3492, %v3493
      %v3495 = vrot.slane %v3494, 1
      %v3496 = vadd.f32 %v3494, %v3495
      %v3497 = vrot.slane %v2941, 4
      %v3498 = vadd.f32 %v2941, %v3497
      %v3499 = vrot.slane %v3498, 2
      %v3500 = vadd.f32 %v3498, %v3499
      %v3501 = vrot.slane %v3500, 1
      %v3502 = vadd.f32 %v3500, %v3501
      %v3503 = vrot.slane %v2942, 4
      %v3504 = vadd.f32 %v2942, %v3503
      %v3505 = vrot.slane %v3504, 2
      %v3506 = vadd.f32 %v3504, %v3505
      %v3507 = vrot.slane %v3506, 1
      %v3508 = vadd.f32 %v3506, %v3507
      %v3509 = vrot.slane %v2943, 4
      %v3510 = vadd.f32 %v2943, %v3509
      %v3511 = vrot.slane %v3510, 2
      %v3512 = vadd.f32 %v3510, %v3511
      %v3513 = vrot.slane %v3512, 1
      %v3514 = vadd.f32 %v3512, %v3513
      %v3515 = vrot.slane %v2944, 4
      %v3516 = vadd.f32 %v2944, %v3515
      %v3517 = vrot.slane %v3516, 2
      %v3518 = vadd.f32 %v3516, %v3517
      %v3519 = vrot.slane %v3518, 1
      %v3520 = vadd.f32 %v3518, %v3519
      %v3521 = vrot.slane %v2945, 4
      %v3522 = vadd.f32 %v2945, %v3521
      %v3523 = vrot.slane %v3522, 2
      %v3524 = vadd.f32 %v3522, %v3523
      %v3525 = vrot.slane %v3524, 1
      %v3526 = vadd.f32 %v3524, %v3525
      %v3527 = vrot.slane %v2946, 4
      %v3528 = vadd.f32 %v2946, %v3527
      %v3529 = vrot.slane %v3528, 2
      %v3530 = vadd.f32 %v3528, %v3529
      %v3531 = vrot.slane %v3530, 1
      %v3532 = vadd.f32 %v3530, %v3531
      %v3533 = vrot.slane %v2947, 4
      %v3534 = vadd.f32 %v2947, %v3533
      %v3535 = vrot.slane %v3534, 2
      %v3536 = vadd.f32 %v3534, %v3535
      %v3537 = vrot.slane %v3536, 1
      %v3538 = vadd.f32 %v3536, %v3537
      %v3539 = vrot.slane %v2948, 4
      %v3540 = vadd.f32 %v2948, %v3539
      %v3541 = vrot.slane %v3540, 2
      %v3542 = vadd.f32 %v3540, %v3541
      %v3543 = vrot.slane %v3542, 1
      %v3544 = vadd.f32 %v3542, %v3543
      %v3545 = vrot.slane %v2949, 4
      %v3546 = vadd.f32 %v2949, %v3545
      %v3547 = vrot.slane %v3546, 2
      %v3548 = vadd.f32 %v3546, %v3547
      %v3549 = vrot.slane %v3548, 1
      %v3550 = vadd.f32 %v3548, %v3549
      %v3551 = vrot.slane %v2950, 4
      %v3552 = vadd.f32 %v2950, %v3551
      %v3553 = vrot.slane %v3552, 2
      %v3554 = vadd.f32 %v3552, %v3553
      %v3555 = vrot.slane %v3554, 1
      %v3556 = vadd.f32 %v3554, %v3555
      %v3557 = vrot.slane %v2951, 4
      %v3558 = vadd.f32 %v2951, %v3557
      %v3559 = vrot.slane %v3558, 2
      %v3560 = vadd.f32 %v3558, %v3559
      %v3561 = vrot.slane %v3560, 1
      %v3562 = vadd.f32 %v3560, %v3561
      %v3563 = vrot.slane %v2952, 4
      %v3564 = vadd.f32 %v2952, %v3563
      %v3565 = vrot.slane %v3564, 2
      %v3566 = vadd.f32 %v3564, %v3565
      %v3567 = vrot.slane %v3566, 1
      %v3568 = vadd.f32 %v3566, %v3567
      %v3569 = vrot.slane %v2953, 4
      %v3570 = vadd.f32 %v2953, %v3569
      %v3571 = vrot.slane %v3570, 2
      %v3572 = vadd.f32 %v3570, %v3571
      %v3573 = vrot.slane %v3572, 1
      %v3574 = vadd.f32 %v3572, %v3573
      %v3575 = vrot.slane %v2954, 4
      %v3576 = vadd.f32 %v2954, %v3575
      %v3577 = vrot.slane %v3576, 2
      %v3578 = vadd.f32 %v3576, %v3577
      %v3579 = vrot.slane %v3578, 1
      %v3580 = vadd.f32 %v3578, %v3579
      %v3581 = vrot.slane %v2955, 4
      %v3582 = vadd.f32 %v2955, %v3581
      %v3583 = vrot.slane %v3582, 2
      %v3584 = vadd.f32 %v3582, %v3583
      %v3585 = vrot.slane %v3584, 1
      %v3586 = vadd.f32 %v3584, %v3585
      %v3587 = vrot.slane %v2956, 4
      %v3588 = vadd.f32 %v2956, %v3587
      %v3589 = vrot.slane %v3588, 2
      %v3590 = vadd.f32 %v3588, %v3589
      %v3591 = vrot.slane %v3590, 1
      %v3592 = vadd.f32 %v3590, %v3591
      %v3593 = vrot.slane %v2957, 4
      %v3594 = vadd.f32 %v2957, %v3593
      %v3595 = vrot.slane %v3594, 2
      %v3596 = vadd.f32 %v3594, %v3595
      %v3597 = vrot.slane %v3596, 1
      %v3598 = vadd.f32 %v3596, %v3597
      %v3599 = vrot.slane %v2958, 4
      %v3600 = vadd.f32 %v2958, %v3599
      %v3601 = vrot.slane %v3600, 2
      %v3602 = vadd.f32 %v3600, %v3601
      %v3603 = vrot.slane %v3602, 1
      %v3604 = vadd.f32 %v3602, %v3603
      %v3605 = vrot.slane %v2959, 4
      %v3606 = vadd.f32 %v2959, %v3605
      %v3607 = vrot.slane %v3606, 2
      %v3608 = vadd.f32 %v3606, %v3607
      %v3609 = vrot.slane %v3608, 1
      %v3610 = vadd.f32 %v3608, %v3609
      %v3611 = vrot.slane %v2960, 4
      %v3612 = vadd.f32 %v2960, %v3611
      %v3613 = vrot.slane %v3612, 2
      %v3614 = vadd.f32 %v3612, %v3613
      %v3615 = vrot.slane %v3614, 1
      %v3616 = vadd.f32 %v3614, %v3615
      %v3617 = vrot.slane %v2961, 4
      %v3618 = vadd.f32 %v2961, %v3617
      %v3619 = vrot.slane %v3618, 2
      %v3620 = vadd.f32 %v3618, %v3619
      %v3621 = vrot.slane %v3620, 1
      %v3622 = vadd.f32 %v3620, %v3621
      %v3623 = vrot.slane %v2962, 4
      %v3624 = vadd.f32 %v2962, %v3623
      %v3625 = vrot.slane %v3624, 2
      %v3626 = vadd.f32 %v3624, %v3625
      %v3627 = vrot.slane %v3626, 1
      %v3628 = vadd.f32 %v3626, %v3627
      %v3629 = vrot.slane %v2963, 4
      %v3630 = vadd.f32 %v2963, %v3629
      %v3631 = vrot.slane %v3630, 2
      %v3632 = vadd.f32 %v3630, %v3631
      %v3633 = vrot.slane %v3632, 1
      %v3634 = vadd.f32 %v3632, %v3633
      %v3635 = vrot.slane %v2964, 4
      %v3636 = vadd.f32 %v2964, %v3635
      %v3637 = vrot.slane %v3636, 2
      %v3638 = vadd.f32 %v3636, %v3637
      %v3639 = vrot.slane %v3638, 1
      %v3640 = vadd.f32 %v3638, %v3639
      %v3641 = vrot.slane %v2965, 4
      %v3642 = vadd.f32 %v2965, %v3641
      %v3643 = vrot.slane %v3642, 2
      %v3644 = vadd.f32 %v3642, %v3643
      %v3645 = vrot.slane %v3644, 1
      %v3646 = vadd.f32 %v3644, %v3645
      %v3647 = vrot.slane %v2966, 4
      %v3648 = vadd.f32 %v2966, %v3647
      %v3649 = vrot.slane %v3648, 2
      %v3650 = vadd.f32 %v3648, %v3649
      %v3651 = vrot.slane %v3650, 1
      %v3652 = vadd.f32 %v3650, %v3651
      %v3653 = vrot.slane %v2967, 4
      %v3654 = vadd.f32 %v2967, %v3653
      %v3655 = vrot.slane %v3654, 2
      %v3656 = vadd.f32 %v3654, %v3655
      %v3657 = vrot.slane %v3656, 1
      %v3658 = vadd.f32 %v3656, %v3657
      %v3659 = vrot.slane %v2968, 4
      %v3660 = vadd.f32 %v2968, %v3659
      %v3661 = vrot.slane %v3660, 2
      %v3662 = vadd.f32 %v3660, %v3661
      %v3663 = vrot.slane %v3662, 1
      %v3664 = vadd.f32 %v3662, %v3663
      %v3665 = vrot.slane %v2969, 4
      %v3666 = vadd.f32 %v2969, %v3665
      %v3667 = vrot.slane %v3666, 2
      %v3668 = vadd.f32 %v3666, %v3667
      %v3669 = vrot.slane %v3668, 1
      %v3670 = vadd.f32 %v3668, %v3669
      %v3671 = vrot.slane %v2970, 4
      %v3672 = vadd.f32 %v2970, %v3671
      %v3673 = vrot.slane %v3672, 2
      %v3674 = vadd.f32 %v3672, %v3673
      %v3675 = vrot.slane %v3674, 1
      %v3676 = vadd.f32 %v3674, %v3675
      %v3677 = vrot.slane %v2971, 4
      %v3678 = vadd.f32 %v2971, %v3677
      %v3679 = vrot.slane %v3678, 2
      %v3680 = vadd.f32 %v3678, %v3679
      %v3681 = vrot.slane %v3680, 1
      %v3682 = vadd.f32 %v3680, %v3681
      %v3683 = vrot.slane %v2972, 4
      %v3684 = vadd.f32 %v2972, %v3683
      %v3685 = vrot.slane %v3684, 2
      %v3686 = vadd.f32 %v3684, %v3685
      %v3687 = vrot.slane %v3686, 1
      %v3688 = vadd.f32 %v3686, %v3687
      %v3689 = vrot.slane %v2973, 4
      %v3690 = vadd.f32 %v2973, %v3689
      %v3691 = vrot.slane %v3690, 2
      %v3692 = vadd.f32 %v3690, %v3691
      %v3693 = vrot.slane %v3692, 1
      %v3694 = vadd.f32 %v3692, %v3693
      %v3695 = vrot.slane %v2974, 4
      %v3696 = vadd.f32 %v2974, %v3695
      %v3697 = vrot.slane %v3696, 2
      %v3698 = vadd.f32 %v3696, %v3697
      %v3699 = vrot.slane %v3698, 1
      %v3700 = vadd.f32 %v3698, %v3699
      %v3701 = vrot.slane %v2975, 4
      %v3702 = vadd.f32 %v2975, %v3701
      %v3703 = vrot.slane %v3702, 2
      %v3704 = vadd.f32 %v3702, %v3703
      %v3705 = vrot.slane %v3704, 1
      %v3706 = vadd.f32 %v3704, %v3705
      %v3707 = vrot.slane %v2976, 4
      %v3708 = vadd.f32 %v2976, %v3707
      %v3709 = vrot.slane %v3708, 2
      %v3710 = vadd.f32 %v3708, %v3709
      %v3711 = vrot.slane %v3710, 1
      %v3712 = vadd.f32 %v3710, %v3711
      %v3713 = vrot.slane %v2977, 4
      %v3714 = vadd.f32 %v2977, %v3713
      %v3715 = vrot.slane %v3714, 2
      %v3716 = vadd.f32 %v3714, %v3715
      %v3717 = vrot.slane %v3716, 1
      %v3718 = vadd.f32 %v3716, %v3717
      %v3719 = vrot.slane %v2978, 4
      %v3720 = vadd.f32 %v2978, %v3719
      %v3721 = vrot.slane %v3720, 2
      %v3722 = vadd.f32 %v3720, %v3721
      %v3723 = vrot.slane %v3722, 1
      %v3724 = vadd.f32 %v3722, %v3723
      %v3725 = vrot.slane %v2979, 4
      %v3726 = vadd.f32 %v2979, %v3725
      %v3727 = vrot.slane %v3726, 2
      %v3728 = vadd.f32 %v3726, %v3727
      %v3729 = vrot.slane %v3728, 1
      %v3730 = vadd.f32 %v3728, %v3729
      %v3731 = vrot.slane %v2980, 4
      %v3732 = vadd.f32 %v2980, %v3731
      %v3733 = vrot.slane %v3732, 2
      %v3734 = vadd.f32 %v3732, %v3733
      %v3735 = vrot.slane %v3734, 1
      %v3736 = vadd.f32 %v3734, %v3735
      %v3737 = vrot.slane %v2981, 4
      %v3738 = vadd.f32 %v2981, %v3737
      %v3739 = vrot.slane %v3738, 2
      %v3740 = vadd.f32 %v3738, %v3739
      %v3741 = vrot.slane %v3740, 1
      %v3742 = vadd.f32 %v3740, %v3741
      %v3743 = vrot.slane %v2982, 4
      %v3744 = vadd.f32 %v2982, %v3743
      %v3745 = vrot.slane %v3744, 2
      %v3746 = vadd.f32 %v3744, %v3745
      %v3747 = vrot.slane %v3746, 1
      %v3748 = vadd.f32 %v3746, %v3747
      %v3749 = vrot.slane %v2983, 4
      %v3750 = vadd.f32 %v2983, %v3749
      %v3751 = vrot.slane %v3750, 2
      %v3752 = vadd.f32 %v3750, %v3751
      %v3753 = vrot.slane %v3752, 1
      %v3754 = vadd.f32 %v3752, %v3753
      %v3755 = vrot.slane %v2984, 4
      %v3756 = vadd.f32 %v2984, %v3755
      %v3757 = vrot.slane %v3756, 2
      %v3758 = vadd.f32 %v3756, %v3757
      %v3759 = vrot.slane %v3758, 1
      %v3760 = vadd.f32 %v3758, %v3759
      %v3761 = vrot.slane %v2985, 4
      %v3762 = vadd.f32 %v2985, %v3761
      %v3763 = vrot.slane %v3762, 2
      %v3764 = vadd.f32 %v3762, %v3763
      %v3765 = vrot.slane %v3764, 1
      %v3766 = vadd.f32 %v3764, %v3765
      %v3767 = vrot.slane %v2986, 4
      %v3768 = vadd.f32 %v2986, %v3767
      %v3769 = vrot.slane %v3768, 2
      %v3770 = vadd.f32 %v3768, %v3769
      %v3771 = vrot.slane %v3770, 1
      %v3772 = vadd.f32 %v3770, %v3771
      %v3773 = vrot.slane %v2987, 4
      %v3774 = vadd.f32 %v2987, %v3773
      %v3775 = vrot.slane %v3774, 2
      %v3776 = vadd.f32 %v3774, %v3775
      %v3777 = vrot.slane %v3776, 1
      %v3778 = vadd.f32 %v3776, %v3777
      %v3779 = vrot.slane %v2988, 4
      %v3780 = vadd.f32 %v2988, %v3779
      %v3781 = vrot.slane %v3780, 2
      %v3782 = vadd.f32 %v3780, %v3781
      %v3783 = vrot.slane %v3782, 1
      %v3784 = vadd.f32 %v3782, %v3783
      %v3785 = vrot.slane %v2989, 4
      %v3786 = vadd.f32 %v2989, %v3785
      %v3787 = vrot.slane %v3786, 2
      %v3788 = vadd.f32 %v3786, %v3787
      %v3789 = vrot.slane %v3788, 1
      %v3790 = vadd.f32 %v3788, %v3789
      %v3791 = vrot.slane %v2990, 4
      %v3792 = vadd.f32 %v2990, %v3791
      %v3793 = vrot.slane %v3792, 2
      %v3794 = vadd.f32 %v3792, %v3793
      %v3795 = vrot.slane %v3794, 1
      %v3796 = vadd.f32 %v3794, %v3795
      %v3797 = vrot.slane %v2991, 4
      %v3798 = vadd.f32 %v2991, %v3797
      %v3799 = vrot.slane %v3798, 2
      %v3800 = vadd.f32 %v3798, %v3799
      %v3801 = vrot.slane %v3800, 1
      %v3802 = vadd.f32 %v3800, %v3801
      %v3803 = vrot.slane %v2992, 4
      %v3804 = vadd.f32 %v2992, %v3803
      %v3805 = vrot.slane %v3804, 2
      %v3806 = vadd.f32 %v3804, %v3805
      %v3807 = vrot.slane %v3806, 1
      %v3808 = vadd.f32 %v3806, %v3807
      %v3809 = vrot.slane %v2993, 4
      %v3810 = vadd.f32 %v2993, %v3809
      %v3811 = vrot.slane %v3810, 2
      %v3812 = vadd.f32 %v3810, %v3811
      %v3813 = vrot.slane %v3812, 1
      %v3814 = vadd.f32 %v3812, %v3813
      %v3815 = vrot.slane %v2994, 4
      %v3816 = vadd.f32 %v2994, %v3815
      %v3817 = vrot.slane %v3816, 2
      %v3818 = vadd.f32 %v3816, %v3817
      %v3819 = vrot.slane %v3818, 1
      %v3820 = vadd.f32 %v3818, %v3819
      %v3821 = vrot.slane %v2995, 4
      %v3822 = vadd.f32 %v2995, %v3821
      %v3823 = vrot.slane %v3822, 2
      %v3824 = vadd.f32 %v3822, %v3823
      %v3825 = vrot.slane %v3824, 1
      %v3826 = vadd.f32 %v3824, %v3825
      %v3827 = vrot.slane %v2996, 4
      %v3828 = vadd.f32 %v2996, %v3827
      %v3829 = vrot.slane %v3828, 2
      %v3830 = vadd.f32 %v3828, %v3829
      %v3831 = vrot.slane %v3830, 1
      %v3832 = vadd.f32 %v3830, %v3831
      %v3833 = vrot.slane %v2997, 4
      %v3834 = vadd.f32 %v2997, %v3833
      %v3835 = vrot.slane %v3834, 2
      %v3836 = vadd.f32 %v3834, %v3835
      %v3837 = vrot.slane %v3836, 1
      %v3838 = vadd.f32 %v3836, %v3837
      %v3839 = vrot.slane %v2998, 4
      %v3840 = vadd.f32 %v2998, %v3839
      %v3841 = vrot.slane %v3840, 2
      %v3842 = vadd.f32 %v3840, %v3841
      %v3843 = vrot.slane %v3842, 1
      %v3844 = vadd.f32 %v3842, %v3843
      %v3845 = vrot.slane %v2999, 4
      %v3846 = vadd.f32 %v2999, %v3845
      %v3847 = vrot.slane %v3846, 2
      %v3848 = vadd.f32 %v3846, %v3847
      %v3849 = vrot.slane %v3848, 1
      %v3850 = vadd.f32 %v3848, %v3849
      %v3851 = vrot.slane %v3000, 4
      %v3852 = vadd.f32 %v3000, %v3851
      %v3853 = vrot.slane %v3852, 2
      %v3854 = vadd.f32 %v3852, %v3853
      %v3855 = vrot.slane %v3854, 1
      %v3856 = vadd.f32 %v3854, %v3855
      %v3857 = vrot.slane %v3001, 4
      %v3858 = vadd.f32 %v3001, %v3857
      %v3859 = vrot.slane %v3858, 2
      %v3860 = vadd.f32 %v3858, %v3859
      %v3861 = vrot.slane %v3860, 1
      %v3862 = vadd.f32 %v3860, %v3861
      %v3863 = vrot.slane %v3002, 4
      %v3864 = vadd.f32 %v3002, %v3863
      %v3865 = vrot.slane %v3864, 2
      %v3866 = vadd.f32 %v3864, %v3865
      %v3867 = vrot.slane %v3866, 1
      %v3868 = vadd.f32 %v3866, %v3867
      %v3869 = vrot.slane %v3003, 4
      %v3870 = vadd.f32 %v3003, %v3869
      %v3871 = vrot.slane %v3870, 2
      %v3872 = vadd.f32 %v3870, %v3871
      %v3873 = vrot.slane %v3872, 1
      %v3874 = vadd.f32 %v3872, %v3873
      %v3875 = vrot.slane %v3004, 4
      %v3876 = vadd.f32 %v3004, %v3875
      %v3877 = vrot.slane %v3876, 2
      %v3878 = vadd.f32 %v3876, %v3877
      %v3879 = vrot.slane %v3878, 1
      %v3880 = vadd.f32 %v3878, %v3879
      %v3881 = vrot.slane %v3005, 4
      %v3882 = vadd.f32 %v3005, %v3881
      %v3883 = vrot.slane %v3882, 2
      %v3884 = vadd.f32 %v3882, %v3883
      %v3885 = vrot.slane %v3884, 1
      %v3886 = vadd.f32 %v3884, %v3885
      %v3887 = vrot.slane %v3006, 4
      %v3888 = vadd.f32 %v3006, %v3887
      %v3889 = vrot.slane %v3888, 2
      %v3890 = vadd.f32 %v3888, %v3889
      %v3891 = vrot.slane %v3890, 1
      %v3892 = vadd.f32 %v3890, %v3891
      %v3893 = vrot.slane %v3007, 4
      %v3894 = vadd.f32 %v3007, %v3893
      %v3895 = vrot.slane %v3894, 2
      %v3896 = vadd.f32 %v3894, %v3895
      %v3897 = vrot.slane %v3896, 1
      %v3898 = vadd.f32 %v3896, %v3897
      %v3899 = vrot.slane %v3008, 4
      %v3900 = vadd.f32 %v3008, %v3899
      %v3901 = vrot.slane %v3900, 2
      %v3902 = vadd.f32 %v3900, %v3901
      %v3903 = vrot.slane %v3902, 1
      %v3904 = vadd.f32 %v3902, %v3903
      %v3905 = vrot.slane %v3009, 4
      %v3906 = vadd.f32 %v3009, %v3905
      %v3907 = vrot.slane %v3906, 2
      %v3908 = vadd.f32 %v3906, %v3907
      %v3909 = vrot.slane %v3908, 1
      %v3910 = vadd.f32 %v3908, %v3909
      %v3911 = vrot.slane %v3010, 4
      %v3912 = vadd.f32 %v3010, %v3911
      %v3913 = vrot.slane %v3912, 2
      %v3914 = vadd.f32 %v3912, %v3913
      %v3915 = vrot.slane %v3914, 1
      %v3916 = vadd.f32 %v3914, %v3915
      %v3917 = vrot.slane %v3011, 4
      %v3918 = vadd.f32 %v3011, %v3917
      %v3919 = vrot.slane %v3918, 2
      %v3920 = vadd.f32 %v3918, %v3919
      %v3921 = vrot.slane %v3920, 1
      %v3922 = vadd.f32 %v3920, %v3921
      %v3923 = vrot.slane %v3012, 4
      %v3924 = vadd.f32 %v3012, %v3923
      %v3925 = vrot.slane %v3924, 2
      %v3926 = vadd.f32 %v3924, %v3925
      %v3927 = vrot.slane %v3926, 1
      %v3928 = vadd.f32 %v3926, %v3927
      %v3929 = vrot.slane %v3013, 4
      %v3930 = vadd.f32 %v3013, %v3929
      %v3931 = vrot.slane %v3930, 2
      %v3932 = vadd.f32 %v3930, %v3931
      %v3933 = vrot.slane %v3932, 1
      %v3934 = vadd.f32 %v3932, %v3933
      %v3935 = vrot.slane %v3014, 4
      %v3936 = vadd.f32 %v3014, %v3935
      %v3937 = vrot.slane %v3936, 2
      %v3938 = vadd.f32 %v3936, %v3937
      %v3939 = vrot.slane %v3938, 1
      %v3940 = vadd.f32 %v3938, %v3939
      %v3941 = vrot.slane %v3015, 4
      %v3942 = vadd.f32 %v3015, %v3941
      %v3943 = vrot.slane %v3942, 2
      %v3944 = vadd.f32 %v3942, %v3943
      %v3945 = vrot.slane %v3944, 1
      %v3946 = vadd.f32 %v3944, %v3945
      %v3947 = vrot.slane %v3016, 4
      %v3948 = vadd.f32 %v3016, %v3947
      %v3949 = vrot.slane %v3948, 2
      %v3950 = vadd.f32 %v3948, %v3949
      %v3951 = vrot.slane %v3950, 1
      %v3952 = vadd.f32 %v3950, %v3951
      %v3953 = vrot.slane %v3017, 4
      %v3954 = vadd.f32 %v3017, %v3953
      %v3955 = vrot.slane %v3954, 2
      %v3956 = vadd.f32 %v3954, %v3955
      %v3957 = vrot.slane %v3956, 1
      %v3958 = vadd.f32 %v3956, %v3957
      %v3959 = vrot.slane %v3018, 4
      %v3960 = vadd.f32 %v3018, %v3959
      %v3961 = vrot.slane %v3960, 2
      %v3962 = vadd.f32 %v3960, %v3961
      %v3963 = vrot.slane %v3962, 1
      %v3964 = vadd.f32 %v3962, %v3963
      %v3965 = vrot.slane %v3019, 4
      %v3966 = vadd.f32 %v3019, %v3965
      %v3967 = vrot.slane %v3966, 2
      %v3968 = vadd.f32 %v3966, %v3967
      %v3969 = vrot.slane %v3968, 1
      %v3970 = vadd.f32 %v3968, %v3969
      %v3971 = vrot.slane %v3020, 4
      %v3972 = vadd.f32 %v3020, %v3971
      %v3973 = vrot.slane %v3972, 2
      %v3974 = vadd.f32 %v3972, %v3973
      %v3975 = vrot.slane %v3974, 1
      %v3976 = vadd.f32 %v3974, %v3975
      %v3977 = vrot.slane %v3021, 4
      %v3978 = vadd.f32 %v3021, %v3977
      %v3979 = vrot.slane %v3978, 2
      %v3980 = vadd.f32 %v3978, %v3979
      %v3981 = vrot.slane %v3980, 1
      %v3982 = vadd.f32 %v3980, %v3981
      %v3983 = vrot.slane %v3022, 4
      %v3984 = vadd.f32 %v3022, %v3983
      %v3985 = vrot.slane %v3984, 2
      %v3986 = vadd.f32 %v3984, %v3985
      %v3987 = vrot.slane %v3986, 1
      %v3988 = vadd.f32 %v3986, %v3987
      %v3989 = vrot.slane %v3023, 4
      %v3990 = vadd.f32 %v3023, %v3989
      %v3991 = vrot.slane %v3990, 2
      %v3992 = vadd.f32 %v3990, %v3991
      %v3993 = vrot.slane %v3992, 1
      %v3994 = vadd.f32 %v3992, %v3993
      %v3995 = vrot.slane %v3024, 4
      %v3996 = vadd.f32 %v3024, %v3995
      %v3997 = vrot.slane %v3996, 2
      %v3998 = vadd.f32 %v3996, %v3997
      %v3999 = vrot.slane %v3998, 1
      %v4000 = vadd.f32 %v3998, %v3999
      %v4001 = vrot.slane %v3025, 4
      %v4002 = vadd.f32 %v3025, %v4001
      %v4003 = vrot.slane %v4002, 2
      %v4004 = vadd.f32 %v4002, %v4003
      %v4005 = vrot.slane %v4004, 1
      %v4006 = vadd.f32 %v4004, %v4005
      %v4007 = vrot.slane %v3026, 4
      %v4008 = vadd.f32 %v3026, %v4007
      %v4009 = vrot.slane %v4008, 2
      %v4010 = vadd.f32 %v4008, %v4009
      %v4011 = vrot.slane %v4010, 1
      %v4012 = vadd.f32 %v4010, %v4011
      %v4013 = vrot.slane %v3027, 4
      %v4014 = vadd.f32 %v3027, %v4013
      %v4015 = vrot.slane %v4014, 2
      %v4016 = vadd.f32 %v4014, %v4015
      %v4017 = vrot.slane %v4016, 1
      %v4018 = vadd.f32 %v4016, %v4017
      %v4019 = vrot.slane %v3028, 4
      %v4020 = vadd.f32 %v3028, %v4019
      %v4021 = vrot.slane %v4020, 2
      %v4022 = vadd.f32 %v4020, %v4021
      %v4023 = vrot.slane %v4022, 1
      %v4024 = vadd.f32 %v4022, %v4023
      %v4025 = vrot.slane %v3029, 4
      %v4026 = vadd.f32 %v3029, %v4025
      %v4027 = vrot.slane %v4026, 2
      %v4028 = vadd.f32 %v4026, %v4027
      %v4029 = vrot.slane %v4028, 1
      %v4030 = vadd.f32 %v4028, %v4029
      %v4031 = vrot.slane %v3030, 4
      %v4032 = vadd.f32 %v3030, %v4031
      %v4033 = vrot.slane %v4032, 2
      %v4034 = vadd.f32 %v4032, %v4033
      %v4035 = vrot.slane %v4034, 1
      %v4036 = vadd.f32 %v4034, %v4035
      %v4037 = vrot.slane %v3031, 4
      %v4038 = vadd.f32 %v3031, %v4037
      %v4039 = vrot.slane %v4038, 2
      %v4040 = vadd.f32 %v4038, %v4039
      %v4041 = vrot.slane %v4040, 1
      %v4042 = vadd.f32 %v4040, %v4041
      %v4043 = vrot.slane %v3032, 4
      %v4044 = vadd.f32 %v3032, %v4043
      %v4045 = vrot.slane %v4044, 2
      %v4046 = vadd.f32 %v4044, %v4045
      %v4047 = vrot.slane %v4046, 1
      %v4048 = vadd.f32 %v4046, %v4047
      %v4049 = vrot.slane %v3033, 4
      %v4050 = vadd.f32 %v3033, %v4049
      %v4051 = vrot.slane %v4050, 2
      %v4052 = vadd.f32 %v4050, %v4051
      %v4053 = vrot.slane %v4052, 1
      %v4054 = vadd.f32 %v4052, %v4053
      %v4055 = vrot.slane %v3034, 4
      %v4056 = vadd.f32 %v3034, %v4055
      %v4057 = vrot.slane %v4056, 2
      %v4058 = vadd.f32 %v4056, %v4057
      %v4059 = vrot.slane %v4058, 1
      %v4060 = vadd.f32 %v4058, %v4059
      %v4061 = vrot.slane %v3035, 4
      %v4062 = vadd.f32 %v3035, %v4061
      %v4063 = vrot.slane %v4062, 2
      %v4064 = vadd.f32 %v4062, %v4063
      %v4065 = vrot.slane %v4064, 1
      %v4066 = vadd.f32 %v4064, %v4065
      %v4067 = vrot.slane %v3036, 4
      %v4068 = vadd.f32 %v3036, %v4067
      %v4069 = vrot.slane %v4068, 2
      %v4070 = vadd.f32 %v4068, %v4069
      %v4071 = vrot.slane %v4070, 1
      %v4072 = vadd.f32 %v4070, %v4071
      %v4073 = vrot.slane %v3037, 4
      %v4074 = vadd.f32 %v3037, %v4073
      %v4075 = vrot.slane %v4074, 2
      %v4076 = vadd.f32 %v4074, %v4075
      %v4077 = vrot.slane %v4076, 1
      %v4078 = vadd.f32 %v4076, %v4077
      %v4079 = vrot.slane %v3038, 4
      %v4080 = vadd.f32 %v3038, %v4079
      %v4081 = vrot.slane %v4080, 2
      %v4082 = vadd.f32 %v4080, %v4081
      %v4083 = vrot.slane %v4082, 1
      %v4084 = vadd.f32 %v4082, %v4083
      %v4085 = vrot.slane %v3039, 4
      %v4086 = vadd.f32 %v3039, %v4085
      %v4087 = vrot.slane %v4086, 2
      %v4088 = vadd.f32 %v4086, %v4087
      %v4089 = vrot.slane %v4088, 1
      %v4090 = vadd.f32 %v4088, %v4089
      %v4091 = vrot.slane %v3040, 4
      %v4092 = vadd.f32 %v3040, %v4091
      %v4093 = vrot.slane %v4092, 2
      %v4094 = vadd.f32 %v4092, %v4093
      %v4095 = vrot.slane %v4094, 1
      %v4096 = vadd.f32 %v4094, %v4095
      %v4097 = vrot.slane %v3041, 4
      %v4098 = vadd.f32 %v3041, %v4097
      %v4099 = vrot.slane %v4098, 2
      %v4100 = vadd.f32 %v4098, %v4099
      %v4101 = vrot.slane %v4100, 1
      %v4102 = vadd.f32 %v4100, %v4101
      %v4103 = vrot.slane %v3042, 4
      %v4104 = vadd.f32 %v3042, %v4103
      %v4105 = vrot.slane %v4104, 2
      %v4106 = vadd.f32 %v4104, %v4105
      %v4107 = vrot.slane %v4106, 1
      %v4108 = vadd.f32 %v4106, %v4107
      %v4109 = vrot.slane %v3043, 4
      %v4110 = vadd.f32 %v3043, %v4109
      %v4111 = vrot.slane %v4110, 2
      %v4112 = vadd.f32 %v4110, %v4111
      %v4113 = vrot.slane %v4112, 1
      %v4114 = vadd.f32 %v4112, %v4113
      %v4115 = vrot.slane %v3044, 4
      %v4116 = vadd.f32 %v3044, %v4115
      %v4117 = vrot.slane %v4116, 2
      %v4118 = vadd.f32 %v4116, %v4117
      %v4119 = vrot.slane %v4118, 1
      %v4120 = vadd.f32 %v4118, %v4119
      %v4121 = vrot.slane %v3045, 4
      %v4122 = vadd.f32 %v3045, %v4121
      %v4123 = vrot.slane %v4122, 2
      %v4124 = vadd.f32 %v4122, %v4123
      %v4125 = vrot.slane %v4124, 1
      %v4126 = vadd.f32 %v4124, %v4125
      %v4127 = vrot.slane %v3046, 4
      %v4128 = vadd.f32 %v3046, %v4127
      %v4129 = vrot.slane %v4128, 2
      %v4130 = vadd.f32 %v4128, %v4129
      %v4131 = vrot.slane %v4130, 1
      %v4132 = vadd.f32 %v4130, %v4131
      %v4133 = vrot.slane %v3047, 4
      %v4134 = vadd.f32 %v3047, %v4133
      %v4135 = vrot.slane %v4134, 2
      %v4136 = vadd.f32 %v4134, %v4135
      %v4137 = vrot.slane %v4136, 1
      %v4138 = vadd.f32 %v4136, %v4137
      %v4139 = vrot.slane %v3048, 4
      %v4140 = vadd.f32 %v3048, %v4139
      %v4141 = vrot.slane %v4140, 2
      %v4142 = vadd.f32 %v4140, %v4141
      %v4143 = vrot.slane %v4142, 1
      %v4144 = vadd.f32 %v4142, %v4143
      %v4145 = vrot.slane %v3049, 4
      %v4146 = vadd.f32 %v3049, %v4145
      %v4147 = vrot.slane %v4146, 2
      %v4148 = vadd.f32 %v4146, %v4147
      %v4149 = vrot.slane %v4148, 1
      %v4150 = vadd.f32 %v4148, %v4149
      %v4151 = vrot.slane %v3050, 4
      %v4152 = vadd.f32 %v3050, %v4151
      %v4153 = vrot.slane %v4152, 2
      %v4154 = vadd.f32 %v4152, %v4153
      %v4155 = vrot.slane %v4154, 1
      %v4156 = vadd.f32 %v4154, %v4155
      %v4157 = vrot.slane %v3051, 4
      %v4158 = vadd.f32 %v3051, %v4157
      %v4159 = vrot.slane %v4158, 2
      %v4160 = vadd.f32 %v4158, %v4159
      %v4161 = vrot.slane %v4160, 1
      %v4162 = vadd.f32 %v4160, %v4161
      %v4163 = vrot.slane %v3052, 4
      %v4164 = vadd.f32 %v3052, %v4163
      %v4165 = vrot.slane %v4164, 2
      %v4166 = vadd.f32 %v4164, %v4165
      %v4167 = vrot.slane %v4166, 1
      %v4168 = vadd.f32 %v4166, %v4167
      %v4169 = vrot.slane %v3053, 4
      %v4170 = vadd.f32 %v3053, %v4169
      %v4171 = vrot.slane %v4170, 2
      %v4172 = vadd.f32 %v4170, %v4171
      %v4173 = vrot.slane %v4172, 1
      %v4174 = vadd.f32 %v4172, %v4173
      %v4175 = vrot.slane %v3054, 4
      %v4176 = vadd.f32 %v3054, %v4175
      %v4177 = vrot.slane %v4176, 2
      %v4178 = vadd.f32 %v4176, %v4177
      %v4179 = vrot.slane %v4178, 1
      %v4180 = vadd.f32 %v4178, %v4179
      %v4181 = vrot.slane %v3055, 4
      %v4182 = vadd.f32 %v3055, %v4181
      %v4183 = vrot.slane %v4182, 2
      %v4184 = vadd.f32 %v4182, %v4183
      %v4185 = vrot.slane %v4184, 1
      %v4186 = vadd.f32 %v4184, %v4185
      %v4187 = vrot.slane %v3056, 4
      %v4188 = vadd.f32 %v3056, %v4187
      %v4189 = vrot.slane %v4188, 2
      %v4190 = vadd.f32 %v4188, %v4189
      %v4191 = vrot.slane %v4190, 1
      %v4192 = vadd.f32 %v4190, %v4191
      %v4193 = vrot.slane %v3057, 4
      %v4194 = vadd.f32 %v3057, %v4193
      %v4195 = vrot.slane %v4194, 2
      %v4196 = vadd.f32 %v4194, %v4195
      %v4197 = vrot.slane %v4196, 1
      %v4198 = vadd.f32 %v4196, %v4197
      %v4199 = vrot.slane %v3058, 4
      %v4200 = vadd.f32 %v3058, %v4199
      %v4201 = vrot.slane %v4200, 2
      %v4202 = vadd.f32 %v4200, %v4201
      %v4203 = vrot.slane %v4202, 1
      %v4204 = vadd.f32 %v4202, %v4203
      %v4205 = vrot.slane %v3059, 4
      %v4206 = vadd.f32 %v3059, %v4205
      %v4207 = vrot.slane %v4206, 2
      %v4208 = vadd.f32 %v4206, %v4207
      %v4209 = vrot.slane %v4208, 1
      %v4210 = vadd.f32 %v4208, %v4209
      %v4211 = vrot.slane %v3060, 4
      %v4212 = vadd.f32 %v3060, %v4211
      %v4213 = vrot.slane %v4212, 2
      %v4214 = vadd.f32 %v4212, %v4213
      %v4215 = vrot.slane %v4214, 1
      %v4216 = vadd.f32 %v4214, %v4215
      %v4217 = vrot.slane %v3061, 4
      %v4218 = vadd.f32 %v3061, %v4217
      %v4219 = vrot.slane %v4218, 2
      %v4220 = vadd.f32 %v4218, %v4219
      %v4221 = vrot.slane %v4220, 1
      %v4222 = vadd.f32 %v4220, %v4221
      %v4223 = vrot.slane %v3062, 4
      %v4224 = vadd.f32 %v3062, %v4223
      %v4225 = vrot.slane %v4224, 2
      %v4226 = vadd.f32 %v4224, %v4225
      %v4227 = vrot.slane %v4226, 1
      %v4228 = vadd.f32 %v4226, %v4227
      %v4229 = vrot.slane %v3063, 4
      %v4230 = vadd.f32 %v3063, %v4229
      %v4231 = vrot.slane %v4230, 2
      %v4232 = vadd.f32 %v4230, %v4231
      %v4233 = vrot.slane %v4232, 1
      %v4234 = vadd.f32 %v4232, %v4233
      %v4235 = vrot.slane %v3064, 4
      %v4236 = vadd.f32 %v3064, %v4235
      %v4237 = vrot.slane %v4236, 2
      %v4238 = vadd.f32 %v4236, %v4237
      %v4239 = vrot.slane %v4238, 1
      %v4240 = vadd.f32 %v4238, %v4239
      %v4241 = vrot.slane %v3065, 4
      %v4242 = vadd.f32 %v3065, %v4241
      %v4243 = vrot.slane %v4242, 2
      %v4244 = vadd.f32 %v4242, %v4243
      %v4245 = vrot.slane %v4244, 1
      %v4246 = vadd.f32 %v4244, %v4245
      %v4247 = vrot.slane %v3066, 4
      %v4248 = vadd.f32 %v3066, %v4247
      %v4249 = vrot.slane %v4248, 2
      %v4250 = vadd.f32 %v4248, %v4249
      %v4251 = vrot.slane %v4250, 1
      %v4252 = vadd.f32 %v4250, %v4251
      %v4253 = vrot.slane %v3067, 4
      %v4254 = vadd.f32 %v3067, %v4253
      %v4255 = vrot.slane %v4254, 2
      %v4256 = vadd.f32 %v4254, %v4255
      %v4257 = vrot.slane %v4256, 1
      %v4258 = vadd.f32 %v4256, %v4257
      %v4259 = vrot.slane %v3068, 4
      %v4260 = vadd.f32 %v3068, %v4259
      %v4261 = vrot.slane %v4260, 2
      %v4262 = vadd.f32 %v4260, %v4261
      %v4263 = vrot.slane %v4262, 1
      %v4264 = vadd.f32 %v4262, %v4263
      %v4265 = vrot.slane %v3069, 4
      %v4266 = vadd.f32 %v3069, %v4265
      %v4267 = vrot.slane %v4266, 2
      %v4268 = vadd.f32 %v4266, %v4267
      %v4269 = vrot.slane %v4268, 1
      %v4270 = vadd.f32 %v4268, %v4269
      %v4271 = vrot.slane %v3070, 4
      %v4272 = vadd.f32 %v3070, %v4271
      %v4273 = vrot.slane %v4272, 2
      %v4274 = vadd.f32 %v4272, %v4273
      %v4275 = vrot.slane %v4274, 1
      %v4276 = vadd.f32 %v4274, %v4275
      %v4277 = vrot.slane %v3071, 4
      %v4278 = vadd.f32 %v3071, %v4277
      %v4279 = vrot.slane %v4278, 2
      %v4280 = vadd.f32 %v4278, %v4279
      %v4281 = vrot.slane %v4280, 1
      %v4282 = vadd.f32 %v4280, %v4281
      %v4283 = vrot.slane %v3072, 4
      %v4284 = vadd.f32 %v3072, %v4283
      %v4285 = vrot.slane %v4284, 2
      %v4286 = vadd.f32 %v4284, %v4285
      %v4287 = vrot.slane %v4286, 1
      %v4288 = vadd.f32 %v4286, %v4287
      %v4289 = vrot.slane %v3073, 4
      %v4290 = vadd.f32 %v3073, %v4289
      %v4291 = vrot.slane %v4290, 2
      %v4292 = vadd.f32 %v4290, %v4291
      %v4293 = vrot.slane %v4292, 1
      %v4294 = vadd.f32 %v4292, %v4293
      %v4295 = vrot.slane %v3074, 4
      %v4296 = vadd.f32 %v3074, %v4295
      %v4297 = vrot.slane %v4296, 2
      %v4298 = vadd.f32 %v4296, %v4297
      %v4299 = vrot.slane %v4298, 1
      %v4300 = vadd.f32 %v4298, %v4299
      %v4301 = vrot.slane %v3075, 4
      %v4302 = vadd.f32 %v3075, %v4301
      %v4303 = vrot.slane %v4302, 2
      %v4304 = vadd.f32 %v4302, %v4303
      %v4305 = vrot.slane %v4304, 1
      %v4306 = vadd.f32 %v4304, %v4305
      %v4307 = vrot.slane %v3076, 4
      %v4308 = vadd.f32 %v3076, %v4307
      %v4309 = vrot.slane %v4308, 2
      %v4310 = vadd.f32 %v4308, %v4309
      %v4311 = vrot.slane %v4310, 1
      %v4312 = vadd.f32 %v4310, %v4311
      %v4313 = vrot.slane %v3077, 4
      %v4314 = vadd.f32 %v3077, %v4313
      %v4315 = vrot.slane %v4314, 2
      %v4316 = vadd.f32 %v4314, %v4315
      %v4317 = vrot.slane %v4316, 1
      %v4318 = vadd.f32 %v4316, %v4317
      %v4319 = vrot.slane %v3078, 4
      %v4320 = vadd.f32 %v3078, %v4319
      %v4321 = vrot.slane %v4320, 2
      %v4322 = vadd.f32 %v4320, %v4321
      %v4323 = vrot.slane %v4322, 1
      %v4324 = vadd.f32 %v4322, %v4323
      %v4325 = vrot.slane %v3079, 4
      %v4326 = vadd.f32 %v3079, %v4325
      %v4327 = vrot.slane %v4326, 2
      %v4328 = vadd.f32 %v4326, %v4327
      %v4329 = vrot.slane %v4328, 1
      %v4330 = vadd.f32 %v4328, %v4329
      %v4331 = vrot.slane %v3080, 4
      %v4332 = vadd.f32 %v3080, %v4331
      %v4333 = vrot.slane %v4332, 2
      %v4334 = vadd.f32 %v4332, %v4333
      %v4335 = vrot.slane %v4334, 1
      %v4336 = vadd.f32 %v4334, %v4335
      %v4337 = vrot.slane %v3081, 4
      %v4338 = vadd.f32 %v3081, %v4337
      %v4339 = vrot.slane %v4338, 2
      %v4340 = vadd.f32 %v4338, %v4339
      %v4341 = vrot.slane %v4340, 1
      %v4342 = vadd.f32 %v4340, %v4341
      %v4343 = vrot.slane %v3082, 4
      %v4344 = vadd.f32 %v3082, %v4343
      %v4345 = vrot.slane %v4344, 2
      %v4346 = vadd.f32 %v4344, %v4345
      %v4347 = vrot.slane %v4346, 1
      %v4348 = vadd.f32 %v4346, %v4347
      %v4349 = vrot.slane %v3083, 4
      %v4350 = vadd.f32 %v3083, %v4349
      %v4351 = vrot.slane %v4350, 2
      %v4352 = vadd.f32 %v4350, %v4351
      %v4353 = vrot.slane %v4352, 1
      %v4354 = vadd.f32 %v4352, %v4353
      %v4355 = vrot.slane %v3084, 4
      %v4356 = vadd.f32 %v3084, %v4355
      %v4357 = vrot.slane %v4356, 2
      %v4358 = vadd.f32 %v4356, %v4357
      %v4359 = vrot.slane %v4358, 1
      %v4360 = vadd.f32 %v4358, %v4359
      %v4361 = vrot.slane %v3085, 4
      %v4362 = vadd.f32 %v3085, %v4361
      %v4363 = vrot.slane %v4362, 2
      %v4364 = vadd.f32 %v4362, %v4363
      %v4365 = vrot.slane %v4364, 1
      %v4366 = vadd.f32 %v4364, %v4365
      %v4367 = vrot.slane %v3086, 4
      %v4368 = vadd.f32 %v3086, %v4367
      %v4369 = vrot.slane %v4368, 2
      %v4370 = vadd.f32 %v4368, %v4369
      %v4371 = vrot.slane %v4370, 1
      %v4372 = vadd.f32 %v4370, %v4371
      %v4373 = vrot.slane %v3087, 4
      %v4374 = vadd.f32 %v3087, %v4373
      %v4375 = vrot.slane %v4374, 2
      %v4376 = vadd.f32 %v4374, %v4375
      %v4377 = vrot.slane %v4376, 1
      %v4378 = vadd.f32 %v4376, %v4377
      %v4379 = vrot.slane %v3088, 4
      %v4380 = vadd.f32 %v3088, %v4379
      %v4381 = vrot.slane %v4380, 2
      %v4382 = vadd.f32 %v4380, %v4381
      %v4383 = vrot.slane %v4382, 1
      %v4384 = vadd.f32 %v4382, %v4383
      %v4385 = vrot.slane %v3089, 4
      %v4386 = vadd.f32 %v3089, %v4385
      %v4387 = vrot.slane %v4386, 2
      %v4388 = vadd.f32 %v4386, %v4387
      %v4389 = vrot.slane %v4388, 1
      %v4390 = vadd.f32 %v4388, %v4389
      %v4391 = vrot.slane %v3090, 4
      %v4392 = vadd.f32 %v3090, %v4391
      %v4393 = vrot.slane %v4392, 2
      %v4394 = vadd.f32 %v4392, %v4393
      %v4395 = vrot.slane %v4394, 1
      %v4396 = vadd.f32 %v4394, %v4395
      %v4397 = vrot.slane %v3091, 4
      %v4398 = vadd.f32 %v3091, %v4397
      %v4399 = vrot.slane %v4398, 2
      %v4400 = vadd.f32 %v4398, %v4399
      %v4401 = vrot.slane %v4400, 1
      %v4402 = vadd.f32 %v4400, %v4401
      %v4403 = vrot.slane %v3092, 4
      %v4404 = vadd.f32 %v3092, %v4403
      %v4405 = vrot.slane %v4404, 2
      %v4406 = vadd.f32 %v4404, %v4405
      %v4407 = vrot.slane %v4406, 1
      %v4408 = vadd.f32 %v4406, %v4407
      %v4409 = vrot.slane %v3093, 4
      %v4410 = vadd.f32 %v3093, %v4409
      %v4411 = vrot.slane %v4410, 2
      %v4412 = vadd.f32 %v4410, %v4411
      %v4413 = vrot.slane %v4412, 1
      %v4414 = vadd.f32 %v4412, %v4413
      %v4415 = vrot.slane %v3094, 4
      %v4416 = vadd.f32 %v3094, %v4415
      %v4417 = vrot.slane %v4416, 2
      %v4418 = vadd.f32 %v4416, %v4417
      %v4419 = vrot.slane %v4418, 1
      %v4420 = vadd.f32 %v4418, %v4419
      %v4421 = vrot.slane %v3095, 4
      %v4422 = vadd.f32 %v3095, %v4421
      %v4423 = vrot.slane %v4422, 2
      %v4424 = vadd.f32 %v4422, %v4423
      %v4425 = vrot.slane %v4424, 1
      %v4426 = vadd.f32 %v4424, %v4425
      %v4427 = vrot.slane %v3096, 4
      %v4428 = vadd.f32 %v3096, %v4427
      %v4429 = vrot.slane %v4428, 2
      %v4430 = vadd.f32 %v4428, %v4429
      %v4431 = vrot.slane %v4430, 1
      %v4432 = vadd.f32 %v4430, %v4431
      %v4433 = vrot.slane %v3097, 4
      %v4434 = vadd.f32 %v3097, %v4433
      %v4435 = vrot.slane %v4434, 2
      %v4436 = vadd.f32 %v4434, %v4435
      %v4437 = vrot.slane %v4436, 1
      %v4438 = vadd.f32 %v4436, %v4437
      %v4439 = vrot.slane %v3098, 4
      %v4440 = vadd.f32 %v3098, %v4439
      %v4441 = vrot.slane %v4440, 2
      %v4442 = vadd.f32 %v4440, %v4441
      %v4443 = vrot.slane %v4442, 1
      %v4444 = vadd.f32 %v4442, %v4443
      %v4445 = vrot.slane %v3099, 4
      %v4446 = vadd.f32 %v3099, %v4445
      %v4447 = vrot.slane %v4446, 2
      %v4448 = vadd.f32 %v4446, %v4447
      %v4449 = vrot.slane %v4448, 1
      %v4450 = vadd.f32 %v4448, %v4449
      %v4451 = vrot.slane %v3100, 4
      %v4452 = vadd.f32 %v3100, %v4451
      %v4453 = vrot.slane %v4452, 2
      %v4454 = vadd.f32 %v4452, %v4453
      %v4455 = vrot.slane %v4454, 1
      %v4456 = vadd.f32 %v4454, %v4455
      %v4457 = vrot.slane %v3101, 4
      %v4458 = vadd.f32 %v3101, %v4457
      %v4459 = vrot.slane %v4458, 2
      %v4460 = vadd.f32 %v4458, %v4459
      %v4461 = vrot.slane %v4460, 1
      %v4462 = vadd.f32 %v4460, %v4461
      %v4463 = vrot.slane %v3102, 4
      %v4464 = vadd.f32 %v3102, %v4463
      %v4465 = vrot.slane %v4464, 2
      %v4466 = vadd.f32 %v4464, %v4465
      %v4467 = vrot.slane %v4466, 1
      %v4468 = vadd.f32 %v4466, %v4467
      %v4469 = vrot.slane %v3103, 4
      %v4470 = vadd.f32 %v3103, %v4469
      %v4471 = vrot.slane %v4470, 2
      %v4472 = vadd.f32 %v4470, %v4471
      %v4473 = vrot.slane %v4472, 1
      %v4474 = vadd.f32 %v4472, %v4473
      %v4475 = vrot.slane %v3104, 4
      %v4476 = vadd.f32 %v3104, %v4475
      %v4477 = vrot.slane %v4476, 2
      %v4478 = vadd.f32 %v4476, %v4477
      %v4479 = vrot.slane %v4478, 1
      %v4480 = vadd.f32 %v4478, %v4479
      %v4481 = vrot.slane %v3105, 4
      %v4482 = vadd.f32 %v3105, %v4481
      %v4483 = vrot.slane %v4482, 2
      %v4484 = vadd.f32 %v4482, %v4483
      %v4485 = vrot.slane %v4484, 1
      %v4486 = vadd.f32 %v4484, %v4485
      %v4487 = vrot.slane %v3106, 4
      %v4488 = vadd.f32 %v3106, %v4487
      %v4489 = vrot.slane %v4488, 2
      %v4490 = vadd.f32 %v4488, %v4489
      %v4491 = vrot.slane %v4490, 1
      %v4492 = vadd.f32 %v4490, %v4491
      %v4493 = vrot.slane %v3107, 4
      %v4494 = vadd.f32 %v3107, %v4493
      %v4495 = vrot.slane %v4494, 2
      %v4496 = vadd.f32 %v4494, %v4495
      %v4497 = vrot.slane %v4496, 1
      %v4498 = vadd.f32 %v4496, %v4497
      %v4499 = vrot.slane %v3108, 4
      %v4500 = vadd.f32 %v3108, %v4499
      %v4501 = vrot.slane %v4500, 2
      %v4502 = vadd.f32 %v4500, %v4501
      %v4503 = vrot.slane %v4502, 1
      %v4504 = vadd.f32 %v4502, %v4503
      %v4505 = vrot.slane %v3109, 4
      %v4506 = vadd.f32 %v3109, %v4505
      %v4507 = vrot.slane %v4506, 2
      %v4508 = vadd.f32 %v4506, %v4507
      %v4509 = vrot.slane %v4508, 1
      %v4510 = vadd.f32 %v4508, %v4509
      %v4511 = vrot.slane %v3110, 4
      %v4512 = vadd.f32 %v3110, %v4511
      %v4513 = vrot.slane %v4512, 2
      %v4514 = vadd.f32 %v4512, %v4513
      %v4515 = vrot.slane %v4514, 1
      %v4516 = vadd.f32 %v4514, %v4515
      %v4517 = vrot.slane %v3111, 4
      %v4518 = vadd.f32 %v3111, %v4517
      %v4519 = vrot.slane %v4518, 2
      %v4520 = vadd.f32 %v4518, %v4519
      %v4521 = vrot.slane %v4520, 1
      %v4522 = vadd.f32 %v4520, %v4521
      %v4523 = vrot.slane %v3112, 4
      %v4524 = vadd.f32 %v3112, %v4523
      %v4525 = vrot.slane %v4524, 2
      %v4526 = vadd.f32 %v4524, %v4525
      %v4527 = vrot.slane %v4526, 1
      %v4528 = vadd.f32 %v4526, %v4527
      %v4529 = vrot.slane %v3113, 4
      %v4530 = vadd.f32 %v3113, %v4529
      %v4531 = vrot.slane %v4530, 2
      %v4532 = vadd.f32 %v4530, %v4531
      %v4533 = vrot.slane %v4532, 1
      %v4534 = vadd.f32 %v4532, %v4533
      %v4535 = vrot.slane %v3114, 4
      %v4536 = vadd.f32 %v3114, %v4535
      %v4537 = vrot.slane %v4536, 2
      %v4538 = vadd.f32 %v4536, %v4537
      %v4539 = vrot.slane %v4538, 1
      %v4540 = vadd.f32 %v4538, %v4539
      %v4541 = vrot.slane %v3115, 4
      %v4542 = vadd.f32 %v3115, %v4541
      %v4543 = vrot.slane %v4542, 2
      %v4544 = vadd.f32 %v4542, %v4543
      %v4545 = vrot.slane %v4544, 1
      %v4546 = vadd.f32 %v4544, %v4545
      %v4547 = vrot.slane %v3116, 4
      %v4548 = vadd.f32 %v3116, %v4547
      %v4549 = vrot.slane %v4548, 2
      %v4550 = vadd.f32 %v4548, %v4549
      %v4551 = vrot.slane %v4550, 1
      %v4552 = vadd.f32 %v4550, %v4551
      %v4553 = vrot.slane %v3117, 4
      %v4554 = vadd.f32 %v3117, %v4553
      %v4555 = vrot.slane %v4554, 2
      %v4556 = vadd.f32 %v4554, %v4555
      %v4557 = vrot.slane %v4556, 1
      %v4558 = vadd.f32 %v4556, %v4557
      %v4559 = vrot.slane %v3118, 4
      %v4560 = vadd.f32 %v3118, %v4559
      %v4561 = vrot.slane %v4560, 2
      %v4562 = vadd.f32 %v4560, %v4561
      %v4563 = vrot.slane %v4562, 1
      %v4564 = vadd.f32 %v4562, %v4563
      %v4565 = vrot.slane %v3119, 4
      %v4566 = vadd.f32 %v3119, %v4565
      %v4567 = vrot.slane %v4566, 2
      %v4568 = vadd.f32 %v4566, %v4567
      %v4569 = vrot.slane %v4568, 1
      %v4570 = vadd.f32 %v4568, %v4569
      %v4571 = vrot.slane %v3120, 4
      %v4572 = vadd.f32 %v3120, %v4571
      %v4573 = vrot.slane %v4572, 2
      %v4574 = vadd.f32 %v4572, %v4573
      %v4575 = vrot.slane %v4574, 1
      %v4576 = vadd.f32 %v4574, %v4575
      %v4577 = vrot.slane %v3121, 4
      %v4578 = vadd.f32 %v3121, %v4577
      %v4579 = vrot.slane %v4578, 2
      %v4580 = vadd.f32 %v4578, %v4579
      %v4581 = vrot.slane %v4580, 1
      %v4582 = vadd.f32 %v4580, %v4581
      %v4583 = vrot.slane %v3122, 4
      %v4584 = vadd.f32 %v3122, %v4583
      %v4585 = vrot.slane %v4584, 2
      %v4586 = vadd.f32 %v4584, %v4585
      %v4587 = vrot.slane %v4586, 1
      %v4588 = vadd.f32 %v4586, %v4587
      %v4589 = vrot.slane %v3123, 4
      %v4590 = vadd.f32 %v3123, %v4589
      %v4591 = vrot.slane %v4590, 2
      %v4592 = vadd.f32 %v4590, %v4591
      %v4593 = vrot.slane %v4592, 1
      %v4594 = vadd.f32 %v4592, %v4593
      %v4595 = vrot.slane %v3124, 4
      %v4596 = vadd.f32 %v3124, %v4595
      %v4597 = vrot.slane %v4596, 2
      %v4598 = vadd.f32 %v4596, %v4597
      %v4599 = vrot.slane %v4598, 1
      %v4600 = vadd.f32 %v4598, %v4599
      %v4601 = vrot.slane %v3125, 4
      %v4602 = vadd.f32 %v3125, %v4601
      %v4603 = vrot.slane %v4602, 2
      %v4604 = vadd.f32 %v4602, %v4603
      %v4605 = vrot.slane %v4604, 1
      %v4606 = vadd.f32 %v4604, %v4605
      %v4607 = vrot.slane %v3126, 4
      %v4608 = vadd.f32 %v3126, %v4607
      %v4609 = vrot.slane %v4608, 2
      %v4610 = vadd.f32 %v4608, %v4609
      %v4611 = vrot.slane %v4610, 1
      %v4612 = vadd.f32 %v4610, %v4611
      %v4613 = vrot.slane %v3127, 4
      %v4614 = vadd.f32 %v3127, %v4613
      %v4615 = vrot.slane %v4614, 2
      %v4616 = vadd.f32 %v4614, %v4615
      %v4617 = vrot.slane %v4616, 1
      %v4618 = vadd.f32 %v4616, %v4617
      %v4619 = vrot.slane %v3128, 4
      %v4620 = vadd.f32 %v3128, %v4619
      %v4621 = vrot.slane %v4620, 2
      %v4622 = vadd.f32 %v4620, %v4621
      %v4623 = vrot.slane %v4622, 1
      %v4624 = vadd.f32 %v4622, %v4623
      %v4625 = vrot.slane %v3129, 4
      %v4626 = vadd.f32 %v3129, %v4625
      %v4627 = vrot.slane %v4626, 2
      %v4628 = vadd.f32 %v4626, %v4627
      %v4629 = vrot.slane %v4628, 1
      %v4630 = vadd.f32 %v4628, %v4629
      %v4631 = vrot.slane %v3130, 4
      %v4632 = vadd.f32 %v3130, %v4631
      %v4633 = vrot.slane %v4632, 2
      %v4634 = vadd.f32 %v4632, %v4633
      %v4635 = vrot.slane %v4634, 1
      %v4636 = vadd.f32 %v4634, %v4635
      %v4637 = vrot.slane %v3131, 4
      %v4638 = vadd.f32 %v3131, %v4637
      %v4639 = vrot.slane %v4638, 2
      %v4640 = vadd.f32 %v4638, %v4639
      %v4641 = vrot.slane %v4640, 1
      %v4642 = vadd.f32 %v4640, %v4641
      %v4643 = vrot.slane %v3132, 4
      %v4644 = vadd.f32 %v3132, %v4643
      %v4645 = vrot.slane %v4644, 2
      %v4646 = vadd.f32 %v4644, %v4645
      %v4647 = vrot.slane %v4646, 1
      %v4648 = vadd.f32 %v4646, %v4647
      %v4649 = vrot.slane %v3133, 4
      %v4650 = vadd.f32 %v3133, %v4649
      %v4651 = vrot.slane %v4650, 2
      %v4652 = vadd.f32 %v4650, %v4651
      %v4653 = vrot.slane %v4652, 1
      %v4654 = vadd.f32 %v4652, %v4653
      %v4655 = vrot.slane %v3134, 4
      %v4656 = vadd.f32 %v3134, %v4655
      %v4657 = vrot.slane %v4656, 2
      %v4658 = vadd.f32 %v4656, %v4657
      %v4659 = vrot.slane %v4658, 1
      %v4660 = vadd.f32 %v4658, %v4659
      %v4661 = vrot.slane %v3135, 4
      %v4662 = vadd.f32 %v3135, %v4661
      %v4663 = vrot.slane %v4662, 2
      %v4664 = vadd.f32 %v4662, %v4663
      %v4665 = vrot.slane %v4664, 1
      %v4666 = vadd.f32 %v4664, %v4665
      %v4667 = vrot.slane %v3136, 4
      %v4668 = vadd.f32 %v3136, %v4667
      %v4669 = vrot.slane %v4668, 2
      %v4670 = vadd.f32 %v4668, %v4669
      %v4671 = vrot.slane %v4670, 1
      %v4672 = vadd.f32 %v4670, %v4671
      %v4673 = vld [vmem:[%s215] sm:$0xf]
      %v4674 = vld [vmem:[%s215 + $0x4] sm:$0xf]
      %v4675 = vld [vmem:[%s215 + $0x8] sm:$0xf]
      %v4676 = vld [vmem:[%s215 + $0xc] sm:$0xf]
      %v4677 = vld [vmem:[%s215 + $0x10] sm:$0xf]
      %v4678 = vld [vmem:[%s215 + $0x14] sm:$0xf]
      %v4679 = vld [vmem:[%s215 + $0x18] sm:$0xf]
      %v4680 = vld [vmem:[%s215 + $0x1c] sm:$0xf]
      %v4681 = vld [vmem:[%s215 + $0x20] sm:$0xf]
      %v4682 = vld [vmem:[%s215 + $0x24] sm:$0xf]
      %v4683 = vld [vmem:[%s215 + $0x28] sm:$0xf]
      %v4684 = vld [vmem:[%s215 + $0x2c] sm:$0xf]
      %v4685 = vld [vmem:[%s215 + $0x30] sm:$0xf]
      %v4686 = vld [vmem:[%s215 + $0x34] sm:$0xf]
      %v4687 = vld [vmem:[%s215 + $0x38] sm:$0xf]
      %v4688 = vld [vmem:[%s215 + $0x3c] sm:$0xf]
      %v4689 = vld [vmem:[%s215 + $0x40] sm:$0xf]
      %v4690 = vld [vmem:[%s215 + $0x44] sm:$0xf]
      %v4691 = vld [vmem:[%s215 + $0x48] sm:$0xf]
      %v4692 = vld [vmem:[%s215 + $0x4c] sm:$0xf]
      %v4693 = vld [vmem:[%s215 + $0x50] sm:$0xf]
      %v4694 = vld [vmem:[%s215 + $0x54] sm:$0xf]
      %v4695 = vld [vmem:[%s215 + $0x58] sm:$0xf]
      %v4696 = vld [vmem:[%s215 + $0x5c] sm:$0xf]
      %v4697 = vld [vmem:[%s215 + $0x60] sm:$0xf]
      %v4698 = vld [vmem:[%s215 + $0x64] sm:$0xf]
      %v4699 = vld [vmem:[%s215 + $0x68] sm:$0xf]
      %v4700 = vld [vmem:[%s215 + $0x6c] sm:$0xf]
      %v4701 = vld [vmem:[%s215 + $0x70] sm:$0xf]
      %v4702 = vld [vmem:[%s215 + $0x74] sm:$0xf]
      %v4703 = vld [vmem:[%s215 + $0x78] sm:$0xf]
      %v4704 = vld [vmem:[%s215 + $0x7c] sm:$0xf]
      %v4737 = vunpack.c.l.b16 %v4673
      %v4738 = vunpack.c.l.b16 %v4674
      %v4739 = vunpack.c.l.b16 %v4675
      %v4740 = vunpack.c.l.b16 %v4676
      %v4741 = vunpack.c.l.b16 %v4677
      %v4742 = vunpack.c.l.b16 %v4678
      %v4743 = vunpack.c.l.b16 %v4679
      %v4744 = vunpack.c.l.b16 %v4680
      %v4745 = vunpack.c.l.b16 %v4681
      %v4746 = vunpack.c.l.b16 %v4682
      %v4747 = vunpack.c.l.b16 %v4683
      %v4748 = vunpack.c.l.b16 %v4684
      %v4749 = vunpack.c.l.b16 %v4685
      %v4750 = vunpack.c.l.b16 %v4686
      %v4751 = vunpack.c.l.b16 %v4687
      %v4752 = vunpack.c.l.b16 %v4688
      %v4753 = vunpack.c.l.b16 %v4689
      %v4754 = vunpack.c.l.b16 %v4690
      %v4755 = vunpack.c.l.b16 %v4691
      %v4756 = vunpack.c.l.b16 %v4692
      %v4757 = vunpack.c.l.b16 %v4693
      %v4758 = vunpack.c.l.b16 %v4694
      %v4759 = vunpack.c.l.b16 %v4695
      %v4760 = vunpack.c.l.b16 %v4696
      %v4761 = vunpack.c.l.b16 %v4697
      %v4762 = vunpack.c.l.b16 %v4698
      %v4763 = vunpack.c.l.b16 %v4699
      %v4764 = vunpack.c.l.b16 %v4700
      %v4765 = vunpack.c.l.b16 %v4701
      %v4766 = vunpack.c.l.b16 %v4702
      %v4767 = vunpack.c.l.b16 %v4703
      %v4768 = vunpack.c.l.b16 %v4704
      %v4769 = vpack.c.b16 %v4738, %v4737
      %v4770 = vpack.c.b16 %v4740, %v4739
      %v4771 = vpack.c.b16 %v4742, %v4741
      %v4772 = vpack.c.b16 %v4744, %v4743
      %v4773 = vpack.c.b16 %v4746, %v4745
      %v4774 = vpack.c.b16 %v4748, %v4747
      %v4775 = vpack.c.b16 %v4750, %v4749
      %v4776 = vpack.c.b16 %v4752, %v4751
      %v4777 = vpack.c.b16 %v4754, %v4753
      %v4778 = vpack.c.b16 %v4756, %v4755
      %v4779 = vpack.c.b16 %v4758, %v4757
      %v4780 = vpack.c.b16 %v4760, %v4759
      %v4781 = vpack.c.b16 %v4762, %v4761
      %v4782 = vpack.c.b16 %v4764, %v4763
      %v4783 = vpack.c.b16 %v4766, %v4765
      %v4784 = vpack.c.b16 %v4768, %v4767
      %4801 = vst [vmem:[#allocation2] sm:$0xff] %v4769
      %4802 = vst [vmem:[#allocation2 + $0x10] sm:$0xff] %v4770
      %4803 = vst [vmem:[#allocation2 + $0x20] sm:$0xff] %v4771
      %4804 = vst [vmem:[#allocation2 + $0x30] sm:$0xff] %v4772
      %4805 = vst [vmem:[#allocation2 + $0x40] sm:$0xff] %v4773
      %4806 = vst [vmem:[#allocation2 + $0x50] sm:$0xff] %v4774
      %4807 = vst [vmem:[#allocation2 + $0x60] sm:$0xff] %v4775
      %4808 = vst [vmem:[#allocation2 + $0x70] sm:$0xff] %v4776
      %4809 = vst [vmem:[#allocation2 + $0x80] sm:$0xff] %v4777
      %4810 = vst [vmem:[#allocation2 + $0x90] sm:$0xff] %v4778
      %4811 = vst [vmem:[#allocation2 + $0xa0] sm:$0xff] %v4779
      %4812 = vst [vmem:[#allocation2 + $0xb0] sm:$0xff] %v4780
      %4813 = vst [vmem:[#allocation2 + $0xc0] sm:$0xff] %v4781
      %4814 = vst [vmem:[#allocation2 + $0xd0] sm:$0xff] %v4782
      %4815 = vst [vmem:[#allocation2 + $0xe0] sm:$0xff] %v4783
      %4816 = vst [vmem:[#allocation2 + $0xf0] sm:$0xff] %v4784
      %v4817 = vpack.c.bf16 %v3142, %v3142
      %v4818 = vpack.c.bf16 %v3148, %v3148
      %v4819 = vpack.c.bf16 %v3154, %v3154
      %v4820 = vpack.c.bf16 %v3160, %v3160
      %v4821 = vpack.c.bf16 %v3166, %v3166
      %v4822 = vpack.c.bf16 %v3172, %v3172
      %v4823 = vpack.c.bf16 %v3178, %v3178
      %v4824 = vpack.c.bf16 %v3184, %v3184
      %v4825 = vpack.c.bf16 %v3190, %v3190
      %v4826 = vpack.c.bf16 %v3196, %v3196
      %v4827 = vpack.c.bf16 %v3202, %v3202
      %v4828 = vpack.c.bf16 %v3208, %v3208
      %v4829 = vpack.c.bf16 %v3214, %v3214
      %v4830 = vpack.c.bf16 %v3220, %v3220
      %v4831 = vpack.c.bf16 %v3226, %v3226
      %v4832 = vpack.c.bf16 %v3232, %v3232
      %v4833 = vpack.c.bf16 %v3238, %v3238
      %v4834 = vpack.c.bf16 %v3244, %v3244
      %v4835 = vpack.c.bf16 %v3250, %v3250
      %v4836 = vpack.c.bf16 %v3256, %v3256
      %v4837 = vpack.c.bf16 %v3262, %v3262
      %v4838 = vpack.c.bf16 %v3268, %v3268
      %v4839 = vpack.c.bf16 %v3274, %v3274
      %v4840 = vpack.c.bf16 %v3280, %v3280
      %v4841 = vpack.c.bf16 %v3286, %v3286
      %v4842 = vpack.c.bf16 %v3292, %v3292
      %v4843 = vpack.c.bf16 %v3298, %v3298
      %v4844 = vpack.c.bf16 %v3304, %v3304
      %v4845 = vpack.c.bf16 %v3310, %v3310
      %v4846 = vpack.c.bf16 %v3316, %v3316
      %v4847 = vpack.c.bf16 %v3322, %v3322
      %v4848 = vpack.c.bf16 %v3328, %v3328
      %v4849 = vpack.c.bf16 %v3334, %v3334
      %v4850 = vpack.c.bf16 %v3340, %v3340
      %v4851 = vpack.c.bf16 %v3346, %v3346
      %v4852 = vpack.c.bf16 %v3352, %v3352
      %v4853 = vpack.c.bf16 %v3358, %v3358
      %v4854 = vpack.c.bf16 %v3364, %v3364
      %v4855 = vpack.c.bf16 %v3370, %v3370
      %v4856 = vpack.c.bf16 %v3376, %v3376
      %v4857 = vpack.c.bf16 %v3382, %v3382
      %v4858 = vpack.c.bf16 %v3388, %v3388
      %v4859 = vpack.c.bf16 %v3394, %v3394
      %v4860 = vpack.c.bf16 %v3400, %v3400
      %v4861 = vpack.c.bf16 %v3406, %v3406
      %v4862 = vpack.c.bf16 %v3412, %v3412
      %v4863 = vpack.c.bf16 %v3418, %v3418
      %v4864 = vpack.c.bf16 %v3424, %v3424
      %v4865 = vpack.c.bf16 %v3430, %v3430
      %v4866 = vpack.c.bf16 %v3436, %v3436
      %v4867 = vpack.c.bf16 %v3442, %v3442
      %v4868 = vpack.c.bf16 %v3448, %v3448
      %v4869 = vpack.c.bf16 %v3454, %v3454
      %v4870 = vpack.c.bf16 %v3460, %v3460
      %v4871 = vpack.c.bf16 %v3466, %v3466
      %v4872 = vpack.c.bf16 %v3472, %v3472
      %v4873 = vpack.c.bf16 %v3478, %v3478
      %v4874 = vpack.c.bf16 %v3484, %v3484
      %v4875 = vpack.c.bf16 %v3490, %v3490
      %v4876 = vpack.c.bf16 %v3496, %v3496
      %v4877 = vpack.c.bf16 %v3502, %v3502
      %v4878 = vpack.c.bf16 %v3508, %v3508
      %v4879 = vpack.c.bf16 %v3514, %v3514
      %v4880 = vpack.c.bf16 %v3520, %v3520
      %v4881 = vpack.c.bf16 %v3526, %v3526
      %v4882 = vpack.c.bf16 %v3532, %v3532
      %v4883 = vpack.c.bf16 %v3538, %v3538
      %v4884 = vpack.c.bf16 %v3544, %v3544
      %v4885 = vpack.c.bf16 %v3550, %v3550
      %v4886 = vpack.c.bf16 %v3556, %v3556
      %v4887 = vpack.c.bf16 %v3562, %v3562
      %v4888 = vpack.c.bf16 %v3568, %v3568
      %v4889 = vpack.c.bf16 %v3574, %v3574
      %v4890 = vpack.c.bf16 %v3580, %v3580
      %v4891 = vpack.c.bf16 %v3586, %v3586
      %v4892 = vpack.c.bf16 %v3592, %v3592
      %v4893 = vpack.c.bf16 %v3598, %v3598
      %v4894 = vpack.c.bf16 %v3604, %v3604
      %v4895 = vpack.c.bf16 %v3610, %v3610
      %v4896 = vpack.c.bf16 %v3616, %v3616
      %v4897 = vpack.c.bf16 %v3622, %v3622
      %v4898 = vpack.c.bf16 %v3628, %v3628
      %v4899 = vpack.c.bf16 %v3634, %v3634
      %v4900 = vpack.c.bf16 %v3640, %v3640
      %v4901 = vpack.c.bf16 %v3646, %v3646
      %v4902 = vpack.c.bf16 %v3652, %v3652
      %v4903 = vpack.c.bf16 %v3658, %v3658
      %v4904 = vpack.c.bf16 %v3664, %v3664
      %v4905 = vpack.c.bf16 %v3670, %v3670
      %v4906 = vpack.c.bf16 %v3676, %v3676
      %v4907 = vpack.c.bf16 %v3682, %v3682
      %v4908 = vpack.c.bf16 %v3688, %v3688
      %v4909 = vpack.c.bf16 %v3694, %v3694
      %v4910 = vpack.c.bf16 %v3700, %v3700
      %v4911 = vpack.c.bf16 %v3706, %v3706
      %v4912 = vpack.c.bf16 %v3712, %v3712
      %v4913 = vpack.c.bf16 %v3718, %v3718
      %v4914 = vpack.c.bf16 %v3724, %v3724
      %v4915 = vpack.c.bf16 %v3730, %v3730
      %v4916 = vpack.c.bf16 %v3736, %v3736
      %v4917 = vpack.c.bf16 %v3742, %v3742
      %v4918 = vpack.c.bf16 %v3748, %v3748
      %v4919 = vpack.c.bf16 %v3754, %v3754
      %v4920 = vpack.c.bf16 %v3760, %v3760
      %v4921 = vpack.c.bf16 %v3766, %v3766
      %v4922 = vpack.c.bf16 %v3772, %v3772
      %v4923 = vpack.c.bf16 %v3778, %v3778
      %v4924 = vpack.c.bf16 %v3784, %v3784
      %v4925 = vpack.c.bf16 %v3790, %v3790
      %v4926 = vpack.c.bf16 %v3796, %v3796
      %v4927 = vpack.c.bf16 %v3802, %v3802
      %v4928 = vpack.c.bf16 %v3808, %v3808
      %v4929 = vpack.c.bf16 %v3814, %v3814
      %v4930 = vpack.c.bf16 %v3820, %v3820
      %v4931 = vpack.c.bf16 %v3826, %v3826
      %v4932 = vpack.c.bf16 %v3832, %v3832
      %v4933 = vpack.c.bf16 %v3838, %v3838
      %v4934 = vpack.c.bf16 %v3844, %v3844
      %v4935 = vpack.c.bf16 %v3850, %v3850
      %v4936 = vpack.c.bf16 %v3856, %v3856
      %v4937 = vpack.c.bf16 %v3862, %v3862
      %v4938 = vpack.c.bf16 %v3868, %v3868
      %v4939 = vpack.c.bf16 %v3874, %v3874
      %v4940 = vpack.c.bf16 %v3880, %v3880
      %v4941 = vpack.c.bf16 %v3886, %v3886
      %v4942 = vpack.c.bf16 %v3892, %v3892
      %v4943 = vpack.c.bf16 %v3898, %v3898
      %v4944 = vpack.c.bf16 %v3904, %v3904
      %v4945 = vpack.c.bf16 %v3910, %v3910
      %v4946 = vpack.c.bf16 %v3916, %v3916
      %v4947 = vpack.c.bf16 %v3922, %v3922
      %v4948 = vpack.c.bf16 %v3928, %v3928
      %v4949 = vpack.c.bf16 %v3934, %v3934
      %v4950 = vpack.c.bf16 %v3940, %v3940
      %v4951 = vpack.c.bf16 %v3946, %v3946
      %v4952 = vpack.c.bf16 %v3952, %v3952
      %v4953 = vpack.c.bf16 %v3958, %v3958
      %v4954 = vpack.c.bf16 %v3964, %v3964
      %v4955 = vpack.c.bf16 %v3970, %v3970
      %v4956 = vpack.c.bf16 %v3976, %v3976
      %v4957 = vpack.c.bf16 %v3982, %v3982
      %v4958 = vpack.c.bf16 %v3988, %v3988
      %v4959 = vpack.c.bf16 %v3994, %v3994
      %v4960 = vpack.c.bf16 %v4000, %v4000
      %v4961 = vpack.c.bf16 %v4006, %v4006
      %v4962 = vpack.c.bf16 %v4012, %v4012
      %v4963 = vpack.c.bf16 %v4018, %v4018
      %v4964 = vpack.c.bf16 %v4024, %v4024
      %v4965 = vpack.c.bf16 %v4030, %v4030
      %v4966 = vpack.c.bf16 %v4036, %v4036
      %v4967 = vpack.c.bf16 %v4042, %v4042
      %v4968 = vpack.c.bf16 %v4048, %v4048
      %v4969 = vpack.c.bf16 %v4054, %v4054
      %v4970 = vpack.c.bf16 %v4060, %v4060
      %v4971 = vpack.c.bf16 %v4066, %v4066
      %v4972 = vpack.c.bf16 %v4072, %v4072
      %v4973 = vpack.c.bf16 %v4078, %v4078
      %v4974 = vpack.c.bf16 %v4084, %v4084
      %v4975 = vpack.c.bf16 %v4090, %v4090
      %v4976 = vpack.c.bf16 %v4096, %v4096
      %v4977 = vpack.c.bf16 %v4102, %v4102
      %v4978 = vpack.c.bf16 %v4108, %v4108
      %v4979 = vpack.c.bf16 %v4114, %v4114
      %v4980 = vpack.c.bf16 %v4120, %v4120
      %v4981 = vpack.c.bf16 %v4126, %v4126
      %v4982 = vpack.c.bf16 %v4132, %v4132
      %v4983 = vpack.c.bf16 %v4138, %v4138
      %v4984 = vpack.c.bf16 %v4144, %v4144
      %v4985 = vpack.c.bf16 %v4150, %v4150
      %v4986 = vpack.c.bf16 %v4156, %v4156
      %v4987 = vpack.c.bf16 %v4162, %v4162
      %v4988 = vpack.c.bf16 %v4168, %v4168
      %v4989 = vpack.c.bf16 %v4174, %v4174
      %v4990 = vpack.c.bf16 %v4180, %v4180
      %v4991 = vpack.c.bf16 %v4186, %v4186
      %v4992 = vpack.c.bf16 %v4192, %v4192
      %v4993 = vpack.c.bf16 %v4198, %v4198
      %v4994 = vpack.c.bf16 %v4204, %v4204
      %v4995 = vpack.c.bf16 %v4210, %v4210
      %v4996 = vpack.c.bf16 %v4216, %v4216
      %v4997 = vpack.c.bf16 %v4222, %v4222
      %v4998 = vpack.c.bf16 %v4228, %v4228
      %v4999 = vpack.c.bf16 %v4234, %v4234
      %v5000 = vpack.c.bf16 %v4240, %v4240
      %v5001 = vpack.c.bf16 %v4246, %v4246
      %v5002 = vpack.c.bf16 %v4252, %v4252
      %v5003 = vpack.c.bf16 %v4258, %v4258
      %v5004 = vpack.c.bf16 %v4264, %v4264
      %v5005 = vpack.c.bf16 %v4270, %v4270
      %v5006 = vpack.c.bf16 %v4276, %v4276
      %v5007 = vpack.c.bf16 %v4282, %v4282
      %v5008 = vpack.c.bf16 %v4288, %v4288
      %v5009 = vpack.c.bf16 %v4294, %v4294
      %v5010 = vpack.c.bf16 %v4300, %v4300
      %v5011 = vpack.c.bf16 %v4306, %v4306
      %v5012 = vpack.c.bf16 %v4312, %v4312
      %v5013 = vpack.c.bf16 %v4318, %v4318
      %v5014 = vpack.c.bf16 %v4324, %v4324
      %v5015 = vpack.c.bf16 %v4330, %v4330
      %v5016 = vpack.c.bf16 %v4336, %v4336
      %v5017 = vpack.c.bf16 %v4342, %v4342
      %v5018 = vpack.c.bf16 %v4348, %v4348
      %v5019 = vpack.c.bf16 %v4354, %v4354
      %v5020 = vpack.c.bf16 %v4360, %v4360
      %v5021 = vpack.c.bf16 %v4366, %v4366
      %v5022 = vpack.c.bf16 %v4372, %v4372
      %v5023 = vpack.c.bf16 %v4378, %v4378
      %v5024 = vpack.c.bf16 %v4384, %v4384
      %v5025 = vpack.c.bf16 %v4390, %v4390
      %v5026 = vpack.c.bf16 %v4396, %v4396
      %v5027 = vpack.c.bf16 %v4402, %v4402
      %v5028 = vpack.c.bf16 %v4408, %v4408
      %v5029 = vpack.c.bf16 %v4414, %v4414
      %v5030 = vpack.c.bf16 %v4420, %v4420
      %v5031 = vpack.c.bf16 %v4426, %v4426
      %v5032 = vpack.c.bf16 %v4432, %v4432
      %v5033 = vpack.c.bf16 %v4438, %v4438
      %v5034 = vpack.c.bf16 %v4444, %v4444
      %v5035 = vpack.c.bf16 %v4450, %v4450
      %v5036 = vpack.c.bf16 %v4456, %v4456
      %v5037 = vpack.c.bf16 %v4462, %v4462
      %v5038 = vpack.c.bf16 %v4468, %v4468
      %v5039 = vpack.c.bf16 %v4474, %v4474
      %v5040 = vpack.c.bf16 %v4480, %v4480
      %v5041 = vpack.c.bf16 %v4486, %v4486
      %v5042 = vpack.c.bf16 %v4492, %v4492
      %v5043 = vpack.c.bf16 %v4498, %v4498
      %v5044 = vpack.c.bf16 %v4504, %v4504
      %v5045 = vpack.c.bf16 %v4510, %v4510
      %v5046 = vpack.c.bf16 %v4516, %v4516
      %v5047 = vpack.c.bf16 %v4522, %v4522
      %v5048 = vpack.c.bf16 %v4528, %v4528
      %v5049 = vpack.c.bf16 %v4534, %v4534
      %v5050 = vpack.c.bf16 %v4540, %v4540
      %v5051 = vpack.c.bf16 %v4546, %v4546
      %v5052 = vpack.c.bf16 %v4552, %v4552
      %v5053 = vpack.c.bf16 %v4558, %v4558
      %v5054 = vpack.c.bf16 %v4564, %v4564
      %v5055 = vpack.c.bf16 %v4570, %v4570
      %v5056 = vpack.c.bf16 %v4576, %v4576
      %v5057 = vpack.c.bf16 %v4582, %v4582
      %v5058 = vpack.c.bf16 %v4588, %v4588
      %v5059 = vpack.c.bf16 %v4594, %v4594
      %v5060 = vpack.c.bf16 %v4600, %v4600
      %v5061 = vpack.c.bf16 %v4606, %v4606
      %v5062 = vpack.c.bf16 %v4612, %v4612
      %v5063 = vpack.c.bf16 %v4618, %v4618
      %v5064 = vpack.c.bf16 %v4624, %v4624
      %v5065 = vpack.c.bf16 %v4630, %v4630
      %v5066 = vpack.c.bf16 %v4636, %v4636
      %v5067 = vpack.c.bf16 %v4642, %v4642
      %v5068 = vpack.c.bf16 %v4648, %v4648
      %v5069 = vpack.c.bf16 %v4654, %v4654
      %v5070 = vpack.c.bf16 %v4660, %v4660
      %v5071 = vpack.c.bf16 %v4666, %v4666
      %v5072 = vpack.c.bf16 %v4672, %v4672
      %v5329 = vunpack.c.l.b16 %v4817
      %v5330 = vunpack.c.l.b16 %v4818
      %v5331 = vunpack.c.l.b16 %v4819
      %v5332 = vunpack.c.l.b16 %v4820
      %v5333 = vunpack.c.l.b16 %v4821
      %v5334 = vunpack.c.l.b16 %v4822
      %v5335 = vunpack.c.l.b16 %v4823
      %v5336 = vunpack.c.l.b16 %v4824
      %v5337 = vunpack.c.l.b16 %v4825
      %v5338 = vunpack.c.l.b16 %v4826
      %v5339 = vunpack.c.l.b16 %v4827
      %v5340 = vunpack.c.l.b16 %v4828
      %v5341 = vunpack.c.l.b16 %v4829
      %v5342 = vunpack.c.l.b16 %v4830
      %v5343 = vunpack.c.l.b16 %v4831
      %v5344 = vunpack.c.l.b16 %v4832
      %v5345 = vunpack.c.l.b16 %v4833
      %v5346 = vunpack.c.l.b16 %v4834
      %v5347 = vunpack.c.l.b16 %v4835
      %v5348 = vunpack.c.l.b16 %v4836
      %v5349 = vunpack.c.l.b16 %v4837
      %v5350 = vunpack.c.l.b16 %v4838
      %v5351 = vunpack.c.l.b16 %v4839
      %v5352 = vunpack.c.l.b16 %v4840
      %v5353 = vunpack.c.l.b16 %v4841
      %v5354 = vunpack.c.l.b16 %v4842
      %v5355 = vunpack.c.l.b16 %v4843
      %v5356 = vunpack.c.l.b16 %v4844
      %v5357 = vunpack.c.l.b16 %v4845
      %v5358 = vunpack.c.l.b16 %v4846
      %v5359 = vunpack.c.l.b16 %v4847
      %v5360 = vunpack.c.l.b16 %v4848
      %v5361 = vunpack.c.l.b16 %v4849
      %v5362 = vunpack.c.l.b16 %v4850
      %v5363 = vunpack.c.l.b16 %v4851
      %v5364 = vunpack.c.l.b16 %v4852
      %v5365 = vunpack.c.l.b16 %v4853
      %v5366 = vunpack.c.l.b16 %v4854
      %v5367 = vunpack.c.l.b16 %v4855
      %v5368 = vunpack.c.l.b16 %v4856
      %v5369 = vunpack.c.l.b16 %v4857
      %v5370 = vunpack.c.l.b16 %v4858
      %v5371 = vunpack.c.l.b16 %v4859
      %v5372 = vunpack.c.l.b16 %v4860
      %v5373 = vunpack.c.l.b16 %v4861
      %v5374 = vunpack.c.l.b16 %v4862
      %v5375 = vunpack.c.l.b16 %v4863
      %v5376 = vunpack.c.l.b16 %v4864
      %v5377 = vunpack.c.l.b16 %v4865
      %v5378 = vunpack.c.l.b16 %v4866
      %v5379 = vunpack.c.l.b16 %v4867
      %v5380 = vunpack.c.l.b16 %v4868
      %v5381 = vunpack.c.l.b16 %v4869
      %v5382 = vunpack.c.l.b16 %v4870
      %v5383 = vunpack.c.l.b16 %v4871
      %v5384 = vunpack.c.l.b16 %v4872
      %v5385 = vunpack.c.l.b16 %v4873
      %v5386 = vunpack.c.l.b16 %v4874
      %v5387 = vunpack.c.l.b16 %v4875
      %v5388 = vunpack.c.l.b16 %v4876
      %v5389 = vunpack.c.l.b16 %v4877
      %v5390 = vunpack.c.l.b16 %v4878
      %v5391 = vunpack.c.l.b16 %v4879
      %v5392 = vunpack.c.l.b16 %v4880
      %v5393 = vunpack.c.l.b16 %v4881
      %v5394 = vunpack.c.l.b16 %v4882
      %v5395 = vunpack.c.l.b16 %v4883
      %v5396 = vunpack.c.l.b16 %v4884
      %v5397 = vunpack.c.l.b16 %v4885
      %v5398 = vunpack.c.l.b16 %v4886
      %v5399 = vunpack.c.l.b16 %v4887
      %v5400 = vunpack.c.l.b16 %v4888
      %v5401 = vunpack.c.l.b16 %v4889
      %v5402 = vunpack.c.l.b16 %v4890
      %v5403 = vunpack.c.l.b16 %v4891
      %v5404 = vunpack.c.l.b16 %v4892
      %v5405 = vunpack.c.l.b16 %v4893
      %v5406 = vunpack.c.l.b16 %v4894
      %v5407 = vunpack.c.l.b16 %v4895
      %v5408 = vunpack.c.l.b16 %v4896
      %v5409 = vunpack.c.l.b16 %v4897
      %v5410 = vunpack.c.l.b16 %v4898
      %v5411 = vunpack.c.l.b16 %v4899
      %v5412 = vunpack.c.l.b16 %v4900
      %v5413 = vunpack.c.l.b16 %v4901
      %v5414 = vunpack.c.l.b16 %v4902
      %v5415 = vunpack.c.l.b16 %v4903
      %v5416 = vunpack.c.l.b16 %v4904
      %v5417 = vunpack.c.l.b16 %v4905
      %v5418 = vunpack.c.l.b16 %v4906
      %v5419 = vunpack.c.l.b16 %v4907
      %v5420 = vunpack.c.l.b16 %v4908
      %v5421 = vunpack.c.l.b16 %v4909
      %v5422 = vunpack.c.l.b16 %v4910
      %v5423 = vunpack.c.l.b16 %v4911
      %v5424 = vunpack.c.l.b16 %v4912
      %v5425 = vunpack.c.l.b16 %v4913
      %v5426 = vunpack.c.l.b16 %v4914
      %v5427 = vunpack.c.l.b16 %v4915
      %v5428 = vunpack.c.l.b16 %v4916
      %v5429 = vunpack.c.l.b16 %v4917
      %v5430 = vunpack.c.l.b16 %v4918
      %v5431 = vunpack.c.l.b16 %v4919
      %v5432 = vunpack.c.l.b16 %v4920
      %v5433 = vunpack.c.l.b16 %v4921
      %v5434 = vunpack.c.l.b16 %v4922
      %v5435 = vunpack.c.l.b16 %v4923
      %v5436 = vunpack.c.l.b16 %v4924
      %v5437 = vunpack.c.l.b16 %v4925
      %v5438 = vunpack.c.l.b16 %v4926
      %v5439 = vunpack.c.l.b16 %v4927
      %v5440 = vunpack.c.l.b16 %v4928
      %v5441 = vunpack.c.l.b16 %v4929
      %v5442 = vunpack.c.l.b16 %v4930
      %v5443 = vunpack.c.l.b16 %v4931
      %v5444 = vunpack.c.l.b16 %v4932
      %v5445 = vunpack.c.l.b16 %v4933
      %v5446 = vunpack.c.l.b16 %v4934
      %v5447 = vunpack.c.l.b16 %v4935
      %v5448 = vunpack.c.l.b16 %v4936
      %v5449 = vunpack.c.l.b16 %v4937
      %v5450 = vunpack.c.l.b16 %v4938
      %v5451 = vunpack.c.l.b16 %v4939
      %v5452 = vunpack.c.l.b16 %v4940
      %v5453 = vunpack.c.l.b16 %v4941
      %v5454 = vunpack.c.l.b16 %v4942
      %v5455 = vunpack.c.l.b16 %v4943
      %v5456 = vunpack.c.l.b16 %v4944
      %v5457 = vunpack.c.l.b16 %v4945
      %v5458 = vunpack.c.l.b16 %v4946
      %v5459 = vunpack.c.l.b16 %v4947
      %v5460 = vunpack.c.l.b16 %v4948
      %v5461 = vunpack.c.l.b16 %v4949
      %v5462 = vunpack.c.l.b16 %v4950
      %v5463 = vunpack.c.l.b16 %v4951
      %v5464 = vunpack.c.l.b16 %v4952
      %v5465 = vunpack.c.l.b16 %v4953
      %v5466 = vunpack.c.l.b16 %v4954
      %v5467 = vunpack.c.l.b16 %v4955
      %v5468 = vunpack.c.l.b16 %v4956
      %v5469 = vunpack.c.l.b16 %v4957
      %v5470 = vunpack.c.l.b16 %v4958
      %v5471 = vunpack.c.l.b16 %v4959
      %v5472 = vunpack.c.l.b16 %v4960
      %v5473 = vunpack.c.l.b16 %v4961
      %v5474 = vunpack.c.l.b16 %v4962
      %v5475 = vunpack.c.l.b16 %v4963
      %v5476 = vunpack.c.l.b16 %v4964
      %v5477 = vunpack.c.l.b16 %v4965
      %v5478 = vunpack.c.l.b16 %v4966
      %v5479 = vunpack.c.l.b16 %v4967
      %v5480 = vunpack.c.l.b16 %v4968
      %v5481 = vunpack.c.l.b16 %v4969
      %v5482 = vunpack.c.l.b16 %v4970
      %v5483 = vunpack.c.l.b16 %v4971
      %v5484 = vunpack.c.l.b16 %v4972
      %v5485 = vunpack.c.l.b16 %v4973
      %v5486 = vunpack.c.l.b16 %v4974
      %v5487 = vunpack.c.l.b16 %v4975
      %v5488 = vunpack.c.l.b16 %v4976
      %v5489 = vunpack.c.l.b16 %v4977
      %v5490 = vunpack.c.l.b16 %v4978
      %v5491 = vunpack.c.l.b16 %v4979
      %v5492 = vunpack.c.l.b16 %v4980
      %v5493 = vunpack.c.l.b16 %v4981
      %v5494 = vunpack.c.l.b16 %v4982
      %v5495 = vunpack.c.l.b16 %v4983
      %v5496 = vunpack.c.l.b16 %v4984
      %v5497 = vunpack.c.l.b16 %v4985
      %v5498 = vunpack.c.l.b16 %v4986
      %v5499 = vunpack.c.l.b16 %v4987
      %v5500 = vunpack.c.l.b16 %v4988
      %v5501 = vunpack.c.l.b16 %v4989
      %v5502 = vunpack.c.l.b16 %v4990
      %v5503 = vunpack.c.l.b16 %v4991
      %v5504 = vunpack.c.l.b16 %v4992
      %v5505 = vunpack.c.l.b16 %v4993
      %v5506 = vunpack.c.l.b16 %v4994
      %v5507 = vunpack.c.l.b16 %v4995
      %v5508 = vunpack.c.l.b16 %v4996
      %v5509 = vunpack.c.l.b16 %v4997
      %v5510 = vunpack.c.l.b16 %v4998
      %v5511 = vunpack.c.l.b16 %v4999
      %v5512 = vunpack.c.l.b16 %v5000
      %v5513 = vunpack.c.l.b16 %v5001
      %v5514 = vunpack.c.l.b16 %v5002
      %v5515 = vunpack.c.l.b16 %v5003
      %v5516 = vunpack.c.l.b16 %v5004
      %v5517 = vunpack.c.l.b16 %v5005
      %v5518 = vunpack.c.l.b16 %v5006
      %v5519 = vunpack.c.l.b16 %v5007
      %v5520 = vunpack.c.l.b16 %v5008
      %v5521 = vunpack.c.l.b16 %v5009
      %v5522 = vunpack.c.l.b16 %v5010
      %v5523 = vunpack.c.l.b16 %v5011
      %v5524 = vunpack.c.l.b16 %v5012
      %v5525 = vunpack.c.l.b16 %v5013
      %v5526 = vunpack.c.l.b16 %v5014
      %v5527 = vunpack.c.l.b16 %v5015
      %v5528 = vunpack.c.l.b16 %v5016
      %v5529 = vunpack.c.l.b16 %v5017
      %v5530 = vunpack.c.l.b16 %v5018
      %v5531 = vunpack.c.l.b16 %v5019
      %v5532 = vunpack.c.l.b16 %v5020
      %v5533 = vunpack.c.l.b16 %v5021
      %v5534 = vunpack.c.l.b16 %v5022
      %v5535 = vunpack.c.l.b16 %v5023
      %v5536 = vunpack.c.l.b16 %v5024
      %v5537 = vunpack.c.l.b16 %v5025
      %v5538 = vunpack.c.l.b16 %v5026
      %v5539 = vunpack.c.l.b16 %v5027
      %v5540 = vunpack.c.l.b16 %v5028
      %v5541 = vunpack.c.l.b16 %v5029
      %v5542 = vunpack.c.l.b16 %v5030
      %v5543 = vunpack.c.l.b16 %v5031
      %v5544 = vunpack.c.l.b16 %v5032
      %v5545 = vunpack.c.l.b16 %v5033
      %v5546 = vunpack.c.l.b16 %v5034
      %v5547 = vunpack.c.l.b16 %v5035
      %v5548 = vunpack.c.l.b16 %v5036
      %v5549 = vunpack.c.l.b16 %v5037
      %v5550 = vunpack.c.l.b16 %v5038
      %v5551 = vunpack.c.l.b16 %v5039
      %v5552 = vunpack.c.l.b16 %v5040
      %v5553 = vunpack.c.l.b16 %v5041
      %v5554 = vunpack.c.l.b16 %v5042
      %v5555 = vunpack.c.l.b16 %v5043
      %v5556 = vunpack.c.l.b16 %v5044
      %v5557 = vunpack.c.l.b16 %v5045
      %v5558 = vunpack.c.l.b16 %v5046
      %v5559 = vunpack.c.l.b16 %v5047
      %v5560 = vunpack.c.l.b16 %v5048
      %v5561 = vunpack.c.l.b16 %v5049
      %v5562 = vunpack.c.l.b16 %v5050
      %v5563 = vunpack.c.l.b16 %v5051
      %v5564 = vunpack.c.l.b16 %v5052
      %v5565 = vunpack.c.l.b16 %v5053
      %v5566 = vunpack.c.l.b16 %v5054
      %v5567 = vunpack.c.l.b16 %v5055
      %v5568 = vunpack.c.l.b16 %v5056
      %v5569 = vunpack.c.l.b16 %v5057
      %v5570 = vunpack.c.l.b16 %v5058
      %v5571 = vunpack.c.l.b16 %v5059
      %v5572 = vunpack.c.l.b16 %v5060
      %v5573 = vunpack.c.l.b16 %v5061
      %v5574 = vunpack.c.l.b16 %v5062
      %v5575 = vunpack.c.l.b16 %v5063
      %v5576 = vunpack.c.l.b16 %v5064
      %v5577 = vunpack.c.l.b16 %v5065
      %v5578 = vunpack.c.l.b16 %v5066
      %v5579 = vunpack.c.l.b16 %v5067
      %v5580 = vunpack.c.l.b16 %v5068
      %v5581 = vunpack.c.l.b16 %v5069
      %v5582 = vunpack.c.l.b16 %v5070
      %v5583 = vunpack.c.l.b16 %v5071
      %v5584 = vunpack.c.l.b16 %v5072
      %vm5585 = vcmask 1041409
      %v5586 = vsel %vm5585, %v5330, %v5329
      %vm5587 = vcmask 1042434
      %v5588 = vsel %vm5587, %v5331, %v5586
      %vm5589 = vcmask 1043459
      %v5590 = vsel %vm5589, %v5332, %v5588
      %vm5591 = vcmask 1044484
      %v5592 = vsel %vm5591, %v5333, %v5590
      %vm5593 = vcmask 1045509
      %v5594 = vsel %vm5593, %v5334, %v5592
      %vm5595 = vcmask 1046534
      %v5596 = vsel %vm5595, %v5335, %v5594
      %vm5597 = vcmask 1047559
      %v5598 = vsel %vm5597, %v5336, %v5596
      %v5599 = vsel %vm5585, %v5338, %v5337
      %v5600 = vsel %vm5587, %v5339, %v5599
      %v5601 = vsel %vm5589, %v5340, %v5600
      %v5602 = vsel %vm5591, %v5341, %v5601
      %v5603 = vsel %vm5593, %v5342, %v5602
      %v5604 = vsel %vm5595, %v5343, %v5603
      %v5605 = vsel %vm5597, %v5344, %v5604
      %v5606 = vsel %vm5585, %v5346, %v5345
      %v5607 = vsel %vm5587, %v5347, %v5606
      %v5608 = vsel %vm5589, %v5348, %v5607
      %v5609 = vsel %vm5591, %v5349, %v5608
      %v5610 = vsel %vm5593, %v5350, %v5609
      %v5611 = vsel %vm5595, %v5351, %v5610
      %v5612 = vsel %vm5597, %v5352, %v5611
      %v5613 = vsel %vm5585, %v5354, %v5353
      %v5614 = vsel %vm5587, %v5355, %v5613
      %v5615 = vsel %vm5589, %v5356, %v5614
      %v5616 = vsel %vm5591, %v5357, %v5615
      %v5617 = vsel %vm5593, %v5358, %v5616
      %v5618 = vsel %vm5595, %v5359, %v5617
      %v5619 = vsel %vm5597, %v5360, %v5618
      %v5620 = vsel %vm5585, %v5362, %v5361
      %v5621 = vsel %vm5587, %v5363, %v5620
      %v5622 = vsel %vm5589, %v5364, %v5621
      %v5623 = vsel %vm5591, %v5365, %v5622
      %v5624 = vsel %vm5593, %v5366, %v5623
      %v5625 = vsel %vm5595, %v5367, %v5624
      %v5626 = vsel %vm5597, %v5368, %v5625
      %v5627 = vsel %vm5585, %v5370, %v5369
      %v5628 = vsel %vm5587, %v5371, %v5627
      %v5629 = vsel %vm5589, %v5372, %v5628
      %v5630 = vsel %vm5591, %v5373, %v5629
      %v5631 = vsel %vm5593, %v5374, %v5630
      %v5632 = vsel %vm5595, %v5375, %v5631
      %v5633 = vsel %vm5597, %v5376, %v5632
      %v5634 = vsel %vm5585, %v5378, %v5377
      %v5635 = vsel %vm5587, %v5379, %v5634
      %v5636 = vsel %vm5589, %v5380, %v5635
      %v5637 = vsel %vm5591, %v5381, %v5636
      %v5638 = vsel %vm5593, %v5382, %v5637
      %v5639 = vsel %vm5595, %v5383, %v5638
      %v5640 = vsel %vm5597, %v5384, %v5639
      %v5641 = vsel %vm5585, %v5386, %v5385
      %v5642 = vsel %vm5587, %v5387, %v5641
      %v5643 = vsel %vm5589, %v5388, %v5642
      %v5644 = vsel %vm5591, %v5389, %v5643
      %v5645 = vsel %vm5593, %v5390, %v5644
      %v5646 = vsel %vm5595, %v5391, %v5645
      %v5647 = vsel %vm5597, %v5392, %v5646
      %v5648 = vsel %vm5585, %v5394, %v5393
      %v5649 = vsel %vm5587, %v5395, %v5648
      %v5650 = vsel %vm5589, %v5396, %v5649
      %v5651 = vsel %vm5591, %v5397, %v5650
      %v5652 = vsel %vm5593, %v5398, %v5651
      %v5653 = vsel %vm5595, %v5399, %v5652
      %v5654 = vsel %vm5597, %v5400, %v5653
      %v5655 = vsel %vm5585, %v5402, %v5401
      %v5656 = vsel %vm5587, %v5403, %v5655
      %v5657 = vsel %vm5589, %v5404, %v5656
      %v5658 = vsel %vm5591, %v5405, %v5657
      %v5659 = vsel %vm5593, %v5406, %v5658
      %v5660 = vsel %vm5595, %v5407, %v5659
      %v5661 = vsel %vm5597, %v5408, %v5660
      %v5662 = vsel %vm5585, %v5410, %v5409
      %v5663 = vsel %vm5587, %v5411, %v5662
      %v5664 = vsel %vm5589, %v5412, %v5663
      %v5665 = vsel %vm5591, %v5413, %v5664
      %v5666 = vsel %vm5593, %v5414, %v5665
      %v5667 = vsel %vm5595, %v5415, %v5666
      %v5668 = vsel %vm5597, %v5416, %v5667
      %v5669 = vsel %vm5585, %v5418, %v5417
      %v5670 = vsel %vm5587, %v5419, %v5669
      %v5671 = vsel %vm5589, %v5420, %v5670
      %v5672 = vsel %vm5591, %v5421, %v5671
      %v5673 = vsel %vm5593, %v5422, %v5672
      %v5674 = vsel %vm5595, %v5423, %v5673
      %v5675 = vsel %vm5597, %v5424, %v5674
      %v5676 = vsel %vm5585, %v5426, %v5425
      %v5677 = vsel %vm5587, %v5427, %v5676
      %v5678 = vsel %vm5589, %v5428, %v5677
      %v5679 = vsel %vm5591, %v5429, %v5678
      %v5680 = vsel %vm5593, %v5430, %v5679
      %v5681 = vsel %vm5595, %v5431, %v5680
      %v5682 = vsel %vm5597, %v5432, %v5681
      %v5683 = vsel %vm5585, %v5434, %v5433
      %v5684 = vsel %vm5587, %v5435, %v5683
      %v5685 = vsel %vm5589, %v5436, %v5684
      %v5686 = vsel %vm5591, %v5437, %v5685
      %v5687 = vsel %vm5593, %v5438, %v5686
      %v5688 = vsel %vm5595, %v5439, %v5687
      %v5689 = vsel %vm5597, %v5440, %v5688
      %v5690 = vsel %vm5585, %v5442, %v5441
      %v5691 = vsel %vm5587, %v5443, %v5690
      %v5692 = vsel %vm5589, %v5444, %v5691
      %v5693 = vsel %vm5591, %v5445, %v5692
      %v5694 = vsel %vm5593, %v5446, %v5693
      %v5695 = vsel %vm5595, %v5447, %v5694
      %v5696 = vsel %vm5597, %v5448, %v5695
      %v5697 = vsel %vm5585, %v5450, %v5449
      %v5698 = vsel %vm5587, %v5451, %v5697
      %v5699 = vsel %vm5589, %v5452, %v5698
      %v5700 = vsel %vm5591, %v5453, %v5699
      %v5701 = vsel %vm5593, %v5454, %v5700
      %v5702 = vsel %vm5595, %v5455, %v5701
      %v5703 = vsel %vm5597, %v5456, %v5702
      %v5704 = vsel %vm5585, %v5458, %v5457
      %v5705 = vsel %vm5587, %v5459, %v5704
      %v5706 = vsel %vm5589, %v5460, %v5705
      %v5707 = vsel %vm5591, %v5461, %v5706
      %v5708 = vsel %vm5593, %v5462, %v5707
      %v5709 = vsel %vm5595, %v5463, %v5708
      %v5710 = vsel %vm5597, %v5464, %v5709
      %v5711 = vsel %vm5585, %v5466, %v5465
      %v5712 = vsel %vm5587, %v5467, %v5711
      %v5713 = vsel %vm5589, %v5468, %v5712
      %v5714 = vsel %vm5591, %v5469, %v5713
      %v5715 = vsel %vm5593, %v5470, %v5714
      %v5716 = vsel %vm5595, %v5471, %v5715
      %v5717 = vsel %vm5597, %v5472, %v5716
      %v5718 = vsel %vm5585, %v5474, %v5473
      %v5719 = vsel %vm5587, %v5475, %v5718
      %v5720 = vsel %vm5589, %v5476, %v5719
      %v5721 = vsel %vm5591, %v5477, %v5720
      %v5722 = vsel %vm5593, %v5478, %v5721
      %v5723 = vsel %vm5595, %v5479, %v5722
      %v5724 = vsel %vm5597, %v5480, %v5723
      %v5725 = vsel %vm5585, %v5482, %v5481
      %v5726 = vsel %vm5587, %v5483, %v5725
      %v5727 = vsel %vm5589, %v5484, %v5726
      %v5728 = vsel %vm5591, %v5485, %v5727
      %v5729 = vsel %vm5593, %v5486, %v5728
      %v5730 = vsel %vm5595, %v5487, %v5729
      %v5731 = vsel %vm5597, %v5488, %v5730
      %v5732 = vsel %vm5585, %v5490, %v5489
      %v5733 = vsel %vm5587, %v5491, %v5732
      %v5734 = vsel %vm5589, %v5492, %v5733
      %v5735 = vsel %vm5591, %v5493, %v5734
      %v5736 = vsel %vm5593, %v5494, %v5735
      %v5737 = vsel %vm5595, %v5495, %v5736
      %v5738 = vsel %vm5597, %v5496, %v5737
      %v5739 = vsel %vm5585, %v5498, %v5497
      %v5740 = vsel %vm5587, %v5499, %v5739
      %v5741 = vsel %vm5589, %v5500, %v5740
      %v5742 = vsel %vm5591, %v5501, %v5741
      %v5743 = vsel %vm5593, %v5502, %v5742
      %v5744 = vsel %vm5595, %v5503, %v5743
      %v5745 = vsel %vm5597, %v5504, %v5744
      %v5746 = vsel %vm5585, %v5506, %v5505
      %v5747 = vsel %vm5587, %v5507, %v5746
      %v5748 = vsel %vm5589, %v5508, %v5747
      %v5749 = vsel %vm5591, %v5509, %v5748
      %v5750 = vsel %vm5593, %v5510, %v5749
      %v5751 = vsel %vm5595, %v5511, %v5750
      %v5752 = vsel %vm5597, %v5512, %v5751
      %v5753 = vsel %vm5585, %v5514, %v5513
      %v5754 = vsel %vm5587, %v5515, %v5753
      %v5755 = vsel %vm5589, %v5516, %v5754
      %v5756 = vsel %vm5591, %v5517, %v5755
      %v5757 = vsel %vm5593, %v5518, %v5756
      %v5758 = vsel %vm5595, %v5519, %v5757
      %v5759 = vsel %vm5597, %v5520, %v5758
      %v5760 = vsel %vm5585, %v5522, %v5521
      %v5761 = vsel %vm5587, %v5523, %v5760
      %v5762 = vsel %vm5589, %v5524, %v5761
      %v5763 = vsel %vm5591, %v5525, %v5762
      %v5764 = vsel %vm5593, %v5526, %v5763
      %v5765 = vsel %vm5595, %v5527, %v5764
      %v5766 = vsel %vm5597, %v5528, %v5765
      %v5767 = vsel %vm5585, %v5530, %v5529
      %v5768 = vsel %vm5587, %v5531, %v5767
      %v5769 = vsel %vm5589, %v5532, %v5768
      %v5770 = vsel %vm5591, %v5533, %v5769
      %v5771 = vsel %vm5593, %v5534, %v5770
      %v5772 = vsel %vm5595, %v5535, %v5771
      %v5773 = vsel %vm5597, %v5536, %v5772
      %v5774 = vsel %vm5585, %v5538, %v5537
      %v5775 = vsel %vm5587, %v5539, %v5774
      %v5776 = vsel %vm5589, %v5540, %v5775
      %v5777 = vsel %vm5591, %v5541, %v5776
      %v5778 = vsel %vm5593, %v5542, %v5777
      %v5779 = vsel %vm5595, %v5543, %v5778
      %v5780 = vsel %vm5597, %v5544, %v5779
      %v5781 = vsel %vm5585, %v5546, %v5545
      %v5782 = vsel %vm5587, %v5547, %v5781
      %v5783 = vsel %vm5589, %v5548, %v5782
      %v5784 = vsel %vm5591, %v5549, %v5783
      %v5785 = vsel %vm5593, %v5550, %v5784
      %v5786 = vsel %vm5595, %v5551, %v5785
      %v5787 = vsel %vm5597, %v5552, %v5786
      %v5788 = vsel %vm5585, %v5554, %v5553
      %v5789 = vsel %vm5587, %v5555, %v5788
      %v5790 = vsel %vm5589, %v5556, %v5789
      %v5791 = vsel %vm5591, %v5557, %v5790
      %v5792 = vsel %vm5593, %v5558, %v5791
      %v5793 = vsel %vm5595, %v5559, %v5792
      %v5794 = vsel %vm5597, %v5560, %v5793
      %v5795 = vsel %vm5585, %v5562, %v5561
      %v5796 = vsel %vm5587, %v5563, %v5795
      %v5797 = vsel %vm5589, %v5564, %v5796
      %v5798 = vsel %vm5591, %v5565, %v5797
      %v5799 = vsel %vm5593, %v5566, %v5798
      %v5800 = vsel %vm5595, %v5567, %v5799
      %v5801 = vsel %vm5597, %v5568, %v5800
      %v5802 = vsel %vm5585, %v5570, %v5569
      %v5803 = vsel %vm5587, %v5571, %v5802
      %v5804 = vsel %vm5589, %v5572, %v5803
      %v5805 = vsel %vm5591, %v5573, %v5804
      %v5806 = vsel %vm5593, %v5574, %v5805
      %v5807 = vsel %vm5595, %v5575, %v5806
      %v5808 = vsel %vm5597, %v5576, %v5807
      %v5809 = vsel %vm5585, %v5578, %v5577
      %v5810 = vsel %vm5587, %v5579, %v5809
      %v5811 = vsel %vm5589, %v5580, %v5810
      %v5812 = vsel %vm5591, %v5581, %v5811
      %v5813 = vsel %vm5593, %v5582, %v5812
      %v5814 = vsel %vm5595, %v5583, %v5813
      %v5815 = vsel %vm5597, %v5584, %v5814
      %v5816 = vpack.c.b16 %v5605, %v5598
      %v5817 = vpack.c.b16 %v5619, %v5612
      %v5818 = vpack.c.b16 %v5633, %v5626
      %v5819 = vpack.c.b16 %v5647, %v5640
      %v5820 = vpack.c.b16 %v5661, %v5654
      %v5821 = vpack.c.b16 %v5675, %v5668
      %v5822 = vpack.c.b16 %v5689, %v5682
      %v5823 = vpack.c.b16 %v5703, %v5696
      %v5824 = vpack.c.b16 %v5717, %v5710
      %v5825 = vpack.c.b16 %v5731, %v5724
      %v5826 = vpack.c.b16 %v5745, %v5738
      %v5827 = vpack.c.b16 %v5759, %v5752
      %v5828 = vpack.c.b16 %v5773, %v5766
      %v5829 = vpack.c.b16 %v5787, %v5780
      %v5830 = vpack.c.b16 %v5801, %v5794
      %v5831 = vpack.c.b16 %v5815, %v5808
      %5848 = vst [vmem:[#allocation2 + $0x8] sm:$0xff] %v5816
      %5849 = vst [vmem:[#allocation2 + $0x18] sm:$0xff] %v5817
      %5850 = vst [vmem:[#allocation2 + $0x28] sm:$0xff] %v5818
      %5851 = vst [vmem:[#allocation2 + $0x38] sm:$0xff] %v5819
      %5852 = vst [vmem:[#allocation2 + $0x48] sm:$0xff] %v5820
      %5853 = vst [vmem:[#allocation2 + $0x58] sm:$0xff] %v5821
      %5854 = vst [vmem:[#allocation2 + $0x68] sm:$0xff] %v5822
      %5855 = vst [vmem:[#allocation2 + $0x78] sm:$0xff] %v5823
      %5856 = vst [vmem:[#allocation2 + $0x88] sm:$0xff] %v5824
      %5857 = vst [vmem:[#allocation2 + $0x98] sm:$0xff] %v5825
      %5858 = vst [vmem:[#allocation2 + $0xa8] sm:$0xff] %v5826
      %5859 = vst [vmem:[#allocation2 + $0xb8] sm:$0xff] %v5827
      %5860 = vst [vmem:[#allocation2 + $0xc8] sm:$0xff] %v5828
      %5861 = vst [vmem:[#allocation2 + $0xd8] sm:$0xff] %v5829
      %5862 = vst [vmem:[#allocation2 + $0xe8] sm:$0xff] %v5830
      %5863 = vst [vmem:[#allocation2 + $0xf8] sm:$0xff] %v5831
      %v5864 = vld [vmem:[#allocation2] sm:$0xff]
      %v5865 = vld [vmem:[#allocation2 + $0x8] sm:$0xff]
      %v5866 = vld [vmem:[#allocation2 + $0x10] sm:$0xff]
      %v5867 = vld [vmem:[#allocation2 + $0x18] sm:$0xff]
      %v5868 = vld [vmem:[#allocation2 + $0x20] sm:$0xff]
      %v5869 = vld [vmem:[#allocation2 + $0x28] sm:$0xff]
      %v5870 = vld [vmem:[#allocation2 + $0x30] sm:$0xff]
      %v5871 = vld [vmem:[#allocation2 + $0x38] sm:$0xff]
      %v5872 = vld [vmem:[#allocation2 + $0x40] sm:$0xff]
      %v5873 = vld [vmem:[#allocation2 + $0x48] sm:$0xff]
      %v5874 = vld [vmem:[#allocation2 + $0x50] sm:$0xff]
      %v5875 = vld [vmem:[#allocation2 + $0x58] sm:$0xff]
      %v5876 = vld [vmem:[#allocation2 + $0x60] sm:$0xff]
      %v5877 = vld [vmem:[#allocation2 + $0x68] sm:$0xff]
      %v5878 = vld [vmem:[#allocation2 + $0x70] sm:$0xff]
      %v5879 = vld [vmem:[#allocation2 + $0x78] sm:$0xff]
      %v5880 = vld [vmem:[#allocation2 + $0x80] sm:$0xff]
      %v5881 = vld [vmem:[#allocation2 + $0x88] sm:$0xff]
      %v5882 = vld [vmem:[#allocation2 + $0x90] sm:$0xff]
      %v5883 = vld [vmem:[#allocation2 + $0x98] sm:$0xff]
      %v5884 = vld [vmem:[#allocation2 + $0xa0] sm:$0xff]
      %v5885 = vld [vmem:[#allocation2 + $0xa8] sm:$0xff]
      %v5886 = vld [vmem:[#allocation2 + $0xb0] sm:$0xff]
      %v5887 = vld [vmem:[#allocation2 + $0xb8] sm:$0xff]
      %v5888 = vld [vmem:[#allocation2 + $0xc0] sm:$0xff]
      %v5889 = vld [vmem:[#allocation2 + $0xc8] sm:$0xff]
      %v5890 = vld [vmem:[#allocation2 + $0xd0] sm:$0xff]
      %v5891 = vld [vmem:[#allocation2 + $0xd8] sm:$0xff]
      %v5892 = vld [vmem:[#allocation2 + $0xe0] sm:$0xff]
      %v5893 = vld [vmem:[#allocation2 + $0xe8] sm:$0xff]
      %v5894 = vld [vmem:[#allocation2 + $0xf0] sm:$0xff]
      %v5895 = vld [vmem:[#allocation2 + $0xf8] sm:$0xff]
      %v5896 = vld [vmem:[%s3] sm:$0xf]
      %v5897 = vld [vmem:[%s3 + $0x4] sm:$0xf]
      %v5898 = vld [vmem:[%s3 + $0x8] sm:$0xf]
      %v5899 = vld [vmem:[%s3 + $0xc] sm:$0xf]
      %v5900 = vld [vmem:[%s3 + $0x10] sm:$0xf]
      %v5901 = vld [vmem:[%s3 + $0x14] sm:$0xf]
      %v5902 = vld [vmem:[%s3 + $0x18] sm:$0xf]
      %v5903 = vld [vmem:[%s3 + $0x1c] sm:$0xf]
      %v5904 = vld [vmem:[%s3 + $0x20] sm:$0xf]
      %v5905 = vld [vmem:[%s3 + $0x24] sm:$0xf]
      %v5906 = vld [vmem:[%s3 + $0x28] sm:$0xf]
      %v5907 = vld [vmem:[%s3 + $0x2c] sm:$0xf]
      %v5908 = vld [vmem:[%s3 + $0x30] sm:$0xf]
      %v5909 = vld [vmem:[%s3 + $0x34] sm:$0xf]
      %v5910 = vld [vmem:[%s3 + $0x38] sm:$0xf]
      %v5911 = vld [vmem:[%s3 + $0x3c] sm:$0xf]
      %v5912 = vld [vmem:[%s3 + $0x40] sm:$0xf]
      %v5913 = vld [vmem:[%s3 + $0x44] sm:$0xf]
      %v5914 = vld [vmem:[%s3 + $0x48] sm:$0xf]
      %v5915 = vld [vmem:[%s3 + $0x4c] sm:$0xf]
      %v5916 = vld [vmem:[%s3 + $0x50] sm:$0xf]
      %v5917 = vld [vmem:[%s3 + $0x54] sm:$0xf]
      %v5918 = vld [vmem:[%s3 + $0x58] sm:$0xf]
      %v5919 = vld [vmem:[%s3 + $0x5c] sm:$0xf]
      %v5920 = vld [vmem:[%s3 + $0x60] sm:$0xf]
      %v5921 = vld [vmem:[%s3 + $0x64] sm:$0xf]
      %v5922 = vld [vmem:[%s3 + $0x68] sm:$0xf]
      %v5923 = vld [vmem:[%s3 + $0x6c] sm:$0xf]
      %v5924 = vld [vmem:[%s3 + $0x70] sm:$0xf]
      %v5925 = vld [vmem:[%s3 + $0x74] sm:$0xf]
      %v5926 = vld [vmem:[%s3 + $0x78] sm:$0xf]
      %v5927 = vld [vmem:[%s3 + $0x7c] sm:$0xf]
      %v5960 = vunpack.c.l.b16 %v5896
      %v5961 = vunpack.c.l.b16 %v5897
      %v5962 = vunpack.c.l.b16 %v5898
      %v5963 = vunpack.c.l.b16 %v5899
      %v5964 = vunpack.c.l.b16 %v5900
      %v5965 = vunpack.c.l.b16 %v5901
      %v5966 = vunpack.c.l.b16 %v5902
      %v5967 = vunpack.c.l.b16 %v5903
      %v5968 = vunpack.c.l.b16 %v5904
      %v5969 = vunpack.c.l.b16 %v5905
      %v5970 = vunpack.c.l.b16 %v5906
      %v5971 = vunpack.c.l.b16 %v5907
      %v5972 = vunpack.c.l.b16 %v5908
      %v5973 = vunpack.c.l.b16 %v5909
      %v5974 = vunpack.c.l.b16 %v5910
      %v5975 = vunpack.c.l.b16 %v5911
      %v5976 = vunpack.c.l.b16 %v5912
      %v5977 = vunpack.c.l.b16 %v5913
      %v5978 = vunpack.c.l.b16 %v5914
      %v5979 = vunpack.c.l.b16 %v5915
      %v5980 = vunpack.c.l.b16 %v5916
      %v5981 = vunpack.c.l.b16 %v5917
      %v5982 = vunpack.c.l.b16 %v5918
      %v5983 = vunpack.c.l.b16 %v5919
      %v5984 = vunpack.c.l.b16 %v5920
      %v5985 = vunpack.c.l.b16 %v5921
      %v5986 = vunpack.c.l.b16 %v5922
      %v5987 = vunpack.c.l.b16 %v5923
      %v5988 = vunpack.c.l.b16 %v5924
      %v5989 = vunpack.c.l.b16 %v5925
      %v5990 = vunpack.c.l.b16 %v5926
      %v5991 = vunpack.c.l.b16 %v5927
      %v5992 = vpack.c.b16 %v5961, %v5960
      %v5993 = vpack.c.b16 %v5963, %v5962
      %v5994 = vpack.c.b16 %v5965, %v5964
      %v5995 = vpack.c.b16 %v5967, %v5966
      %v5996 = vpack.c.b16 %v5969, %v5968
      %v5997 = vpack.c.b16 %v5971, %v5970
      %v5998 = vpack.c.b16 %v5973, %v5972
      %v5999 = vpack.c.b16 %v5975, %v5974
      %v6000 = vpack.c.b16 %v5977, %v5976
      %v6001 = vpack.c.b16 %v5979, %v5978
      %v6002 = vpack.c.b16 %v5981, %v5980
      %v6003 = vpack.c.b16 %v5983, %v5982
      %v6004 = vpack.c.b16 %v5985, %v5984
      %v6005 = vpack.c.b16 %v5987, %v5986
      %v6006 = vpack.c.b16 %v5989, %v5988
      %v6007 = vpack.c.b16 %v5991, %v5990
      %6024 = vmatprep.subr.bf16.mxu0 0
      %6025 = vmatpush1.bf16.msra.mxu0 %v5992
      %6026 = vmatprep.subr.bf16.mxu0 0
      %6027 = vmatpush1.bf16.msra.mxu0 %v5993
      %6028 = vmatprep.subr.bf16.mxu0 0
      %6029 = vmatpush1.bf16.msra.mxu0 %v5994
      %6030 = vmatprep.subr.bf16.mxu0 0
      %6031 = vmatpush1.bf16.msra.mxu0 %v5995
      %6032 = vmatprep.subr.bf16.mxu0 0
      %6033 = vmatpush1.bf16.msra.mxu0 %v5996
      %6034 = vmatprep.subr.bf16.mxu0 0
      %6035 = vmatpush1.bf16.msra.mxu0 %v5997
      %6036 = vmatprep.subr.bf16.mxu0 0
      %6037 = vmatpush1.bf16.msra.mxu0 %v5998
      %6038 = vmatprep.subr.bf16.mxu0 0
      %6039 = vmatpush1.bf16.msra.mxu0 %v5999
      %6040 = vmatprep.subr.bf16.mxu0 0
      %6041 = vmatpush1.bf16.msra.mxu0 %v6000
      %6042 = vmatprep.subr.bf16.mxu0 0
      %6043 = vmatpush1.bf16.msra.mxu0 %v6001
      %6044 = vmatprep.subr.bf16.mxu0 0
      %6045 = vmatpush1.bf16.msra.mxu0 %v6002
      %6046 = vmatprep.subr.bf16.mxu0 0
      %6047 = vmatpush1.bf16.msra.mxu0 %v6003
      %6048 = vmatprep.subr.bf16.mxu0 0
      %6049 = vmatpush1.bf16.msra.mxu0 %v6004
      %6050 = vmatprep.subr.bf16.mxu0 0
      %6051 = vmatpush1.bf16.msra.mxu0 %v6005
      %6052 = vmatprep.subr.bf16.mxu0 0
      %6053 = vmatpush1.bf16.msra.mxu0 %v6006
      %6054 = vmatprep.subr.bf16.mxu0 0
      %6055 = vmatpush1.bf16.msra.mxu0 %v6007
      %6056 = vmatprep.mubr.bf16.mxu0 %v5865
      %6057 = vmatmul.mubr.bf16.gmra.mrb[0].mxu0 %v5864
      %v6058 = vpop.f32.mrb[0].mxu0
      %v6059 = vadd.f32 0.0, %v6058
      %v6060 = vpop.f32.mrb[0].mxu0
      %v6061 = vpop.f32.mrb[0].mxu0
      %v6062 = vadd.f32 0.0, %v6061
      %v6063 = vpop.f32.mrb[0].mxu0
      %6064 = vmatprep.mubr.bf16.mxu0 %v5867
      %6065 = vmatmul.mubr.bf16.gmra.mrb[0].mxu0 %v5866
      %v6066 = vpop.f32.mrb[0].mxu0
      %v6067 = vadd.f32 0.0, %v6066
      %v6068 = vpop.f32.mrb[0].mxu0
      %v6069 = vpop.f32.mrb[0].mxu0
      %v6070 = vadd.f32 0.0, %v6069
      %v6071 = vpop.f32.mrb[0].mxu0
      %6072 = vmatprep.mubr.bf16.mxu0 %v5869
      %6073 = vmatmul.mubr.bf16.gmra.mrb[0].mxu0 %v5868
      %v6074 = vpop.f32.mrb[0].mxu0
      %v6075 = vadd.f32 0.0, %v6074
      %v6076 = vpop.f32.mrb[0].mxu0
      %v6077 = vpop.f32.mrb[0].mxu0
      %v6078 = vadd.f32 0.0, %v6077
      %v6079 = vpop.f32.mrb[0].mxu0
      %6080 = vmatprep.mubr.bf16.mxu0 %v5871
      %6081 = vmatmul.mubr.bf16.gmra.mrb[0].mxu0 %v5870
      %v6082 = vpop.f32.mrb[0].mxu0
      %v6083 = vadd.f32 0.0, %v6082
      %v6084 = vpop.f32.mrb[0].mxu0
      %v6085 = vpop.f32.mrb[0].mxu0
      %v6086 = vadd.f32 0.0, %v6085
      %v6087 = vpop.f32.mrb[0].mxu0
      %6088 = vmatprep.mubr.bf16.mxu0 %v5873
      %6089 = vmatmul.mubr.bf16.gmra.mrb[0].mxu0 %v5872
      %v6090 = vpop.f32.mrb[0].mxu0
      %v6091 = vadd.f32 0.0, %v6090
      %v6092 = vpop.f32.mrb[0].mxu0
      %v6093 = vpop.f32.mrb[0].mxu0
      %v6094 = vadd.f32 0.0, %v6093
      %v6095 = vpop.f32.mrb[0].mxu0
      %6096 = vmatprep.mubr.bf16.mxu0 %v5875
      %6097 = vmatmul.mubr.bf16.gmra.mrb[0].mxu0 %v5874
      %v6098 = vpop.f32.mrb[0].mxu0
      %v6099 = vadd.f32 0.0, %v6098
      %v6100 = vpop.f32.mrb[0].mxu0
      %v6101 = vpop.f32.mrb[0].mxu0
      %v6102 = vadd.f32 0.0, %v6101
      %v6103 = vpop.f32.mrb[0].mxu0
      %6104 = vmatprep.mubr.bf16.mxu0 %v5877
      %6105 = vmatmul.mubr.bf16.gmra.mrb[0].mxu0 %v5876
      %v6106 = vpop.f32.mrb[0].mxu0
      %v6107 = vadd.f32 0.0, %v6106
      %v6108 = vpop.f32.mrb[0].mxu0
      %v6109 = vpop.f32.mrb[0].mxu0
      %v6110 = vadd.f32 0.0, %v6109
      %v6111 = vpop.f32.mrb[0].mxu0
      %6112 = vmatprep.mubr.bf16.mxu0 %v5879
      %6113 = vmatmul.mubr.bf16.gmra.mrb[0].mxu0 %v5878
      %v6114 = vpop.f32.mrb[0].mxu0
      %v6115 = vadd.f32 0.0, %v6114
      %v6116 = vpop.f32.mrb[0].mxu0
      %v6117 = vpop.f32.mrb[0].mxu0
      %v6118 = vadd.f32 0.0, %v6117
      %v6119 = vpop.f32.mrb[0].mxu0
      %6120 = vmatprep.mubr.bf16.mxu0 %v5881
      %6121 = vmatmul.mubr.bf16.gmra.mrb[0].mxu0 %v5880
      %v6122 = vpop.f32.mrb[0].mxu0
      %v6123 = vadd.f32 0.0, %v6122
      %v6124 = vpop.f32.mrb[0].mxu0
      %v6125 = vpop.f32.mrb[0].mxu0
      %v6126 = vadd.f32 0.0, %v6125
      %v6127 = vpop.f32.mrb[0].mxu0
      %6128 = vmatprep.mubr.bf16.mxu0 %v5883
      %6129 = vmatmul.mubr.bf16.gmra.mrb[0].mxu0 %v5882
      %v6130 = vpop.f32.mrb[0].mxu0
      %v6131 = vadd.f32 0.0, %v6130
      %v6132 = vpop.f32.mrb[0].mxu0
      %v6133 = vpop.f32.mrb[0].mxu0
      %v6134 = vadd.f32 0.0, %v6133
      %v6135 = vpop.f32.mrb[0].mxu0
      %6136 = vmatprep.mubr.bf16.mxu0 %v5885
      %6137 = vmatmul.mubr.bf16.gmra.mrb[0].mxu0 %v5884
      %v6138 = vpop.f32.mrb[0].mxu0
      %v6139 = vadd.f32 0.0, %v6138
      %v6140 = vpop.f32.mrb[0].mxu0
      %v6141 = vpop.f32.mrb[0].mxu0
      %v6142 = vadd.f32 0.0, %v6141
      %v6143 = vpop.f32.mrb[0].mxu0
      %6144 = vmatprep.mubr.bf16.mxu0 %v5887
      %6145 = vmatmul.mubr.bf16.gmra.mrb[0].mxu0 %v5886
      %v6146 = vpop.f32.mrb[0].mxu0
      %v6147 = vadd.f32 0.0, %v6146
      %v6148 = vpop.f32.mrb[0].mxu0
      %v6149 = vpop.f32.mrb[0].mxu0
      %v6150 = vadd.f32 0.0, %v6149
      %v6151 = vpop.f32.mrb[0].mxu0
      %6152 = vmatprep.mubr.bf16.mxu0 %v5889
      %6153 = vmatmul.mubr.bf16.gmra.mrb[0].mxu0 %v5888
      %v6154 = vpop.f32.mrb[0].mxu0
      %v6155 = vadd.f32 0.0, %v6154
      %v6156 = vpop.f32.mrb[0].mxu0
      %v6157 = vpop.f32.mrb[0].mxu0
      %v6158 = vadd.f32 0.0, %v6157
      %v6159 = vpop.f32.mrb[0].mxu0
      %6160 = vmatprep.mubr.bf16.mxu0 %v5891
      %6161 = vmatmul.mubr.bf16.gmra.mrb[0].mxu0 %v5890
      %v6162 = vpop.f32.mrb[0].mxu0
      %v6163 = vadd.f32 0.0, %v6162
      %v6164 = vpop.f32.mrb[0].mxu0
      %v6165 = vpop.f32.mrb[0].mxu0
      %v6166 = vadd.f32 0.0, %v6165
      %v6167 = vpop.f32.mrb[0].mxu0
      %6168 = vmatprep.mubr.bf16.mxu0 %v5893
      %6169 = vmatmul.mubr.bf16.gmra.mrb[0].mxu0 %v5892
      %v6170 = vpop.f32.mrb[0].mxu0
      %v6171 = vadd.f32 0.0, %v6170
      %v6172 = vpop.f32.mrb[0].mxu0
      %v6173 = vpop.f32.mrb[0].mxu0
      %v6174 = vadd.f32 0.0, %v6173
      %v6175 = vpop.f32.mrb[0].mxu0
      %6176 = vmatprep.mubr.bf16.mxu0 %v5895
      %6177 = vmatmul.mubr.bf16.gmra.mrb[0].mxu0 %v5894
      %v6178 = vpop.f32.mrb[0].mxu0
      %v6179 = vadd.f32 0.0, %v6178
      %v6180 = vpop.f32.mrb[0].mxu0
      %v6181 = vpop.f32.mrb[0].mxu0
      %v6182 = vadd.f32 0.0, %v6181
      %v6183 = vpop.f32.mrb[0].mxu0
      %6184 = vdwg.mxu0
      %vm6185 = vcmp.ge.f32.partialorder %v6059, 0.0
      %vm6186 = vcmp.ge.f32.partialorder %v6062, 0.0
      %vm6187 = vcmp.ge.f32.partialorder %v6067, 0.0
      %vm6188 = vcmp.ge.f32.partialorder %v6070, 0.0
      %vm6189 = vcmp.ge.f32.partialorder %v6075, 0.0
      %vm6190 = vcmp.ge.f32.partialorder %v6078, 0.0
      %vm6191 = vcmp.ge.f32.partialorder %v6083, 0.0
      %vm6192 = vcmp.ge.f32.partialorder %v6086, 0.0
      %vm6193 = vcmp.ge.f32.partialorder %v6091, 0.0
      %vm6194 = vcmp.ge.f32.partialorder %v6094, 0.0
      %vm6195 = vcmp.ge.f32.partialorder %v6099, 0.0
      %vm6196 = vcmp.ge.f32.partialorder %v6102, 0.0
      %vm6197 = vcmp.ge.f32.partialorder %v6107, 0.0
      %vm6198 = vcmp.ge.f32.partialorder %v6110, 0.0
      %vm6199 = vcmp.ge.f32.partialorder %v6115, 0.0
      %vm6200 = vcmp.ge.f32.partialorder %v6118, 0.0
      %vm6201 = vcmp.ge.f32.partialorder %v6123, 0.0
      %vm6202 = vcmp.ge.f32.partialorder %v6126, 0.0
      %vm6203 = vcmp.ge.f32.partialorder %v6131, 0.0
      %vm6204 = vcmp.ge.f32.partialorder %v6134, 0.0
      %vm6205 = vcmp.ge.f32.partialorder %v6139, 0.0
      %vm6206 = vcmp.ge.f32.partialorder %v6142, 0.0
      %vm6207 = vcmp.ge.f32.partialorder %v6147, 0.0
      %vm6208 = vcmp.ge.f32.partialorder %v6150, 0.0
      %vm6209 = vcmp.ge.f32.partialorder %v6155, 0.0
      %vm6210 = vcmp.ge.f32.partialorder %v6158, 0.0
      %vm6211 = vcmp.ge.f32.partialorder %v6163, 0.0
      %vm6212 = vcmp.ge.f32.partialorder %v6166, 0.0
      %vm6213 = vcmp.ge.f32.partialorder %v6171, 0.0
      %vm6214 = vcmp.ge.f32.partialorder %v6174, 0.0
      %vm6215 = vcmp.ge.f32.partialorder %v6179, 0.0
      %vm6216 = vcmp.ge.f32.partialorder %v6182, 0.0
      %v6217 = vmul.f32 %v6059, 0.2
      %v6218 = vmul.f32 %v6062, 0.2
      %v6219 = vmul.f32 %v6067, 0.2
      %v6220 = vmul.f32 %v6070, 0.2
      %v6221 = vmul.f32 %v6075, 0.2
      %v6222 = vmul.f32 %v6078, 0.2
      %v6223 = vmul.f32 %v6083, 0.2
      %v6224 = vmul.f32 %v6086, 0.2
      %v6225 = vmul.f32 %v6091, 0.2
      %v6226 = vmul.f32 %v6094, 0.2
      %v6227 = vmul.f32 %v6099, 0.2
      %v6228 = vmul.f32 %v6102, 0.2
      %v6229 = vmul.f32 %v6107, 0.2
      %v6230 = vmul.f32 %v6110, 0.2
      %v6231 = vmul.f32 %v6115, 0.2
      %v6232 = vmul.f32 %v6118, 0.2
      %v6233 = vmul.f32 %v6123, 0.2
      %v6234 = vmul.f32 %v6126, 0.2
      %v6235 = vmul.f32 %v6131, 0.2
      %v6236 = vmul.f32 %v6134, 0.2
      %v6237 = vmul.f32 %v6139, 0.2
      %v6238 = vmul.f32 %v6142, 0.2
      %v6239 = vmul.f32 %v6147, 0.2
      %v6240 = vmul.f32 %v6150, 0.2
      %v6241 = vmul.f32 %v6155, 0.2
      %v6242 = vmul.f32 %v6158, 0.2
      %v6243 = vmul.f32 %v6163, 0.2
      %v6244 = vmul.f32 %v6166, 0.2
      %v6245 = vmul.f32 %v6171, 0.2
      %v6246 = vmul.f32 %v6174, 0.2
      %v6247 = vmul.f32 %v6179, 0.2
      %v6248 = vmul.f32 %v6182, 0.2
      %v6249 = vsel %vm6185, %v6059, %v6217
      %v6250 = vsel %vm6186, %v6062, %v6218
      %v6251 = vsel %vm6187, %v6067, %v6219
      %v6252 = vsel %vm6188, %v6070, %v6220
      %v6253 = vsel %vm6189, %v6075, %v6221
      %v6254 = vsel %vm6190, %v6078, %v6222
      %v6255 = vsel %vm6191, %v6083, %v6223
      %v6256 = vsel %vm6192, %v6086, %v6224
      %v6257 = vsel %vm6193, %v6091, %v6225
      %v6258 = vsel %vm6194, %v6094, %v6226
      %v6259 = vsel %vm6195, %v6099, %v6227
      %v6260 = vsel %vm6196, %v6102, %v6228
      %v6261 = vsel %vm6197, %v6107, %v6229
      %v6262 = vsel %vm6198, %v6110, %v6230
      %v6263 = vsel %vm6199, %v6115, %v6231
      %v6264 = vsel %vm6200, %v6118, %v6232
      %v6265 = vsel %vm6201, %v6123, %v6233
      %v6266 = vsel %vm6202, %v6126, %v6234
      %v6267 = vsel %vm6203, %v6131, %v6235
      %v6268 = vsel %vm6204, %v6134, %v6236
      %v6269 = vsel %vm6205, %v6139, %v6237
      %v6270 = vsel %vm6206, %v6142, %v6238
      %v6271 = vsel %vm6207, %v6147, %v6239
      %v6272 = vsel %vm6208, %v6150, %v6240
      %v6273 = vsel %vm6209, %v6155, %v6241
      %v6274 = vsel %vm6210, %v6158, %v6242
      %v6275 = vsel %vm6211, %v6163, %v6243
      %v6276 = vsel %vm6212, %v6166, %v6244
      %v6277 = vsel %vm6213, %v6171, %v6245
      %v6278 = vsel %vm6214, %v6174, %v6246
      %v6279 = vsel %vm6215, %v6179, %v6247
      %v6280 = vsel %vm6216, %v6182, %v6248
      %6281 = vst [vmem:[%s221] sm:$0xff] %v6249
      %6282 = vst [vmem:[%s221 + $0x8] sm:$0xff] %v6250
      %6283 = vst [vmem:[%s221 + $0x10] sm:$0xff] %v6251
      %6284 = vst [vmem:[%s221 + $0x18] sm:$0xff] %v6252
      %6285 = vst [vmem:[%s221 + $0x20] sm:$0xff] %v6253
      %6286 = vst [vmem:[%s221 + $0x28] sm:$0xff] %v6254
      %6287 = vst [vmem:[%s221 + $0x30] sm:$0xff] %v6255
      %6288 = vst [vmem:[%s221 + $0x38] sm:$0xff] %v6256
      %6289 = vst [vmem:[%s221 + $0x40] sm:$0xff] %v6257
      %6290 = vst [vmem:[%s221 + $0x48] sm:$0xff] %v6258
      %6291 = vst [vmem:[%s221 + $0x50] sm:$0xff] %v6259
      %6292 = vst [vmem:[%s221 + $0x58] sm:$0xff] %v6260
      %6293 = vst [vmem:[%s221 + $0x60] sm:$0xff] %v6261
      %6294 = vst [vmem:[%s221 + $0x68] sm:$0xff] %v6262
      %6295 = vst [vmem:[%s221 + $0x70] sm:$0xff] %v6263
      %6296 = vst [vmem:[%s221 + $0x78] sm:$0xff] %v6264
      %6297 = vst [vmem:[%s221 + $0x80] sm:$0xff] %v6265
      %6298 = vst [vmem:[%s221 + $0x88] sm:$0xff] %v6266
      %6299 = vst [vmem:[%s221 + $0x90] sm:$0xff] %v6267
      %6300 = vst [vmem:[%s221 + $0x98] sm:$0xff] %v6268
      %6301 = vst [vmem:[%s221 + $0xa0] sm:$0xff] %v6269
      %6302 = vst [vmem:[%s221 + $0xa8] sm:$0xff] %v6270
      %6303 = vst [vmem:[%s221 + $0xb0] sm:$0xff] %v6271
      %6304 = vst [vmem:[%s221 + $0xb8] sm:$0xff] %v6272
      %6305 = vst [vmem:[%s221 + $0xc0] sm:$0xff] %v6273
      %6306 = vst [vmem:[%s221 + $0xc8] sm:$0xff] %v6274
      %6307 = vst [vmem:[%s221 + $0xd0] sm:$0xff] %v6275
      %6308 = vst [vmem:[%s221 + $0xd8] sm:$0xff] %v6276
      %6309 = vst [vmem:[%s221 + $0xe0] sm:$0xff] %v6277
      %6310 = vst [vmem:[%s221 + $0xe8] sm:$0xff] %v6278
      %6311 = vst [vmem:[%s221 + $0xf0] sm:$0xff] %v6279
      %6312 = vst [vmem:[%s221 + $0xf8] sm:$0xff] %v6280
      %s6313 = smul.u32 32, %s15
      %p6314 = scmp.lt.s32.totalorder %s6313, 63
      %s6315 = scalar_select %p6314, %s6313, 63
      %s6316 = smul.addr %s6315, 8
      %s6317 = scalar_lea.vmem %s4, %s6316
      // Predicated region
      $region37: #{gnn_forward_pallas.1} parent=35 // pred_check
        %p6318 = pneg %p127
      $region38: #{gnn_forward_pallas.1} parent=35 // pred_check_branch
        %6320 = sbr.rel (%p6318) target = $region40
      $region39: #{gnn_forward_pallas.1} parent=35 // pred_region
        %s6321 = smul.u32 32, %s15
      $region40: #{gnn_forward_pallas.1} parent=35 // pred_fallthru
        _
    $region36: #{gnn_forward_pallas.1} parent=5 // pred_fallthru
      _
    %p6322 = scmp.le.s32.totalorder 2, %s10
    // Predicated region
    $region41: #{gnn_forward_pallas.1} parent=5 // pred_check
      %p6323 = pneg %p6322
    $region42: #{gnn_forward_pallas.1} parent=5 // pred_check_branch
      %6325 = sbr.rel (%p6323) target = $region44
    $region43: #{gnn_forward_pallas.1} parent=5 // pred_region
      %s6326 = ssub.s32 %s10, 2
      // Predicated region
      $region45: #{gnn_forward_pallas.1} parent=43 // pred_check
        %p6327 = pneg %p133
      $region46: #{gnn_forward_pallas.1} parent=43 // pred_check_branch
        %6329 = sbr.rel (%p6327) target = $region48
      $region47: #{gnn_forward_pallas.1} parent=43 // pred_region
        %s6330 = smul.u32 32, %s16
        %p6331 = scmp.lt.s32.totalorder %s6330, 63
        %s6332 = scalar_select %p6331, %s6330, 63
        %s6333 = smul.addr %s6332, 8
        %s6334 = scalar_lea.vmem %s4, %s6333
      $region48: #{gnn_forward_pallas.1} parent=43 // pred_fallthru
        _
    $region44: #{gnn_forward_pallas.1} parent=5 // pred_fallthru
      _
  $region6: #{gnn_forward_pallas.1} parent=0 // loop_footer
    %s14 = sadd.s32 1, %s10
  $region7: #{gnn_forward_pallas.1} parent=0 // loop_footer_branch
    %9 = sbr.rel target = $region3
  $region8: #{gnn_forward_pallas.1} parent=0 // loop_exit
    _

</llo_original>
